<compile_context>
chip_gen: v5e
topology: v5e:2x2
jax: 0.10.0
libtpu: 0.0.40
codegen_flags: <defaults>
</compile_context>

<pallas_src>
import jax
import jax.numpy as jnp
from jax.experimental import pallas as pl
from jax.experimental.pallas import tpu as pltpu


def _relu(x):
    return jnp.maximum(x, 0.0)


def deeper_nn_kernel(
    text_ref, img1_ref, img2_ref,
    w_t1_ref, b_t1_ref, w_t2_ref, b_t2_ref,
    w_i1_ref, b_i1_ref, w_i2_ref, b_i2_ref,
    w_f1t_ref, w_f1i_ref, b_f1_ref,
    w_f2_ref, b_f2_ref, w_f3_ref, b_f3_ref,
    out_ref,
):
    f32 = jnp.float32
    bf16 = jnp.bfloat16

    # ---- text branch: 3 -> 128 -> 64 (f32) ----
    t = _relu(jnp.dot(text_ref[...], w_t1_ref[...], preferred_element_type=f32)
              + b_t1_ref[...])
    t = _relu(jnp.dot(t, w_t2_ref[...], preferred_element_type=f32)
              + b_t2_ref[...])

    # ---- image branches (shared weights): 2048 -> 512 -> 64 ----
    # Cast to bf16 in VMEM (inputs arrive in their source dtype, no wrapper
    # pass) and stack the two images along the sublane axis so every
    # image-layer weight is pushed through the MXU once per batch tile.
    # TB is a multiple of 16, so the axis-0 concat is bf16 sublane-tile
    # aligned (cheap VMEM copy, no lane re-layout).
    tb = img1_ref.shape[0]
    imgs = jnp.concatenate(
        [img1_ref[...].astype(bf16), img2_ref[...].astype(bf16)], axis=0)  # (2*TB, 2048)
    h = _relu(jnp.dot(imgs, w_i1_ref[...], preferred_element_type=f32)
              + b_i1_ref[...])
    h = _relu(jnp.dot(h.astype(bf16), w_i2_ref[...], preferred_element_type=f32)
              + b_i2_ref[...])                                             # (2*TB, 64) f32

    # ---- fusion head ----
    # concat([t, i1, i2], dim=1) @ W_fc1 ==
    #     t @ W[0:64] + i1 @ W[64:128] + i2 @ W[128:192]
    # The two image partials are fused into ONE MXU pass against the
    # pre-concatenated (64, 256) slab w_f1i = [W[64:128] | W[128:192]],
    # then recombined with static 128-lane slices.
    txt_part = jnp.dot(t, w_f1t_ref[...], preferred_element_type=f32)      # (TB, 128)
    img_part = jnp.dot(h, w_f1i_ref[...], preferred_element_type=f32)      # (2*TB, 256)
    combined = _relu(txt_part
                     + img_part[:tb, 0:128]
                     + img_part[tb:, 128:256]
                     + b_f1_ref[...])

    # TODO(synk): nn.Dropout(0.2) — identity in eval/inference mode, which is
    # what a forward-pass kernel reproduces.

    combined = _relu(jnp.dot(combined, w_f2_ref[...], preferred_element_type=f32)
                     + b_f2_ref[...])

    out_ref[...] = (jnp.dot(combined, w_f3_ref[...], preferred_element_type=f32)
                    + b_f3_ref[...])


def init_params(key):
    """Deterministic init mimicking PyTorch nn.Linear default U(-1/sqrt(fan_in), +)."""
    dims = {
        "text_fc1": (3, 128),
        "text_fc2": (128, 64),
        "image_fc1": (2048, 512),
        "image_fc2": (512, 64),
        "fc1": (192, 128),
        "fc2": (128, 64),
        "fc3": (64, 2),
    }
    params = {}
    for name, (fan_in, fan_out) in dims.items():
        key, kw, kb = jax.random.split(key, 3)
        bound = 1.0 / jnp.sqrt(jnp.float32(fan_in))
        # stored as [in, out] (pre-transposed vs. PyTorch's [out, in])
        params[f"{name}_w"] = jax.random.uniform(
            kw, (fan_in, fan_out), jnp.float32, -bound, bound)
        params[f"{name}_b"] = jax.random.uniform(
            kb, (1, fan_out), jnp.float32, -bound, bound)
    return params


def _round_up(x, m):
    return (x + m - 1) // m * m


def deeper_nn_forward(text_input, image1, image2, params, *, tb_max=512):
    """Forward pass.

    The batch tile TB is the largest multiple of 16 (bf16 sublane tile) that
    is <= tb_max and leaves the grid with >=2 steps whenever the batch is
    larger than one minimal tile, so v7x's two TensorCores both get work.
    The same large tile is used on every TPU generation (the MXU streams the
    batch dim); scoped VMEM is raised to 48 MiB instead of shrinking the tile.
    """
    B = text_input.shape[0]
    Bp = _round_up(B, 16)
    if Bp > 16:
        # Prefer >=2 grid steps without shrinking below one 16-row tile.
        TB = min(tb_max, _round_up(-(-Bp // 2), 16))
    else:
        TB = Bp
    Bp = _round_up(Bp, TB)
    grid = (Bp // TB,)

    def pad_rows(x):
        pad = Bp - x.shape[0]
        return x if pad == 0 else jnp.pad(x, ((0, pad), (0, 0)))

    text_p = pad_rows(text_input.astype(jnp.float32))
    img1_p = pad_rows(image1)   # source dtype; cast to bf16 inside the kernel
    img2_p = pad_rows(image2)

    # bf16 image-branch weights (f32 accumulation in-kernel).
    w_i1 = params["image_fc1_w"].astype(jnp.bfloat16)
    w_i2 = params["image_fc2_w"].astype(jnp.bfloat16)

    # Split/refactor fc1's weight once on the host:
    #   rows   0:64  -> text partial slab            (64, 128)
    #   rows  64:192 -> image partial slabs, fused   (64, 256)
    w_f1 = params["fc1_w"]
    w_f1_txt = w_f1[0:64, :]
    w_f1_img = jnp.concatenate([w_f1[64:128, :], w_f1[128:192, :]], axis=1)

    operands = (
        text_p, img1_p, img2_p,
        params["text_fc1_w"], params["text_fc1_b"],
        params["text_fc2_w"], params["text_fc2_b"],
        w_i1, params["image_fc1_b"],
        w_i2, params["image_fc2_b"],
        w_f1_txt, w_f1_img, params["fc1_b"],
        params["fc2_w"], params["fc2_b"],
        params["fc3_w"], params["fc3_b"],
    )

    def resident(shape):
        # Constant block index: DMA'd once, stays VMEM-resident across steps.
        return pl.BlockSpec(shape, lambda i, _n=len(shape): (0,) * _n)

    in_specs = [
        pl.BlockSpec((TB, 3), lambda i: (i, 0)),           # text tile
        pl.BlockSpec((TB, 2048), lambda i: (i, 0)),        # image1 tile
        pl.BlockSpec((TB, 2048), lambda i: (i, 0)),        # image2 tile
        resident((3, 128)),    resident((1, 128)),         # text_fc1
        resident((128, 64)),   resident((1, 64)),          # text_fc2
        resident((2048, 512)), resident((1, 512)),         # image_fc1 (bf16 W)
        resident((512, 64)),   resident((1, 64)),          # image_fc2 (bf16 W)
        resident((64, 128)),                                # fc1 text slab
        resident((64, 256)),                                # fc1 fused image slab
        resident((1, 128)),                                 # fc1 bias
        resident((128, 64)),   resident((1, 64)),           # fc2
        resident((64, 2)),     resident((1, 2)),            # fc3
    ]

    out = pl.pallas_call(
        deeper_nn_kernel,
        out_shape=jax.ShapeDtypeStruct((Bp, 2), jnp.float32),
        grid=grid,
        in_specs=in_specs,
        out_specs=pl.BlockSpec((TB, 2), lambda i: (i, 0)),
        compiler_params=pltpu.CompilerParams(
            dimension_semantics=("parallel",),
            # Default scoped VMEM (16 MiB v5e / 32 MiB v6e+v7x) is too small
            # for TB=512 double-buffered f32 image tiles; 48 MiB fits every
            # generation (<= 64 MiB physical on v7x).
            vmem_limit_bytes=48 << 20,
        ),
    )(*operands)
    return out[:B]


# Pure-JAX reference. image_dtype selects f32 (exact PyTorch semantics) or
# bf16 (numerics-matched to the kernel's image path).
def deeper_nn_ref(text_input, image1, image2, p, image_dtype=jnp.float32):
    relu = lambda v: jnp.maximum(v, 0.0)
    f32 = jnp.float32
    t = relu(text_input @ p["text_fc1_w"] + p["text_fc1_b"])
    t = relu(t @ p["text_fc2_w"] + p["text_fc2_b"])
    w1 = p["image_fc1_w"].astype(image_dtype)
    w2 = p["image_fc2_w"].astype(image_dtype)

    def branch(img):
        h = relu(jnp.dot(img.astype(image_dtype), w1,
                         preferred_element_type=f32) + p["image_fc1_b"])
        h = relu(jnp.dot(h.astype(image_dtype), w2,
                         preferred_element_type=f32) + p["image_fc2_b"])
        return h

    i1, i2 = branch(image1), branch(image2)
    c = jnp.concatenate([t, i1, i2], axis=1)
    c = relu(c @ p["fc1_w"] + p["fc1_b"])
    c = relu(c @ p["fc2_w"] + p["fc2_b"])
    return c @ p["fc3_w"] + p["fc3_b"]


if __name__ == "__main__":
    key = jax.random.PRNGKey(0)
    kp, kt, k1, k2 = jax.random.split(key, 4)

    params = init_params(kp)

    B = 8  # small batch
    text_input = jax.random.normal(kt, (B, 3), jnp.float32)
    image1 = jax.random.normal(k1, (B, 2048), jnp.float32)
    image2 = jax.random.normal(k2, (B, 2048), jnp.float32)

    out = deeper_nn_forward(text_input, image1, image2, params)
    out = jax.block_until_ready(out)
    assert out.shape == (B, 2) and out.dtype == jnp.float32

    # Numerics-matched reference (bf16 image path, f32 accumulation): tight.
    ref_bf16 = deeper_nn_ref(text_input, image1, image2, params,
                             image_dtype=jnp.bfloat16)
    assert jnp.allclose(out, ref_bf16, atol=5e-3, rtol=5e-3), "mismatch vs bf16 ref"

    # Full-f32 reference: loose tolerance covers bf16 image-path quantization.
    ref_f32 = deeper_nn_ref(text_input, image1, image2, params,
                            image_dtype=jnp.float32)
    assert jnp.allclose(out, ref_f32, atol=1e-1, rtol=1e-1), "mismatch vs f32 ref"

    print("KERNEL_OK")
</pallas_src>

<mosaic_0001>
module attributes {stable_mosaic.version = 11 : i64} {
  func.func @deeper_nn_kernel(%arg0: i32, %arg1: memref<16x3xf32, #tpu.memory_space<vmem>>, %arg2: memref<16x2048xf32, #tpu.memory_space<vmem>>, %arg3: memref<16x2048xf32, #tpu.memory_space<vmem>>, %arg4: memref<3x128xf32, #tpu.memory_space<vmem>>, %arg5: memref<1x128xf32, #tpu.memory_space<vmem>>, %arg6: memref<128x64xf32, #tpu.memory_space<vmem>>, %arg7: memref<1x64xf32, #tpu.memory_space<vmem>>, %arg8: memref<2048x512xbf16, #tpu.memory_space<vmem>>, %arg9: memref<1x512xf32, #tpu.memory_space<vmem>>, %arg10: memref<512x64xbf16, #tpu.memory_space<vmem>>, %arg11: memref<1x64xf32, #tpu.memory_space<vmem>>, %arg12: memref<64x128xf32, #tpu.memory_space<vmem>>, %arg13: memref<64x256xf32, #tpu.memory_space<vmem>>, %arg14: memref<1x128xf32, #tpu.memory_space<vmem>>, %arg15: memref<128x64xf32, #tpu.memory_space<vmem>>, %arg16: memref<1x64xf32, #tpu.memory_space<vmem>>, %arg17: memref<64x2xf32, #tpu.memory_space<vmem>>, %arg18: memref<1x2xf32, #tpu.memory_space<vmem>>, %arg19: memref<16x2xf32, #tpu.memory_space<vmem>>) attributes {dimension_semantics = [#tpu.dimension_semantics<parallel>], iteration_bounds = array<i64: 1>, scalar_prefetch = 0 : i64, scratch_operands = 0 : i64, tpu.core_type = #tpu.core_type<tc>, window_params = [{transform_indices = @transform_0, window_bounds = array<i64: 16, 3>}, {transform_indices = @transform_1, window_bounds = array<i64: 16, 2048>}, {transform_indices = @transform_2, window_bounds = array<i64: 16, 2048>}, {pipeline_mode = #tpu.pipeline_mode<synchronous>, transform_indices = @transform_3, window_bounds = array<i64: 3, 128>}, {pipeline_mode = #tpu.pipeline_mode<synchronous>, transform_indices = @transform_4, window_bounds = array<i64: 1, 128>}, {pipeline_mode = #tpu.pipeline_mode<synchronous>, transform_indices = @transform_5, window_bounds = array<i64: 128, 64>}, {pipeline_mode = #tpu.pipeline_mode<synchronous>, transform_indices = @transform_6, window_bounds = array<i64: 1, 64>}, {pipeline_mode = #tpu.pipeline_mode<synchronous>, transform_indices = @transform_7, window_bounds = array<i64: 2048, 512>}, {pipeline_mode = #tpu.pipeline_mode<synchronous>, transform_indices = @transform_8, window_bounds = array<i64: 1, 512>}, {pipeline_mode = #tpu.pipeline_mode<synchronous>, transform_indices = @transform_9, window_bounds = array<i64: 512, 64>}, {pipeline_mode = #tpu.pipeline_mode<synchronous>, transform_indices = @transform_10, window_bounds = array<i64: 1, 64>}, {pipeline_mode = #tpu.pipeline_mode<synchronous>, transform_indices = @transform_11, window_bounds = array<i64: 64, 128>}, {pipeline_mode = #tpu.pipeline_mode<synchronous>, transform_indices = @transform_12, window_bounds = array<i64: 64, 256>}, {pipeline_mode = #tpu.pipeline_mode<synchronous>, transform_indices = @transform_13, window_bounds = array<i64: 1, 128>}, {pipeline_mode = #tpu.pipeline_mode<synchronous>, transform_indices = @transform_14, window_bounds = array<i64: 128, 64>}, {pipeline_mode = #tpu.pipeline_mode<synchronous>, transform_indices = @transform_15, window_bounds = array<i64: 1, 64>}, {pipeline_mode = #tpu.pipeline_mode<synchronous>, transform_indices = @transform_16, window_bounds = array<i64: 64, 2>}, {pipeline_mode = #tpu.pipeline_mode<synchronous>, transform_indices = @transform_17, window_bounds = array<i64: 1, 2>}, {transform_indices = @transform_18, window_bounds = array<i64: 16, 2>}]} {
    %c0 = arith.constant 0 : index
    %c0_0 = arith.constant 0 : index
    %0 = vector.load %arg1[%c0, %c0_0] : memref<16x3xf32, #tpu.memory_space<vmem>>, vector<16x3xf32>
    %c0_1 = arith.constant 0 : index
    %c0_2 = arith.constant 0 : index
    %1 = vector.load %arg4[%c0_1, %c0_2] : memref<3x128xf32, #tpu.memory_space<vmem>>, vector<3x128xf32>
    %cst = arith.constant dense<0.000000e+00> : vector<16x128xf32>
    %2 = tpu.matmul %0, %1, %cst {dimension_numbers = #tpu.dot_dimension_numbers<[1], [0], [0], [1], [0, 0, 1, 1], [], []>} : vector<16x3xf32>, vector<3x128xf32>, vector<16x128xf32> -> vector<16x128xf32>
    %c0_3 = arith.constant 0 : index
    %c0_4 = arith.constant 0 : index
    %3 = vector.load %arg5[%c0_3, %c0_4] : memref<1x128xf32, #tpu.memory_space<vmem>>, vector<1x128xf32>
    %4 = vector.broadcast %3 : vector<1x128xf32> to vector<16x128xf32>
    %5 = arith.addf %2, %4 : vector<16x128xf32>
    %cst_5 = arith.constant 0.000000e+00 : f32
    %6 = vector.broadcast %cst_5 : f32 to vector<16x128xf32>
    %7 = arith.maximumf %5, %6 : vector<16x128xf32>
    %c0_6 = arith.constant 0 : index
    %c0_7 = arith.constant 0 : index
    %8 = vector.load %arg6[%c0_6, %c0_7] : memref<128x64xf32, #tpu.memory_space<vmem>>, vector<128x64xf32>
    %cst_8 = arith.constant dense<0.000000e+00> : vector<16x64xf32>
    %9 = tpu.matmul %7, %8, %cst_8 {dimension_numbers = #tpu.dot_dimension_numbers<[1], [0], [0], [1], [0, 0, 1, 1], [], []>} : vector<16x128xf32>, vector<128x64xf32>, vector<16x64xf32> -> vector<16x64xf32>
    %c0_9 = arith.constant 0 : index
    %c0_10 = arith.constant 0 : index
    %10 = vector.load %arg7[%c0_9, %c0_10] : memref<1x64xf32, #tpu.memory_space<vmem>>, vector<1x64xf32>
    %11 = vector.broadcast %10 : vector<1x64xf32> to vector<16x64xf32>
    %12 = arith.addf %9, %11 : vector<16x64xf32>
    %cst_11 = arith.constant 0.000000e+00 : f32
    %13 = vector.broadcast %cst_11 : f32 to vector<16x64xf32>
    %14 = arith.maximumf %12, %13 : vector<16x64xf32>
    %c0_12 = arith.constant 0 : index
    %c0_13 = arith.constant 0 : index
    %15 = vector.load %arg2[%c0_12, %c0_13] : memref<16x2048xf32, #tpu.memory_space<vmem>>, vector<16x2048xf32>
    %16 = arith.truncf %15 : vector<16x2048xf32> to vector<16x2048xbf16>
    %c0_14 = arith.constant 0 : index
    %c0_15 = arith.constant 0 : index
    %17 = vector.load %arg3[%c0_14, %c0_15] : memref<16x2048xf32, #tpu.memory_space<vmem>>, vector<16x2048xf32>
    %18 = arith.truncf %17 : vector<16x2048xf32> to vector<16x2048xbf16>
    %19 = tpu.concatenate %16, %18 in 0 : vector<16x2048xbf16>, vector<16x2048xbf16> -> vector<32x2048xbf16>
    %c0_16 = arith.constant 0 : index
    %c0_17 = arith.constant 0 : index
    %20 = vector.load %arg8[%c0_16, %c0_17] : memref<2048x512xbf16, #tpu.memory_space<vmem>>, vector<2048x512xbf16>
    %cst_18 = arith.constant dense<0.000000e+00> : vector<32x512xf32>
    %21 = tpu.matmul %19, %20, %cst_18 {dimension_numbers = #tpu.dot_dimension_numbers<[1], [0], [0], [1], [0, 0, 1, 1], [], []>} : vector<32x2048xbf16>, vector<2048x512xbf16>, vector<32x512xf32> -> vector<32x512xf32>
    %c0_19 = arith.constant 0 : index
    %c0_20 = arith.constant 0 : index
    %22 = vector.load %arg9[%c0_19, %c0_20] : memref<1x512xf32, #tpu.memory_space<vmem>>, vector<1x512xf32>
    %23 = vector.broadcast %22 : vector<1x512xf32> to vector<32x512xf32>
    %24 = arith.addf %21, %23 : vector<32x512xf32>
    %cst_21 = arith.constant 0.000000e+00 : f32
    %25 = vector.broadcast %cst_21 : f32 to vector<32x512xf32>
    %26 = arith.maximumf %24, %25 : vector<32x512xf32>
    %27 = arith.truncf %26 : vector<32x512xf32> to vector<32x512xbf16>
    %c0_22 = arith.constant 0 : index
    %c0_23 = arith.constant 0 : index
    %28 = vector.load %arg10[%c0_22, %c0_23] : memref<512x64xbf16, #tpu.memory_space<vmem>>, vector<512x64xbf16>
    %cst_24 = arith.constant dense<0.000000e+00> : vector<32x64xf32>
    %29 = tpu.matmul %27, %28, %cst_24 {dimension_numbers = #tpu.dot_dimension_numbers<[1], [0], [0], [1], [0, 0, 1, 1], [], []>} : vector<32x512xbf16>, vector<512x64xbf16>, vector<32x64xf32> -> vector<32x64xf32>
    %c0_25 = arith.constant 0 : index
    %c0_26 = arith.constant 0 : index
    %30 = vector.load %arg11[%c0_25, %c0_26] : memref<1x64xf32, #tpu.memory_space<vmem>>, vector<1x64xf32>
    %31 = vector.broadcast %30 : vector<1x64xf32> to vector<32x64xf32>
    %32 = arith.addf %29, %31 : vector<32x64xf32>
    %cst_27 = arith.constant 0.000000e+00 : f32
    %33 = vector.broadcast %cst_27 : f32 to vector<32x64xf32>
    %34 = arith.maximumf %32, %33 : vector<32x64xf32>
    %c0_28 = arith.constant 0 : index
    %c0_29 = arith.constant 0 : index
    %35 = vector.load %arg12[%c0_28, %c0_29] : memref<64x128xf32, #tpu.memory_space<vmem>>, vector<64x128xf32>
    %cst_30 = arith.constant dense<0.000000e+00> : vector<16x128xf32>
    %36 = tpu.matmul %14, %35, %cst_30 {dimension_numbers = #tpu.dot_dimension_numbers<[1], [0], [0], [1], [0, 0, 1, 1], [], []>} : vector<16x64xf32>, vector<64x128xf32>, vector<16x128xf32> -> vector<16x128xf32>
    %c0_31 = arith.constant 0 : index
    %c0_32 = arith.constant 0 : index
    %37 = vector.load %arg13[%c0_31, %c0_32] : memref<64x256xf32, #tpu.memory_space<vmem>>, vector<64x256xf32>
    %cst_33 = arith.constant dense<0.000000e+00> : vector<32x256xf32>
    %38 = tpu.matmul %34, %37, %cst_33 {dimension_numbers = #tpu.dot_dimension_numbers<[1], [0], [0], [1], [0, 0, 1, 1], [], []>} : vector<32x64xf32>, vector<64x256xf32>, vector<32x256xf32> -> vector<32x256xf32>
    %39 = vector.extract_strided_slice %38 {offsets = [0, 0], sizes = [16, 128], strides = [1, 1]} : vector<32x256xf32> to vector<16x128xf32>
    %40 = arith.addf %36, %39 : vector<16x128xf32>
    %41 = vector.extract_strided_slice %38 {offsets = [16, 128], sizes = [16, 128], strides = [1, 1]} : vector<32x256xf32> to vector<16x128xf32>
    %42 = arith.addf %40, %41 : vector<16x128xf32>
    %c0_34 = arith.constant 0 : index
    %c0_35 = arith.constant 0 : index
    %43 = vector.load %arg14[%c0_34, %c0_35] : memref<1x128xf32, #tpu.memory_space<vmem>>, vector<1x128xf32>
    %44 = vector.broadcast %43 : vector<1x128xf32> to vector<16x128xf32>
    %45 = arith.addf %42, %44 : vector<16x128xf32>
    %cst_36 = arith.constant 0.000000e+00 : f32
    %46 = vector.broadcast %cst_36 : f32 to vector<16x128xf32>
    %47 = arith.maximumf %45, %46 : vector<16x128xf32>
    %c0_37 = arith.constant 0 : index
    %c0_38 = arith.constant 0 : index
    %48 = vector.load %arg15[%c0_37, %c0_38] : memref<128x64xf32, #tpu.memory_space<vmem>>, vector<128x64xf32>
    %cst_39 = arith.constant dense<0.000000e+00> : vector<16x64xf32>
    %49 = tpu.matmul %47, %48, %cst_39 {dimension_numbers = #tpu.dot_dimension_numbers<[1], [0], [0], [1], [0, 0, 1, 1], [], []>} : vector<16x128xf32>, vector<128x64xf32>, vector<16x64xf32> -> vector<16x64xf32>
    %c0_40 = arith.constant 0 : index
    %c0_41 = arith.constant 0 : index
    %50 = vector.load %arg16[%c0_40, %c0_41] : memref<1x64xf32, #tpu.memory_space<vmem>>, vector<1x64xf32>
    %51 = vector.broadcast %50 : vector<1x64xf32> to vector<16x64xf32>
    %52 = arith.addf %49, %51 : vector<16x64xf32>
    %cst_42 = arith.constant 0.000000e+00 : f32
    %53 = vector.broadcast %cst_42 : f32 to vector<16x64xf32>
    %54 = arith.maximumf %52, %53 : vector<16x64xf32>
    %c0_43 = arith.constant 0 : index
    %c0_44 = arith.constant 0 : index
    %55 = vector.load %arg17[%c0_43, %c0_44] : memref<64x2xf32, #tpu.memory_space<vmem>>, vector<64x2xf32>
    %cst_45 = arith.constant dense<0.000000e+00> : vector<16x2xf32>
    %56 = tpu.matmul %54, %55, %cst_45 {dimension_numbers = #tpu.dot_dimension_numbers<[1], [0], [0], [1], [0, 0, 1, 1], [], []>} : vector<16x64xf32>, vector<64x2xf32>, vector<16x2xf32> -> vector<16x2xf32>
    %c0_46 = arith.constant 0 : index
    %c0_47 = arith.constant 0 : index
    %57 = vector.load %arg18[%c0_46, %c0_47] : memref<1x2xf32, #tpu.memory_space<vmem>>, vector<1x2xf32>
    %58 = vector.broadcast %57 : vector<1x2xf32> to vector<16x2xf32>
    %59 = arith.addf %56, %58 : vector<16x2xf32>
    %c0_48 = arith.constant 0 : index
    %c0_49 = arith.constant 0 : index
    %60 = vector.load %arg19[%c0_48, %c0_49] : memref<16x2xf32, #tpu.memory_space<vmem>>, vector<16x2xf32>
    tpu.vector_store %arg19[%c0_48, %c0_49], %59 {strides = array<i32>} : memref<16x2xf32, #tpu.memory_space<vmem>>, vector<16x2xf32>,
    return
  }
  func.func @transform_0(%arg0: i32) -> (i32, i32) {
    %c0_i32 = arith.constant 0 : i32
    %c0_i32_0 = arith.constant 0 : i32
    return %arg0, %c0_i32 : i32, i32
  }
  func.func @transform_1(%arg0: i32) -> (i32, i32) {
    %c0_i32 = arith.constant 0 : i32
    %c0_i32_0 = arith.constant 0 : i32
    return %arg0, %c0_i32 : i32, i32
  }
  func.func @transform_2(%arg0: i32) -> (i32, i32) {
    %c0_i32 = arith.constant 0 : i32
    %c0_i32_0 = arith.constant 0 : i32
    return %arg0, %c0_i32 : i32, i32
  }
  func.func @transform_3(%arg0: i32) -> (i32, i32) {
    %c0_i32 = arith.constant 0 : i32
    %c0_i32_0 = arith.constant 0 : i32
    %c0_i32_1 = arith.constant 0 : i32
    return %c0_i32, %c0_i32_0 : i32, i32
  }
  func.func @transform_4(%arg0: i32) -> (i32, i32) {
    %c0_i32 = arith.constant 0 : i32
    %c0_i32_0 = arith.constant 0 : i32
    %c0_i32_1 = arith.constant 0 : i32
    return %c0_i32, %c0_i32_0 : i32, i32
  }
  func.func @transform_5(%arg0: i32) -> (i32, i32) {
    %c0_i32 = arith.constant 0 : i32
    %c0_i32_0 = arith.constant 0 : i32
    %c0_i32_1 = arith.constant 0 : i32
    return %c0_i32, %c0_i32_0 : i32, i32
  }
  func.func @transform_6(%arg0: i32) -> (i32, i32) {
    %c0_i32 = arith.constant 0 : i32
    %c0_i32_0 = arith.constant 0 : i32
    %c0_i32_1 = arith.constant 0 : i32
    return %c0_i32, %c0_i32_0 : i32, i32
  }
  func.func @transform_7(%arg0: i32) -> (i32, i32) {
    %c0_i32 = arith.constant 0 : i32
    %c0_i32_0 = arith.constant 0 : i32
    %c0_i32_1 = arith.constant 0 : i32
    return %c0_i32, %c0_i32_0 : i32, i32
  }
  func.func @transform_8(%arg0: i32) -> (i32, i32) {
    %c0_i32 = arith.constant 0 : i32
    %c0_i32_0 = arith.constant 0 : i32
    %c0_i32_1 = arith.constant 0 : i32
    return %c0_i32, %c0_i32_0 : i32, i32
  }
  func.func @transform_9(%arg0: i32) -> (i32, i32) {
    %c0_i32 = arith.constant 0 : i32
    %c0_i32_0 = arith.constant 0 : i32
    %c0_i32_1 = arith.constant 0 : i32
    return %c0_i32, %c0_i32_0 : i32, i32
  }
  func.func @transform_10(%arg0: i32) -> (i32, i32) {
    %c0_i32 = arith.constant 0 : i32
    %c0_i32_0 = arith.constant 0 : i32
    %c0_i32_1 = arith.constant 0 : i32
    return %c0_i32, %c0_i32_0 : i32, i32
  }
  func.func @transform_11(%arg0: i32) -> (i32, i32) {
    %c0_i32 = arith.constant 0 : i32
    %c0_i32_0 = arith.constant 0 : i32
    %c0_i32_1 = arith.constant 0 : i32
    return %c0_i32, %c0_i32_0 : i32, i32
  }
  func.func @transform_12(%arg0: i32) -> (i32, i32) {
    %c0_i32 = arith.constant 0 : i32
    %c0_i32_0 = arith.constant 0 : i32
    %c0_i32_1 = arith.constant 0 : i32
    return %c0_i32, %c0_i32_0 : i32, i32
  }
  func.func @transform_13(%arg0: i32) -> (i32, i32) {
    %c0_i32 = arith.constant 0 : i32
    %c0_i32_0 = arith.constant 0 : i32
    %c0_i32_1 = arith.constant 0 : i32
    return %c0_i32, %c0_i32_0 : i32, i32
  }
  func.func @transform_14(%arg0: i32) -> (i32, i32) {
    %c0_i32 = arith.constant 0 : i32
    %c0_i32_0 = arith.constant 0 : i32
    %c0_i32_1 = arith.constant 0 : i32
    return %c0_i32, %c0_i32_0 : i32, i32
  }
  func.func @transform_15(%arg0: i32) -> (i32, i32) {
    %c0_i32 = arith.constant 0 : i32
    %c0_i32_0 = arith.constant 0 : i32
    %c0_i32_1 = arith.constant 0 : i32
    return %c0_i32, %c0_i32_0 : i32, i32
  }
  func.func @transform_16(%arg0: i32) -> (i32, i32) {
    %c0_i32 = arith.constant 0 : i32
    %c0_i32_0 = arith.constant 0 : i32
    %c0_i32_1 = arith.constant 0 : i32
    return %c0_i32, %c0_i32_0 : i32, i32
  }
  func.func @transform_17(%arg0: i32) -> (i32, i32) {
    %c0_i32 = arith.constant 0 : i32
    %c0_i32_0 = arith.constant 0 : i32
    %c0_i32_1 = arith.constant 0 : i32
    return %c0_i32, %c0_i32_0 : i32, i32
  }
  func.func @transform_18(%arg0: i32) -> (i32, i32) {
    %c0_i32 = arith.constant 0 : i32
    %c0_i32_0 = arith.constant 0 : i32
    return %arg0, %c0_i32 : i32, i32
  }
}

</mosaic_0001>

<llo_original>
// kernel: tpu_custom_call.1
$region0: #{tpu_custom_call.1}
  #allocation0 [shape = 'u32[]', space=smem, size = 0x4, offset = 0x4, fixed_abs, tag = 'smem constant byte address 0x4 - core index']
  #allocation1 [shape = 'u32[72,128]{1,0:T(1,128)}', space=vmem, size = 0x9000, scoped, tag = 'internal scratch']
  %s0 = inlined_call_operand.vmem [shape: f32[16,3], index: 0, kind: input, shape index: {}]
  %s1 = inlined_call_operand.hbm [shape: f32[16,2048], index: 1, kind: input, shape index: {}]
  %s2 = inlined_call_operand.hbm [shape: f32[16,2048], index: 2, kind: input, shape index: {}]
  %s3 = inlined_call_operand.hbm [shape: f32[3,128], index: 3, kind: input, shape index: {}]
  %s4 = inlined_call_operand.hbm [shape: f32[1,128], index: 4, kind: input, shape index: {}]
  %s5 = inlined_call_operand.vmem [shape: f32[128,64], index: 5, kind: input, shape index: {}]
  %s6 = inlined_call_operand.hbm [shape: f32[1,64], index: 6, kind: input, shape index: {}]
  %s7 = inlined_call_operand.hbm [shape: bf16[2048,512], index: 7, kind: input, shape index: {}]
  %s8 = inlined_call_operand.hbm [shape: f32[1,512], index: 8, kind: input, shape index: {}]
  %s9 = inlined_call_operand.vmem [shape: bf16[512,64], index: 9, kind: input, shape index: {}]
  %s10 = inlined_call_operand.hbm [shape: f32[1,64], index: 10, kind: input, shape index: {}]
  %s11 = inlined_call_operand.hbm [shape: f32[64,128], index: 11, kind: input, shape index: {}]
  %s12 = inlined_call_operand.hbm [shape: f32[64,256], index: 12, kind: input, shape index: {}]
  %s13 = inlined_call_operand.hbm [shape: f32[1,128], index: 13, kind: input, shape index: {}]
  %s14 = inlined_call_operand.vmem [shape: f32[128,64], index: 14, kind: input, shape index: {}]
  %s15 = inlined_call_operand.hbm [shape: f32[1,64], index: 15, kind: input, shape index: {}]
  %s16 = inlined_call_operand.vmem [shape: f32[64,2], index: 16, kind: input, shape index: {}]
  %s17 = inlined_call_operand.hbm [shape: f32[1,2], index: 17, kind: input, shape index: {}]
  %s18 = inlined_call_operand.vmem [shape: f32[16,2], index: 18, kind: output, shape index: {}]
  %s19 = sld [smem:[#allocation0]]
  $region134: #{tpu_custom_call.1} parent=0
    _
  %s21 = ssub.s32 1, %s19
  %s22 = scalar_select 0, %s21, %s19
  $region1: #{tpu_custom_call.1} parent=0
    #allocation2 [shape = 'u8[131072]{0}', space=vmem, size = 0x20000, scoped, tag = 'input window, operand 1, single buffered']
    #allocation3 [shape = 's32[1]{0}', space=sflag, size = 0x4, scoped, tag = 'scoped memory for tpu_custom_call.1']
    #allocation4 [shape = 'u8[131072]{0}', space=vmem, size = 0x20000, scoped, tag = 'input window, operand 2, single buffered']
    #allocation5 [shape = 's32[1]{0}', space=sflag, size = 0x4, scoped, tag = 'scoped memory for tpu_custom_call.1']
    #allocation6 [shape = 'u8[2048]{0}', space=vmem, size = 0x800, scoped, tag = 'input window, operand 3, single buffered']
    #allocation7 [shape = 'u8[512]{0}', space=vmem, size = 0x400, scoped, tag = 'input window, operand 4, single buffered']
    #allocation8 [shape = 's32[1]{0}', space=sflag, size = 0x4, scoped, tag = 'scoped memory for tpu_custom_call.1']
    #allocation9 [shape = 'u8[512]{0}', space=vmem, size = 0x400, scoped, tag = 'input window, operand 6, single buffered']
    #allocation10 [shape = 'u8[2097152]{0}', space=vmem, size = 0x200000, scoped, tag = 'input window, operand 7, single buffered']
    #allocation11 [shape = 's32[1]{0}', space=sflag, size = 0x4, scoped, tag = 'scoped memory for tpu_custom_call.1']
    #allocation12 [shape = 'u8[2048]{0}', space=vmem, size = 0x800, scoped, tag = 'input window, operand 8, single buffered']
    #allocation13 [shape = 'u8[512]{0}', space=vmem, size = 0x400, scoped, tag = 'input window, operand 10, single buffered']
    #allocation14 [shape = 's32[1]{0}', space=sflag, size = 0x4, scoped, tag = 'scoped memory for tpu_custom_call.1']
    #allocation15 [shape = 'u8[32768]{0}', space=vmem, size = 0x8000, scoped, tag = 'input window, operand 11, single buffered']
    #allocation16 [shape = 'u8[65536]{0}', space=vmem, size = 0x10000, scoped, tag = 'input window, operand 12, single buffered']
    #allocation17 [shape = 's32[1]{0}', space=sflag, size = 0x4, scoped, tag = 'scoped memory for tpu_custom_call.1']
    #allocation18 [shape = 'u8[512]{0}', space=vmem, size = 0x400, scoped, tag = 'input window, operand 13, single buffered']
    #allocation19 [shape = 'u8[512]{0}', space=vmem, size = 0x400, scoped, tag = 'input window, operand 15, single buffered']
    #allocation20 [shape = 's32[1]{0}', space=sflag, size = 0x4, scoped, tag = 'scoped memory for tpu_custom_call.1']
    #allocation21 [shape = 'u8[512]{0}', space=vmem, size = 0x400, scoped, tag = 'input window, operand 17, single buffered']
    %23 = vsyncpa [#allocation3], 0
    %24 = vsyncpa [#allocation5], 0
    %25 = vsyncpa [#allocation8], 0
    %26 = vsyncpa [#allocation11], 0
    %27 = vsyncpa [#allocation14], 0
    %28 = vsyncpa [#allocation17], 0
    %29 = vsyncpa [#allocation20], 0
    // Predicated region
    $region2: #{tpu_custom_call.1} parent=1 // pred_check
      _
    $region3: #{tpu_custom_call.1} parent=1 // pred_check_branch
      %31 = sbr.rel (0) target = $region5
    $region4: #{tpu_custom_call.1} parent=1 // pred_region
      _
    $region5: #{tpu_custom_call.1} parent=1 // pred_fallthru
      _
    // Predicated region
    $region6: #{tpu_custom_call.1} parent=1 // pred_check
      _
    $region7: #{tpu_custom_call.1} parent=1 // pred_check_branch
      %33 = sbr.rel (0) target = $region9
    $region8: #{tpu_custom_call.1} parent=1 // pred_region
      %35 = vsyncadd [#allocation3], 0
      %s36 = sshll.u32 %s1, 4
      %s37 = int_to_ptr.hbm [resolvable:$true] %s36
      %s38 = sshll.u32 [#allocation2], 4
      %s39 = int_to_ptr.vmem [resolvable:$true] %s38
      %44 = dma.hbm_to_vmem [thread:$0]  %s37, 4096, %s39, [#allocation3], 2048, 2048, 128
    $region9: #{tpu_custom_call.1} parent=1 // pred_fallthru
      _
    // Predicated region
    $region10: #{tpu_custom_call.1} parent=1 // pred_check
      _
    $region11: #{tpu_custom_call.1} parent=1 // pred_check_branch
      %46 = sbr.rel (0) target = $region13
    $region12: #{tpu_custom_call.1} parent=1 // pred_region
      %48 = vsyncadd [#allocation5], 0
      %s49 = sshll.u32 %s2, 4
      %s50 = int_to_ptr.hbm [resolvable:$true] %s49
      %s51 = sshll.u32 [#allocation4], 4
      %s52 = int_to_ptr.vmem [resolvable:$true] %s51
      %57 = dma.hbm_to_vmem [thread:$0]  %s50, 4096, %s52, [#allocation5], 2048, 2048, 128
    $region13: #{tpu_custom_call.1} parent=1 // pred_fallthru
      _
    // Predicated region
    $region14: #{tpu_custom_call.1} parent=1 // pred_check
      _
    $region15: #{tpu_custom_call.1} parent=1 // pred_check_branch
      %59 = sbr.rel (0) target = $region17
    $region16: #{tpu_custom_call.1} parent=1 // pred_region
      %61 = vsyncadd [#allocation5], 0
      %s63 = sshll.u32 %s3, 4
      %s64 = int_to_ptr.hbm [resolvable:$true] %s63
      %s65 = sshll.u32 [#allocation6], 4
      %s66 = int_to_ptr.vmem [resolvable:$true] %s65
      %68 = dma.hbm_to_vmem [thread:$0]  %s64, 64, %s66, [#allocation5]
    $region17: #{tpu_custom_call.1} parent=1 // pred_fallthru
      _
    // Predicated region
    $region18: #{tpu_custom_call.1} parent=1 // pred_check
      _
    $region19: #{tpu_custom_call.1} parent=1 // pred_check_branch
      %70 = sbr.rel (0) target = $region21
    $region20: #{tpu_custom_call.1} parent=1 // pred_region
      %72 = vsyncadd [#allocation8], 0
      %s74 = sshll.u32 %s4, 4
      %s75 = int_to_ptr.hbm [resolvable:$true] %s74
      %s76 = sshll.u32 [#allocation7], 4
      %s77 = int_to_ptr.vmem [resolvable:$true] %s76
      %79 = dma.hbm_to_vmem [thread:$0]  %s75, 16, %s77, [#allocation8]
    $region21: #{tpu_custom_call.1} parent=1 // pred_fallthru
      _
    // Predicated region
    $region22: #{tpu_custom_call.1} parent=1 // pred_check
      _
    $region23: #{tpu_custom_call.1} parent=1 // pred_check_branch
      %81 = sbr.rel (0) target = $region25
    $region24: #{tpu_custom_call.1} parent=1 // pred_region
      _
    $region25: #{tpu_custom_call.1} parent=1 // pred_fallthru
      _
    // Predicated region
    $region26: #{tpu_custom_call.1} parent=1 // pred_check
      _
    $region27: #{tpu_custom_call.1} parent=1 // pred_check_branch
      %83 = sbr.rel (0) target = $region29
    $region28: #{tpu_custom_call.1} parent=1 // pred_region
      %85 = vsyncadd [#allocation8], 0
      %s87 = sshll.u32 %s6, 4
      %s88 = int_to_ptr.hbm [resolvable:$true] %s87
      %s89 = sshll.u32 [#allocation9], 4
      %s90 = int_to_ptr.vmem [resolvable:$true] %s89
      %92 = dma.hbm_to_vmem [thread:$0]  %s88, 16, %s90, [#allocation8]
    $region29: #{tpu_custom_call.1} parent=1 // pred_fallthru
      _
    // Predicated region
    $region30: #{tpu_custom_call.1} parent=1 // pred_check
      _
    $region31: #{tpu_custom_call.1} parent=1 // pred_check_branch
      %94 = sbr.rel (0) target = $region33
    $region32: #{tpu_custom_call.1} parent=1 // pred_region
      %96 = vsyncadd [#allocation11], 0
      %s97 = sshll.u32 %s7, 4
      %s98 = int_to_ptr.hbm [resolvable:$true] %s97
      %s99 = sshll.u32 [#allocation10], 4
      %s100 = int_to_ptr.vmem [resolvable:$true] %s99
      %105 = dma.hbm_to_vmem [thread:$0]  %s98, 65536, %s100, [#allocation11], 256, 256, 16
    $region33: #{tpu_custom_call.1} parent=1 // pred_fallthru
      _
    // Predicated region
    $region34: #{tpu_custom_call.1} parent=1 // pred_check
      _
    $region35: #{tpu_custom_call.1} parent=1 // pred_check_branch
      %107 = sbr.rel (0) target = $region37
    $region36: #{tpu_custom_call.1} parent=1 // pred_region
      %109 = vsyncadd [#allocation11], 0
      %s111 = sshll.u32 %s8, 4
      %s112 = int_to_ptr.hbm [resolvable:$true] %s111
      %s113 = sshll.u32 [#allocation12], 4
      %s114 = int_to_ptr.vmem [resolvable:$true] %s113
      %116 = dma.hbm_to_vmem [thread:$0]  %s112, 64, %s114, [#allocation11]
    $region37: #{tpu_custom_call.1} parent=1 // pred_fallthru
      _
    // Predicated region
    $region38: #{tpu_custom_call.1} parent=1 // pred_check
      _
    $region39: #{tpu_custom_call.1} parent=1 // pred_check_branch
      %118 = sbr.rel (0) target = $region41
    $region40: #{tpu_custom_call.1} parent=1 // pred_region
      _
    $region41: #{tpu_custom_call.1} parent=1 // pred_fallthru
      _
    // Predicated region
    $region42: #{tpu_custom_call.1} parent=1 // pred_check
      _
    $region43: #{tpu_custom_call.1} parent=1 // pred_check_branch
      %120 = sbr.rel (0) target = $region45
    $region44: #{tpu_custom_call.1} parent=1 // pred_region
      %122 = vsyncadd [#allocation14], 0
      %s124 = sshll.u32 %s10, 4
      %s125 = int_to_ptr.hbm [resolvable:$true] %s124
      %s126 = sshll.u32 [#allocation13], 4
      %s127 = int_to_ptr.vmem [resolvable:$true] %s126
      %129 = dma.hbm_to_vmem [thread:$0]  %s125, 16, %s127, [#allocation14]
    $region45: #{tpu_custom_call.1} parent=1 // pred_fallthru
      _
    // Predicated region
    $region46: #{tpu_custom_call.1} parent=1 // pred_check
      _
    $region47: #{tpu_custom_call.1} parent=1 // pred_check_branch
      %131 = sbr.rel (0) target = $region49
    $region48: #{tpu_custom_call.1} parent=1 // pred_region
      %133 = vsyncadd [#allocation14], 0
      %s134 = sshll.u32 %s11, 4
      %s135 = int_to_ptr.hbm [resolvable:$true] %s134
      %s136 = sshll.u32 [#allocation15], 4
      %s137 = int_to_ptr.vmem [resolvable:$true] %s136
      %142 = dma.hbm_to_vmem [thread:$0]  %s135, 1024, %s137, [#allocation14], 128, 128, 8
    $region49: #{tpu_custom_call.1} parent=1 // pred_fallthru
      _
    // Predicated region
    $region50: #{tpu_custom_call.1} parent=1 // pred_check
      _
    $region51: #{tpu_custom_call.1} parent=1 // pred_check_branch
      %144 = sbr.rel (0) target = $region53
    $region52: #{tpu_custom_call.1} parent=1 // pred_region
      %146 = vsyncadd [#allocation17], 0
      %s147 = sshll.u32 %s12, 4
      %s148 = int_to_ptr.hbm [resolvable:$true] %s147
      %s149 = sshll.u32 [#allocation16], 4
      %s150 = int_to_ptr.vmem [resolvable:$true] %s149
      %155 = dma.hbm_to_vmem [thread:$0]  %s148, 2048, %s150, [#allocation17], 256, 256, 16
    $region53: #{tpu_custom_call.1} parent=1 // pred_fallthru
      _
    // Predicated region
    $region54: #{tpu_custom_call.1} parent=1 // pred_check
      _
    $region55: #{tpu_custom_call.1} parent=1 // pred_check_branch
      %157 = sbr.rel (0) target = $region57
    $region56: #{tpu_custom_call.1} parent=1 // pred_region
      %159 = vsyncadd [#allocation17], 0
      %s161 = sshll.u32 %s13, 4
      %s162 = int_to_ptr.hbm [resolvable:$true] %s161
      %s163 = sshll.u32 [#allocation18], 4
      %s164 = int_to_ptr.vmem [resolvable:$true] %s163
      %166 = dma.hbm_to_vmem [thread:$0]  %s162, 16, %s164, [#allocation17]
    $region57: #{tpu_custom_call.1} parent=1 // pred_fallthru
      _
    // Predicated region
    $region58: #{tpu_custom_call.1} parent=1 // pred_check
      _
    $region59: #{tpu_custom_call.1} parent=1 // pred_check_branch
      %168 = sbr.rel (0) target = $region61
    $region60: #{tpu_custom_call.1} parent=1 // pred_region
      _
    $region61: #{tpu_custom_call.1} parent=1 // pred_fallthru
      _
    // Predicated region
    $region62: #{tpu_custom_call.1} parent=1 // pred_check
      _
    $region63: #{tpu_custom_call.1} parent=1 // pred_check_branch
      %170 = sbr.rel (0) target = $region65
    $region64: #{tpu_custom_call.1} parent=1 // pred_region
      %172 = vsyncadd [#allocation20], 0
      %s174 = sshll.u32 %s15, 4
      %s175 = int_to_ptr.hbm [resolvable:$true] %s174
      %s176 = sshll.u32 [#allocation19], 4
      %s177 = int_to_ptr.vmem [resolvable:$true] %s176
      %179 = dma.hbm_to_vmem [thread:$0]  %s175, 16, %s177, [#allocation20]
    $region65: #{tpu_custom_call.1} parent=1 // pred_fallthru
      _
    // Predicated region
    $region66: #{tpu_custom_call.1} parent=1 // pred_check
      _
    $region67: #{tpu_custom_call.1} parent=1 // pred_check_branch
      %181 = sbr.rel (0) target = $region69
    $region68: #{tpu_custom_call.1} parent=1 // pred_region
      _
    $region69: #{tpu_custom_call.1} parent=1 // pred_fallthru
      _
    // Predicated region
    $region70: #{tpu_custom_call.1} parent=1 // pred_check
      _
    $region71: #{tpu_custom_call.1} parent=1 // pred_check_branch
      %183 = sbr.rel (0) target = $region73
    $region72: #{tpu_custom_call.1} parent=1 // pred_region
      %185 = vsyncadd [#allocation20], 0
      %s187 = sshll.u32 %s17, 4
      %s188 = int_to_ptr.hbm [resolvable:$true] %s187
      %s189 = sshll.u32 [#allocation21], 4
      %s190 = int_to_ptr.vmem [resolvable:$true] %s189
      %192 = dma.hbm_to_vmem [thread:$0]  %s188, 16, %s190, [#allocation20]
    $region73: #{tpu_custom_call.1} parent=1 // pred_fallthru
      _
    // Predicated region
    $region74: #{tpu_custom_call.1} parent=1 // pred_check
      _
    $region75: #{tpu_custom_call.1} parent=1 // pred_check_branch
      %194 = sbr.rel (0) target = $region77
    $region76: #{tpu_custom_call.1} parent=1 // pred_region
      %196 = dma.done [#allocation3], 4096
    $region77: #{tpu_custom_call.1} parent=1 // pred_fallthru
      _
    // Predicated region
    $region78: #{tpu_custom_call.1} parent=1 // pred_check
      _
    $region79: #{tpu_custom_call.1} parent=1 // pred_check_branch
      %198 = sbr.rel (0) target = $region81
    $region80: #{tpu_custom_call.1} parent=1 // pred_region
      %200 = dma.done [#allocation5], 4096
    $region81: #{tpu_custom_call.1} parent=1 // pred_fallthru
      _
    // Predicated region
    $region82: #{tpu_custom_call.1} parent=1 // pred_check
      _
    $region83: #{tpu_custom_call.1} parent=1 // pred_check_branch
      %202 = sbr.rel (0) target = $region85
    $region84: #{tpu_custom_call.1} parent=1 // pred_region
      %204 = dma.done [#allocation5], 64
    $region85: #{tpu_custom_call.1} parent=1 // pred_fallthru
      _
    // Predicated region
    $region86: #{tpu_custom_call.1} parent=1 // pred_check
      _
    $region87: #{tpu_custom_call.1} parent=1 // pred_check_branch
      %206 = sbr.rel (0) target = $region89
    $region88: #{tpu_custom_call.1} parent=1 // pred_region
      %208 = dma.done [#allocation8], 16
    $region89: #{tpu_custom_call.1} parent=1 // pred_fallthru
      _
    // Predicated region
    $region90: #{tpu_custom_call.1} parent=1 // pred_check
      _
    $region91: #{tpu_custom_call.1} parent=1 // pred_check_branch
      %210 = sbr.rel (0) target = $region93
    $region92: #{tpu_custom_call.1} parent=1 // pred_region
      %212 = dma.done [#allocation8], 16
    $region93: #{tpu_custom_call.1} parent=1 // pred_fallthru
      _
    // Predicated region
    $region94: #{tpu_custom_call.1} parent=1 // pred_check
      _
    $region95: #{tpu_custom_call.1} parent=1 // pred_check_branch
      %214 = sbr.rel (0) target = $region97
    $region96: #{tpu_custom_call.1} parent=1 // pred_region
      %216 = dma.done [#allocation11], 65536
    $region97: #{tpu_custom_call.1} parent=1 // pred_fallthru
      _
    // Predicated region
    $region98: #{tpu_custom_call.1} parent=1 // pred_check
      _
    $region99: #{tpu_custom_call.1} parent=1 // pred_check_branch
      %218 = sbr.rel (0) target = $region101
    $region100: #{tpu_custom_call.1} parent=1 // pred_region
      %220 = dma.done [#allocation11], 64
    $region101: #{tpu_custom_call.1} parent=1 // pred_fallthru
      _
    // Predicated region
    $region102: #{tpu_custom_call.1} parent=1 // pred_check
      _
    $region103: #{tpu_custom_call.1} parent=1 // pred_check_branch
      %222 = sbr.rel (0) target = $region105
    $region104: #{tpu_custom_call.1} parent=1 // pred_region
      %224 = dma.done [#allocation14], 16
    $region105: #{tpu_custom_call.1} parent=1 // pred_fallthru
      _
    // Predicated region
    $region106: #{tpu_custom_call.1} parent=1 // pred_check
      _
    $region107: #{tpu_custom_call.1} parent=1 // pred_check_branch
      %226 = sbr.rel (0) target = $region109
    $region108: #{tpu_custom_call.1} parent=1 // pred_region
      %228 = dma.done [#allocation14], 1024
    $region109: #{tpu_custom_call.1} parent=1 // pred_fallthru
      _
    // Predicated region
    $region110: #{tpu_custom_call.1} parent=1 // pred_check
      _
    $region111: #{tpu_custom_call.1} parent=1 // pred_check_branch
      %230 = sbr.rel (0) target = $region113
    $region112: #{tpu_custom_call.1} parent=1 // pred_region
      %232 = dma.done [#allocation17], 2048
    $region113: #{tpu_custom_call.1} parent=1 // pred_fallthru
      _
    // Predicated region
    $region114: #{tpu_custom_call.1} parent=1 // pred_check
      _
    $region115: #{tpu_custom_call.1} parent=1 // pred_check_branch
      %234 = sbr.rel (0) target = $region117
    $region116: #{tpu_custom_call.1} parent=1 // pred_region
      %236 = dma.done [#allocation17], 16
    $region117: #{tpu_custom_call.1} parent=1 // pred_fallthru
      _
    // Predicated region
    $region118: #{tpu_custom_call.1} parent=1 // pred_check
      _
    $region119: #{tpu_custom_call.1} parent=1 // pred_check_branch
      %238 = sbr.rel (0) target = $region121
    $region120: #{tpu_custom_call.1} parent=1 // pred_region
      %240 = dma.done [#allocation20], 16
    $region121: #{tpu_custom_call.1} parent=1 // pred_fallthru
      _
    // Predicated region
    $region122: #{tpu_custom_call.1} parent=1 // pred_check
      _
    $region123: #{tpu_custom_call.1} parent=1 // pred_check_branch
      %242 = sbr.rel (0) target = $region125
    $region124: #{tpu_custom_call.1} parent=1 // pred_region
      %244 = dma.done [#allocation20], 16
    $region125: #{tpu_custom_call.1} parent=1 // pred_fallthru
      _
    %v245 = vld [vmem:[%s0] sm:$0xff]
    %v246 = vld [vmem:[%s0 + $0x8] sm:$0xff]
    %v247 = vld [vmem:[#allocation6] sm:$0x7]
    %v248 = vld [vmem:[#allocation7] sm:$0x1]
    %v250 = vperm.slane %v248, 0
    %vm252 = vcmask 23552
    %v254 = vsel %vm252, %v245, 0
    %v257 = vsel %vm252, %v246, 0
    %vm259 = vcmask 1042432
    %v261 = vsel %vm259, %v247, 0
    %263 = vmatpush.msra.mxu0 0.0
    %264 = vmatpush.msra.mxu0 0.0
    %265 = vmatpush.msra.mxu0 0.0
    %266 = vmatpush.msra.mxu0 0.0
    %267 = vmatpush.msra.mxu0 0.0
    %268 = vmatpush.msra.mxu0 0.0
    %269 = vmatpush.msra.mxu0 0.0
    %270 = vmatpush.msra.mxu0 0.0
    %271 = vmatpush.msra.mxu0 0.0
    %272 = vmatpush.msra.mxu0 0.0
    %273 = vmatpush.msra.mxu0 0.0
    %274 = vmatpush.msra.mxu0 0.0
    %275 = vmatpush.msra.mxu0 0.0
    %276 = vmatpush.msra.mxu0 0.0
    %277 = vmatpush.msra.mxu0 0.0
    %278 = vmatpush.msra.mxu0 %v261
    %279 = vmatmul.f32.gmra.mxu0 %v254
    %v280 = vpop.f32.mrf.mxu0
    %v281 = vadd.f32 %v250, %v280
    %282 = vmatmul.f32.gmra.mxu0 %v257
    %v283 = vpop.f32.mrf.mxu0
    %v284 = vadd.f32 %v250, %v283
    %285 = vdwg.mxu0
    %v286 = vmax.f32 %v281, 0.0
    %v287 = vmax.f32 %v284, 0.0
    %v288 = vld [vmem:[%s5] sm:$0xff]
    %v289 = vld [vmem:[%s5 + $0x8] sm:$0xff]
    %v290 = vld [vmem:[%s5 + $0x10] sm:$0xff]
    %v291 = vld [vmem:[%s5 + $0x18] sm:$0xff]
    %v292 = vld [vmem:[%s5 + $0x20] sm:$0xff]
    %v293 = vld [vmem:[%s5 + $0x28] sm:$0xff]
    %v294 = vld [vmem:[%s5 + $0x30] sm:$0xff]
    %v295 = vld [vmem:[%s5 + $0x38] sm:$0xff]
    %v296 = vld [vmem:[%s5 + $0x40] sm:$0xff]
    %v297 = vld [vmem:[%s5 + $0x48] sm:$0xff]
    %v298 = vld [vmem:[%s5 + $0x50] sm:$0xff]
    %v299 = vld [vmem:[%s5 + $0x58] sm:$0xff]
    %v300 = vld [vmem:[%s5 + $0x60] sm:$0xff]
    %v301 = vld [vmem:[%s5 + $0x68] sm:$0xff]
    %v302 = vld [vmem:[%s5 + $0x70] sm:$0xff]
    %v303 = vld [vmem:[%s5 + $0x78] sm:$0xff]
    %v304 = vld [vmem:[#allocation9] sm:$0x1]
    %v306 = vperm.slane %v304, 0
    %308 = vmatpush.msra.mxu0 %v303
    %309 = vmatpush.msra.mxu0 %v302
    %310 = vmatpush.msra.mxu0 %v301
    %311 = vmatpush.msra.mxu0 %v300
    %312 = vmatpush.msra.mxu0 %v299
    %313 = vmatpush.msra.mxu0 %v298
    %314 = vmatpush.msra.mxu0 %v297
    %315 = vmatpush.msra.mxu0 %v296
    %316 = vmatpush.msra.mxu0 %v295
    %317 = vmatpush.msra.mxu0 %v294
    %318 = vmatpush.msra.mxu0 %v293
    %319 = vmatpush.msra.mxu0 %v292
    %320 = vmatpush.msra.mxu0 %v291
    %321 = vmatpush.msra.mxu0 %v290
    %322 = vmatpush.msra.mxu0 %v289
    %323 = vmatpush.msra.mxu0 %v288
    %324 = vmatmul.f32.gmra.mxu0 %v286
    %v325 = vpop.f32.mrf.mxu0
    %v326 = vadd.f32 %v306, %v325
    %327 = vmatmul.f32.gmra.mxu0 %v287
    %v328 = vpop.f32.mrf.mxu0
    %v329 = vadd.f32 %v306, %v328
    %330 = vdwg.mxu0
    %v331 = vmax.f32 %v326, 0.0
    %v332 = vmax.f32 %v329, 0.0
    %v333 = vld [vmem:[#allocation2] sm:$0xff]
    %v334 = vld [vmem:[#allocation2 + $0x8] sm:$0xff]
    %v335 = vld [vmem:[#allocation2 + $0x10] sm:$0xff]
    %v336 = vld [vmem:[#allocation2 + $0x18] sm:$0xff]
    %v337 = vld [vmem:[#allocation2 + $0x20] sm:$0xff]
    %v338 = vld [vmem:[#allocation2 + $0x28] sm:$0xff]
    %v339 = vld [vmem:[#allocation2 + $0x30] sm:$0xff]
    %v340 = vld [vmem:[#allocation2 + $0x38] sm:$0xff]
    %v341 = vld [vmem:[#allocation2 + $0x40] sm:$0xff]
    %v342 = vld [vmem:[#allocation2 + $0x48] sm:$0xff]
    %v343 = vld [vmem:[#allocation2 + $0x50] sm:$0xff]
    %v344 = vld [vmem:[#allocation2 + $0x58] sm:$0xff]
    %v345 = vld [vmem:[#allocation2 + $0x60] sm:$0xff]
    %v346 = vld [vmem:[#allocation2 + $0x68] sm:$0xff]
    %v347 = vld [vmem:[#allocation2 + $0x70] sm:$0xff]
    %v348 = vld [vmem:[#allocation2 + $0x78] sm:$0xff]
    %v349 = vld [vmem:[#allocation2 + $0x80] sm:$0xff]
    %v350 = vld [vmem:[#allocation2 + $0x88] sm:$0xff]
    %v351 = vld [vmem:[#allocation2 + $0x90] sm:$0xff]
    %v352 = vld [vmem:[#allocation2 + $0x98] sm:$0xff]
    %v353 = vld [vmem:[#allocation2 + $0xa0] sm:$0xff]
    %v354 = vld [vmem:[#allocation2 + $0xa8] sm:$0xff]
    %v355 = vld [vmem:[#allocation2 + $0xb0] sm:$0xff]
    %v356 = vld [vmem:[#allocation2 + $0xb8] sm:$0xff]
    %v357 = vld [vmem:[#allocation2 + $0xc0] sm:$0xff]
    %v358 = vld [vmem:[#allocation2 + $0xc8] sm:$0xff]
    %v359 = vld [vmem:[#allocation2 + $0xd0] sm:$0xff]
    %v360 = vld [vmem:[#allocation2 + $0xd8] sm:$0xff]
    %v361 = vld [vmem:[#allocation2 + $0xe0] sm:$0xff]
    %v362 = vld [vmem:[#allocation2 + $0xe8] sm:$0xff]
    %v363 = vld [vmem:[#allocation2 + $0xf0] sm:$0xff]
    %v364 = vld [vmem:[#allocation2 + $0xf8] sm:$0xff]
    %v365 = vpack.c.bf16 %v334, %v333
    %v366 = vpack.c.bf16 %v336, %v335
    %v367 = vpack.c.bf16 %v338, %v337
    %v368 = vpack.c.bf16 %v340, %v339
    %v369 = vpack.c.bf16 %v342, %v341
    %v370 = vpack.c.bf16 %v344, %v343
    %v371 = vpack.c.bf16 %v346, %v345
    %v372 = vpack.c.bf16 %v348, %v347
    %v373 = vpack.c.bf16 %v350, %v349
    %v374 = vpack.c.bf16 %v352, %v351
    %v375 = vpack.c.bf16 %v354, %v353
    %v376 = vpack.c.bf16 %v356, %v355
    %v377 = vpack.c.bf16 %v358, %v357
    %v378 = vpack.c.bf16 %v360, %v359
    %v379 = vpack.c.bf16 %v362, %v361
    %v380 = vpack.c.bf16 %v364, %v363
    %v381 = vld [vmem:[#allocation4] sm:$0xff]
    %v382 = vld [vmem:[#allocation4 + $0x8] sm:$0xff]
    %v383 = vld [vmem:[#allocation4 + $0x10] sm:$0xff]
    %v384 = vld [vmem:[#allocation4 + $0x18] sm:$0xff]
    %v385 = vld [vmem:[#allocation4 + $0x20] sm:$0xff]
    %v386 = vld [vmem:[#allocation4 + $0x28] sm:$0xff]
    %v387 = vld [vmem:[#allocation4 + $0x30] sm:$0xff]
    %v388 = vld [vmem:[#allocation4 + $0x38] sm:$0xff]
    %v389 = vld [vmem:[#allocation4 + $0x40] sm:$0xff]
    %v390 = vld [vmem:[#allocation4 + $0x48] sm:$0xff]
    %v391 = vld [vmem:[#allocation4 + $0x50] sm:$0xff]
    %v392 = vld [vmem:[#allocation4 + $0x58] sm:$0xff]
    %v393 = vld [vmem:[#allocation4 + $0x60] sm:$0xff]
    %v394 = vld [vmem:[#allocation4 + $0x68] sm:$0xff]
    %v395 = vld [vmem:[#allocation4 + $0x70] sm:$0xff]
    %v396 = vld [vmem:[#allocation4 + $0x78] sm:$0xff]
    %v397 = vld [vmem:[#allocation4 + $0x80] sm:$0xff]
    %v398 = vld [vmem:[#allocation4 + $0x88] sm:$0xff]
    %v399 = vld [vmem:[#allocation4 + $0x90] sm:$0xff]
    %v400 = vld [vmem:[#allocation4 + $0x98] sm:$0xff]
    %v401 = vld [vmem:[#allocation4 + $0xa0] sm:$0xff]
    %v402 = vld [vmem:[#allocation4 + $0xa8] sm:$0xff]
    %v403 = vld [vmem:[#allocation4 + $0xb0] sm:$0xff]
    %v404 = vld [vmem:[#allocation4 + $0xb8] sm:$0xff]
    %v405 = vld [vmem:[#allocation4 + $0xc0] sm:$0xff]
    %v406 = vld [vmem:[#allocation4 + $0xc8] sm:$0xff]
    %v407 = vld [vmem:[#allocation4 + $0xd0] sm:$0xff]
    %v408 = vld [vmem:[#allocation4 + $0xd8] sm:$0xff]
    %v409 = vld [vmem:[#allocation4 + $0xe0] sm:$0xff]
    %v410 = vld [vmem:[#allocation4 + $0xe8] sm:$0xff]
    %v411 = vld [vmem:[#allocation4 + $0xf0] sm:$0xff]
    %v412 = vld [vmem:[#allocation4 + $0xf8] sm:$0xff]
    %v413 = vpack.c.bf16 %v382, %v381
    %v414 = vpack.c.bf16 %v384, %v383
    %v415 = vpack.c.bf16 %v386, %v385
    %v416 = vpack.c.bf16 %v388, %v387
    %v417 = vpack.c.bf16 %v390, %v389
    %v418 = vpack.c.bf16 %v392, %v391
    %v419 = vpack.c.bf16 %v394, %v393
    %v420 = vpack.c.bf16 %v396, %v395
    %v421 = vpack.c.bf16 %v398, %v397
    %v422 = vpack.c.bf16 %v400, %v399
    %v423 = vpack.c.bf16 %v402, %v401
    %v424 = vpack.c.bf16 %v404, %v403
    %v425 = vpack.c.bf16 %v406, %v405
    %v426 = vpack.c.bf16 %v408, %v407
    %v427 = vpack.c.bf16 %v410, %v409
    %v428 = vpack.c.bf16 %v412, %v411
    %v445 = vunpack.c.l.b16 %v365
    %v446 = vunpack.c.h.b16 %v365
    %v447 = vunpack.c.l.b16 %v366
    %v448 = vunpack.c.h.b16 %v366
    %v449 = vunpack.c.l.b16 %v367
    %v450 = vunpack.c.h.b16 %v367
    %v451 = vunpack.c.l.b16 %v368
    %v452 = vunpack.c.h.b16 %v368
    %v453 = vunpack.c.l.b16 %v369
    %v454 = vunpack.c.h.b16 %v369
    %v455 = vunpack.c.l.b16 %v370
    %v456 = vunpack.c.h.b16 %v370
    %v457 = vunpack.c.l.b16 %v371
    %v458 = vunpack.c.h.b16 %v371
    %v459 = vunpack.c.l.b16 %v372
    %v460 = vunpack.c.h.b16 %v372
    %v461 = vunpack.c.l.b16 %v373
    %v462 = vunpack.c.h.b16 %v373
    %v463 = vunpack.c.l.b16 %v374
    %v464 = vunpack.c.h.b16 %v374
    %v465 = vunpack.c.l.b16 %v375
    %v466 = vunpack.c.h.b16 %v375
    %v467 = vunpack.c.l.b16 %v376
    %v468 = vunpack.c.h.b16 %v376
    %v469 = vunpack.c.l.b16 %v377
    %v470 = vunpack.c.h.b16 %v377
    %v471 = vunpack.c.l.b16 %v378
    %v472 = vunpack.c.h.b16 %v378
    %v473 = vunpack.c.l.b16 %v379
    %v474 = vunpack.c.h.b16 %v379
    %v475 = vunpack.c.l.b16 %v380
    %v476 = vunpack.c.h.b16 %v380
    %v477 = vpack.c.b16 %v461, %v445
    %v478 = vpack.c.b16 %v462, %v446
    %v479 = vpack.c.b16 %v463, %v447
    %v480 = vpack.c.b16 %v464, %v448
    %v481 = vpack.c.b16 %v465, %v449
    %v482 = vpack.c.b16 %v466, %v450
    %v483 = vpack.c.b16 %v467, %v451
    %v484 = vpack.c.b16 %v468, %v452
    %v485 = vpack.c.b16 %v469, %v453
    %v486 = vpack.c.b16 %v470, %v454
    %v487 = vpack.c.b16 %v471, %v455
    %v488 = vpack.c.b16 %v472, %v456
    %v489 = vpack.c.b16 %v473, %v457
    %v490 = vpack.c.b16 %v474, %v458
    %v491 = vpack.c.b16 %v475, %v459
    %v492 = vpack.c.b16 %v476, %v460
    %v525 = vunpack.c.l.b16 %v413
    %v526 = vunpack.c.h.b16 %v413
    %v527 = vunpack.c.l.b16 %v414
    %v528 = vunpack.c.h.b16 %v414
    %v529 = vunpack.c.l.b16 %v415
    %v530 = vunpack.c.h.b16 %v415
    %v531 = vunpack.c.l.b16 %v416
    %v532 = vunpack.c.h.b16 %v416
    %v533 = vunpack.c.l.b16 %v417
    %v534 = vunpack.c.h.b16 %v417
    %v535 = vunpack.c.l.b16 %v418
    %v536 = vunpack.c.h.b16 %v418
    %v537 = vunpack.c.l.b16 %v419
    %v538 = vunpack.c.h.b16 %v419
    %v539 = vunpack.c.l.b16 %v420
    %v540 = vunpack.c.h.b16 %v420
    %v541 = vunpack.c.l.b16 %v421
    %v542 = vunpack.c.h.b16 %v421
    %v543 = vunpack.c.l.b16 %v422
    %v544 = vunpack.c.h.b16 %v422
    %v545 = vunpack.c.l.b16 %v423
    %v546 = vunpack.c.h.b16 %v423
    %v547 = vunpack.c.l.b16 %v424
    %v548 = vunpack.c.h.b16 %v424
    %v549 = vunpack.c.l.b16 %v425
    %v550 = vunpack.c.h.b16 %v425
    %v551 = vunpack.c.l.b16 %v426
    %v552 = vunpack.c.h.b16 %v426
    %v553 = vunpack.c.l.b16 %v427
    %v554 = vunpack.c.h.b16 %v427
    %v555 = vunpack.c.l.b16 %v428
    %v556 = vunpack.c.h.b16 %v428
    %v557 = vpack.c.b16 %v541, %v525
    %v558 = vpack.c.b16 %v542, %v526
    %v559 = vpack.c.b16 %v543, %v527
    %v560 = vpack.c.b16 %v544, %v528
    %v561 = vpack.c.b16 %v545, %v529
    %v562 = vpack.c.b16 %v546, %v530
    %v563 = vpack.c.b16 %v547, %v531
    %v564 = vpack.c.b16 %v548, %v532
    %v565 = vpack.c.b16 %v549, %v533
    %v566 = vpack.c.b16 %v550, %v534
    %v567 = vpack.c.b16 %v551, %v535
    %v568 = vpack.c.b16 %v552, %v536
    %v569 = vpack.c.b16 %v553, %v537
    %v570 = vpack.c.b16 %v554, %v538
    %v571 = vpack.c.b16 %v555, %v539
    %v572 = vpack.c.b16 %v556, %v540
    %v589 = vld [vmem:[#allocation10] sm:$0xff]
    %v590 = vld [vmem:[#allocation10 + $0x8] sm:$0xff]
    %v591 = vld [vmem:[#allocation10 + $0x10] sm:$0xff]
    %v592 = vld [vmem:[#allocation10 + $0x18] sm:$0xff]
    %v593 = vld [vmem:[#allocation10 + $0x20] sm:$0xff]
    %v594 = vld [vmem:[#allocation10 + $0x28] sm:$0xff]
    %v595 = vld [vmem:[#allocation10 + $0x30] sm:$0xff]
    %v596 = vld [vmem:[#allocation10 + $0x38] sm:$0xff]
    %v597 = vld [vmem:[#allocation10 + $0x40] sm:$0xff]
    %v598 = vld [vmem:[#allocation10 + $0x48] sm:$0xff]
    %v599 = vld [vmem:[#allocation10 + $0x50] sm:$0xff]
    %v600 = vld [vmem:[#allocation10 + $0x58] sm:$0xff]
    %v601 = vld [vmem:[#allocation10 + $0x60] sm:$0xff]
    %v602 = vld [vmem:[#allocation10 + $0x68] sm:$0xff]
    %v603 = vld [vmem:[#allocation10 + $0x70] sm:$0xff]
    %v604 = vld [vmem:[#allocation10 + $0x78] sm:$0xff]
    %v605 = vld [vmem:[#allocation10 + $0x80] sm:$0xff]
    %v606 = vld [vmem:[#allocation10 + $0x88] sm:$0xff]
    %v607 = vld [vmem:[#allocation10 + $0x90] sm:$0xff]
    %v608 = vld [vmem:[#allocation10 + $0x98] sm:$0xff]
    %v609 = vld [vmem:[#allocation10 + $0xa0] sm:$0xff]
    %v610 = vld [vmem:[#allocation10 + $0xa8] sm:$0xff]
    %v611 = vld [vmem:[#allocation10 + $0xb0] sm:$0xff]
    %v612 = vld [vmem:[#allocation10 + $0xb8] sm:$0xff]
    %v613 = vld [vmem:[#allocation10 + $0xc0] sm:$0xff]
    %v614 = vld [vmem:[#allocation10 + $0xc8] sm:$0xff]
    %v615 = vld [vmem:[#allocation10 + $0xd0] sm:$0xff]
    %v616 = vld [vmem:[#allocation10 + $0xd8] sm:$0xff]
    %v617 = vld [vmem:[#allocation10 + $0xe0] sm:$0xff]
    %v618 = vld [vmem:[#allocation10 + $0xe8] sm:$0xff]
    %v619 = vld [vmem:[#allocation10 + $0xf0] sm:$0xff]
    %v620 = vld [vmem:[#allocation10 + $0xf8] sm:$0xff]
    %v621 = vld [vmem:[#allocation10 + $0x100] sm:$0xff]
    %v622 = vld [vmem:[#allocation10 + $0x108] sm:$0xff]
    %v623 = vld [vmem:[#allocation10 + $0x110] sm:$0xff]
    %v624 = vld [vmem:[#allocation10 + $0x118] sm:$0xff]
    %v625 = vld [vmem:[#allocation10 + $0x120] sm:$0xff]
    %v626 = vld [vmem:[#allocation10 + $0x128] sm:$0xff]
    %v627 = vld [vmem:[#allocation10 + $0x130] sm:$0xff]
    %v628 = vld [vmem:[#allocation10 + $0x138] sm:$0xff]
    %v629 = vld [vmem:[#allocation10 + $0x140] sm:$0xff]
    %v630 = vld [vmem:[#allocation10 + $0x148] sm:$0xff]
    %v631 = vld [vmem:[#allocation10 + $0x150] sm:$0xff]
    %v632 = vld [vmem:[#allocation10 + $0x158] sm:$0xff]
    %v633 = vld [vmem:[#allocation10 + $0x160] sm:$0xff]
    %v634 = vld [vmem:[#allocation10 + $0x168] sm:$0xff]
    %v635 = vld [vmem:[#allocation10 + $0x170] sm:$0xff]
    %v636 = vld [vmem:[#allocation10 + $0x178] sm:$0xff]
    %v637 = vld [vmem:[#allocation10 + $0x180] sm:$0xff]
    %v638 = vld [vmem:[#allocation10 + $0x188] sm:$0xff]
    %v639 = vld [vmem:[#allocation10 + $0x190] sm:$0xff]
    %v640 = vld [vmem:[#allocation10 + $0x198] sm:$0xff]
    %v641 = vld [vmem:[#allocation10 + $0x1a0] sm:$0xff]
    %v642 = vld [vmem:[#allocation10 + $0x1a8] sm:$0xff]
    %v643 = vld [vmem:[#allocation10 + $0x1b0] sm:$0xff]
    %v644 = vld [vmem:[#allocation10 + $0x1b8] sm:$0xff]
    %v645 = vld [vmem:[#allocation10 + $0x1c0] sm:$0xff]
    %v646 = vld [vmem:[#allocation10 + $0x1c8] sm:$0xff]
    %v647 = vld [vmem:[#allocation10 + $0x1d0] sm:$0xff]
    %v648 = vld [vmem:[#allocation10 + $0x1d8] sm:$0xff]
    %v649 = vld [vmem:[#allocation10 + $0x1e0] sm:$0xff]
    %v650 = vld [vmem:[#allocation10 + $0x1e8] sm:$0xff]
    %v651 = vld [vmem:[#allocation10 + $0x1f0] sm:$0xff]
    %v652 = vld [vmem:[#allocation10 + $0x1f8] sm:$0xff]
    %v653 = vld [vmem:[#allocation10 + $0x200] sm:$0xff]
    %v654 = vld [vmem:[#allocation10 + $0x208] sm:$0xff]
    %v655 = vld [vmem:[#allocation10 + $0x210] sm:$0xff]
    %v656 = vld [vmem:[#allocation10 + $0x218] sm:$0xff]
    %v657 = vld [vmem:[#allocation10 + $0x220] sm:$0xff]
    %v658 = vld [vmem:[#allocation10 + $0x228] sm:$0xff]
    %v659 = vld [vmem:[#allocation10 + $0x230] sm:$0xff]
    %v660 = vld [vmem:[#allocation10 + $0x238] sm:$0xff]
    %v661 = vld [vmem:[#allocation10 + $0x240] sm:$0xff]
    %v662 = vld [vmem:[#allocation10 + $0x248] sm:$0xff]
    %v663 = vld [vmem:[#allocation10 + $0x250] sm:$0xff]
    %v664 = vld [vmem:[#allocation10 + $0x258] sm:$0xff]
    %v665 = vld [vmem:[#allocation10 + $0x260] sm:$0xff]
    %v666 = vld [vmem:[#allocation10 + $0x268] sm:$0xff]
    %v667 = vld [vmem:[#allocation10 + $0x270] sm:$0xff]
    %v668 = vld [vmem:[#allocation10 + $0x278] sm:$0xff]
    %v669 = vld [vmem:[#allocation10 + $0x280] sm:$0xff]
    %v670 = vld [vmem:[#allocation10 + $0x288] sm:$0xff]
    %v671 = vld [vmem:[#allocation10 + $0x290] sm:$0xff]
    %v672 = vld [vmem:[#allocation10 + $0x298] sm:$0xff]
    %v673 = vld [vmem:[#allocation10 + $0x2a0] sm:$0xff]
    %v674 = vld [vmem:[#allocation10 + $0x2a8] sm:$0xff]
    %v675 = vld [vmem:[#allocation10 + $0x2b0] sm:$0xff]
    %v676 = vld [vmem:[#allocation10 + $0x2b8] sm:$0xff]
    %v677 = vld [vmem:[#allocation10 + $0x2c0] sm:$0xff]
    %v678 = vld [vmem:[#allocation10 + $0x2c8] sm:$0xff]
    %v679 = vld [vmem:[#allocation10 + $0x2d0] sm:$0xff]
    %v680 = vld [vmem:[#allocation10 + $0x2d8] sm:$0xff]
    %v681 = vld [vmem:[#allocation10 + $0x2e0] sm:$0xff]
    %v682 = vld [vmem:[#allocation10 + $0x2e8] sm:$0xff]
    %v683 = vld [vmem:[#allocation10 + $0x2f0] sm:$0xff]
    %v684 = vld [vmem:[#allocation10 + $0x2f8] sm:$0xff]
    %v685 = vld [vmem:[#allocation10 + $0x300] sm:$0xff]
    %v686 = vld [vmem:[#allocation10 + $0x308] sm:$0xff]
    %v687 = vld [vmem:[#allocation10 + $0x310] sm:$0xff]
    %v688 = vld [vmem:[#allocation10 + $0x318] sm:$0xff]
    %v689 = vld [vmem:[#allocation10 + $0x320] sm:$0xff]
    %v690 = vld [vmem:[#allocation10 + $0x328] sm:$0xff]
    %v691 = vld [vmem:[#allocation10 + $0x330] sm:$0xff]
    %v692 = vld [vmem:[#allocation10 + $0x338] sm:$0xff]
    %v693 = vld [vmem:[#allocation10 + $0x340] sm:$0xff]
    %v694 = vld [vmem:[#allocation10 + $0x348] sm:$0xff]
    %v695 = vld [vmem:[#allocation10 + $0x350] sm:$0xff]
    %v696 = vld [vmem:[#allocation10 + $0x358] sm:$0xff]
    %v697 = vld [vmem:[#allocation10 + $0x360] sm:$0xff]
    %v698 = vld [vmem:[#allocation10 + $0x368] sm:$0xff]
    %v699 = vld [vmem:[#allocation10 + $0x370] sm:$0xff]
    %v700 = vld [vmem:[#allocation10 + $0x378] sm:$0xff]
    %v701 = vld [vmem:[#allocation10 + $0x380] sm:$0xff]
    %v702 = vld [vmem:[#allocation10 + $0x388] sm:$0xff]
    %v703 = vld [vmem:[#allocation10 + $0x390] sm:$0xff]
    %v704 = vld [vmem:[#allocation10 + $0x398] sm:$0xff]
    %v705 = vld [vmem:[#allocation10 + $0x3a0] sm:$0xff]
    %v706 = vld [vmem:[#allocation10 + $0x3a8] sm:$0xff]
    %v707 = vld [vmem:[#allocation10 + $0x3b0] sm:$0xff]
    %v708 = vld [vmem:[#allocation10 + $0x3b8] sm:$0xff]
    %v709 = vld [vmem:[#allocation10 + $0x3c0] sm:$0xff]
    %v710 = vld [vmem:[#allocation10 + $0x3c8] sm:$0xff]
    %v711 = vld [vmem:[#allocation10 + $0x3d0] sm:$0xff]
    %v712 = vld [vmem:[#allocation10 + $0x3d8] sm:$0xff]
    %v713 = vld [vmem:[#allocation10 + $0x3e0] sm:$0xff]
    %v714 = vld [vmem:[#allocation10 + $0x3e8] sm:$0xff]
    %v715 = vld [vmem:[#allocation10 + $0x3f0] sm:$0xff]
    %v716 = vld [vmem:[#allocation10 + $0x3f8] sm:$0xff]
    %v717 = vld [vmem:[#allocation10 + $0x400] sm:$0xff]
    %v718 = vld [vmem:[#allocation10 + $0x408] sm:$0xff]
    %v719 = vld [vmem:[#allocation10 + $0x410] sm:$0xff]
    %v720 = vld [vmem:[#allocation10 + $0x418] sm:$0xff]
    %v721 = vld [vmem:[#allocation10 + $0x420] sm:$0xff]
    %v722 = vld [vmem:[#allocation10 + $0x428] sm:$0xff]
    %v723 = vld [vmem:[#allocation10 + $0x430] sm:$0xff]
    %v724 = vld [vmem:[#allocation10 + $0x438] sm:$0xff]
    %v725 = vld [vmem:[#allocation10 + $0x440] sm:$0xff]
    %v726 = vld [vmem:[#allocation10 + $0x448] sm:$0xff]
    %v727 = vld [vmem:[#allocation10 + $0x450] sm:$0xff]
    %v728 = vld [vmem:[#allocation10 + $0x458] sm:$0xff]
    %v729 = vld [vmem:[#allocation10 + $0x460] sm:$0xff]
    %v730 = vld [vmem:[#allocation10 + $0x468] sm:$0xff]
    %v731 = vld [vmem:[#allocation10 + $0x470] sm:$0xff]
    %v732 = vld [vmem:[#allocation10 + $0x478] sm:$0xff]
    %v733 = vld [vmem:[#allocation10 + $0x480] sm:$0xff]
    %v734 = vld [vmem:[#allocation10 + $0x488] sm:$0xff]
    %v735 = vld [vmem:[#allocation10 + $0x490] sm:$0xff]
    %v736 = vld [vmem:[#allocation10 + $0x498] sm:$0xff]
    %v737 = vld [vmem:[#allocation10 + $0x4a0] sm:$0xff]
    %v738 = vld [vmem:[#allocation10 + $0x4a8] sm:$0xff]
    %v739 = vld [vmem:[#allocation10 + $0x4b0] sm:$0xff]
    %v740 = vld [vmem:[#allocation10 + $0x4b8] sm:$0xff]
    %v741 = vld [vmem:[#allocation10 + $0x4c0] sm:$0xff]
    %v742 = vld [vmem:[#allocation10 + $0x4c8] sm:$0xff]
    %v743 = vld [vmem:[#allocation10 + $0x4d0] sm:$0xff]
    %v744 = vld [vmem:[#allocation10 + $0x4d8] sm:$0xff]
    %v745 = vld [vmem:[#allocation10 + $0x4e0] sm:$0xff]
    %v746 = vld [vmem:[#allocation10 + $0x4e8] sm:$0xff]
    %v747 = vld [vmem:[#allocation10 + $0x4f0] sm:$0xff]
    %v748 = vld [vmem:[#allocation10 + $0x4f8] sm:$0xff]
    %v749 = vld [vmem:[#allocation10 + $0x500] sm:$0xff]
    %v750 = vld [vmem:[#allocation10 + $0x508] sm:$0xff]
    %v751 = vld [vmem:[#allocation10 + $0x510] sm:$0xff]
    %v752 = vld [vmem:[#allocation10 + $0x518] sm:$0xff]
    %v753 = vld [vmem:[#allocation10 + $0x520] sm:$0xff]
    %v754 = vld [vmem:[#allocation10 + $0x528] sm:$0xff]
    %v755 = vld [vmem:[#allocation10 + $0x530] sm:$0xff]
    %v756 = vld [vmem:[#allocation10 + $0x538] sm:$0xff]
    %v757 = vld [vmem:[#allocation10 + $0x540] sm:$0xff]
    %v758 = vld [vmem:[#allocation10 + $0x548] sm:$0xff]
    %v759 = vld [vmem:[#allocation10 + $0x550] sm:$0xff]
    %v760 = vld [vmem:[#allocation10 + $0x558] sm:$0xff]
    %v761 = vld [vmem:[#allocation10 + $0x560] sm:$0xff]
    %v762 = vld [vmem:[#allocation10 + $0x568] sm:$0xff]
    %v763 = vld [vmem:[#allocation10 + $0x570] sm:$0xff]
    %v764 = vld [vmem:[#allocation10 + $0x578] sm:$0xff]
    %v765 = vld [vmem:[#allocation10 + $0x580] sm:$0xff]
    %v766 = vld [vmem:[#allocation10 + $0x588] sm:$0xff]
    %v767 = vld [vmem:[#allocation10 + $0x590] sm:$0xff]
    %v768 = vld [vmem:[#allocation10 + $0x598] sm:$0xff]
    %v769 = vld [vmem:[#allocation10 + $0x5a0] sm:$0xff]
    %v770 = vld [vmem:[#allocation10 + $0x5a8] sm:$0xff]
    %v771 = vld [vmem:[#allocation10 + $0x5b0] sm:$0xff]
    %v772 = vld [vmem:[#allocation10 + $0x5b8] sm:$0xff]
    %v773 = vld [vmem:[#allocation10 + $0x5c0] sm:$0xff]
    %v774 = vld [vmem:[#allocation10 + $0x5c8] sm:$0xff]
    %v775 = vld [vmem:[#allocation10 + $0x5d0] sm:$0xff]
    %v776 = vld [vmem:[#allocation10 + $0x5d8] sm:$0xff]
    %v777 = vld [vmem:[#allocation10 + $0x5e0] sm:$0xff]
    %v778 = vld [vmem:[#allocation10 + $0x5e8] sm:$0xff]
    %v779 = vld [vmem:[#allocation10 + $0x5f0] sm:$0xff]
    %v780 = vld [vmem:[#allocation10 + $0x5f8] sm:$0xff]
    %v781 = vld [vmem:[#allocation10 + $0x600] sm:$0xff]
    %v782 = vld [vmem:[#allocation10 + $0x608] sm:$0xff]
    %v783 = vld [vmem:[#allocation10 + $0x610] sm:$0xff]
    %v784 = vld [vmem:[#allocation10 + $0x618] sm:$0xff]
    %v785 = vld [vmem:[#allocation10 + $0x620] sm:$0xff]
    %v786 = vld [vmem:[#allocation10 + $0x628] sm:$0xff]
    %v787 = vld [vmem:[#allocation10 + $0x630] sm:$0xff]
    %v788 = vld [vmem:[#allocation10 + $0x638] sm:$0xff]
    %v789 = vld [vmem:[#allocation10 + $0x640] sm:$0xff]
    %v790 = vld [vmem:[#allocation10 + $0x648] sm:$0xff]
    %v791 = vld [vmem:[#allocation10 + $0x650] sm:$0xff]
    %v792 = vld [vmem:[#allocation10 + $0x658] sm:$0xff]
    %v793 = vld [vmem:[#allocation10 + $0x660] sm:$0xff]
    %v794 = vld [vmem:[#allocation10 + $0x668] sm:$0xff]
    %v795 = vld [vmem:[#allocation10 + $0x670] sm:$0xff]
    %v796 = vld [vmem:[#allocation10 + $0x678] sm:$0xff]
    %v797 = vld [vmem:[#allocation10 + $0x680] sm:$0xff]
    %v798 = vld [vmem:[#allocation10 + $0x688] sm:$0xff]
    %v799 = vld [vmem:[#allocation10 + $0x690] sm:$0xff]
    %v800 = vld [vmem:[#allocation10 + $0x698] sm:$0xff]
    %v801 = vld [vmem:[#allocation10 + $0x6a0] sm:$0xff]
    %v802 = vld [vmem:[#allocation10 + $0x6a8] sm:$0xff]
    %v803 = vld [vmem:[#allocation10 + $0x6b0] sm:$0xff]
    %v804 = vld [vmem:[#allocation10 + $0x6b8] sm:$0xff]
    %v805 = vld [vmem:[#allocation10 + $0x6c0] sm:$0xff]
    %v806 = vld [vmem:[#allocation10 + $0x6c8] sm:$0xff]
    %v807 = vld [vmem:[#allocation10 + $0x6d0] sm:$0xff]
    %v808 = vld [vmem:[#allocation10 + $0x6d8] sm:$0xff]
    %v809 = vld [vmem:[#allocation10 + $0x6e0] sm:$0xff]
    %v810 = vld [vmem:[#allocation10 + $0x6e8] sm:$0xff]
    %v811 = vld [vmem:[#allocation10 + $0x6f0] sm:$0xff]
    %v812 = vld [vmem:[#allocation10 + $0x6f8] sm:$0xff]
    %v813 = vld [vmem:[#allocation10 + $0x700] sm:$0xff]
    %v814 = vld [vmem:[#allocation10 + $0x708] sm:$0xff]
    %v815 = vld [vmem:[#allocation10 + $0x710] sm:$0xff]
    %v816 = vld [vmem:[#allocation10 + $0x718] sm:$0xff]
    %v817 = vld [vmem:[#allocation10 + $0x720] sm:$0xff]
    %v818 = vld [vmem:[#allocation10 + $0x728] sm:$0xff]
    %v819 = vld [vmem:[#allocation10 + $0x730] sm:$0xff]
    %v820 = vld [vmem:[#allocation10 + $0x738] sm:$0xff]
    %v821 = vld [vmem:[#allocation10 + $0x740] sm:$0xff]
    %v822 = vld [vmem:[#allocation10 + $0x748] sm:$0xff]
    %v823 = vld [vmem:[#allocation10 + $0x750] sm:$0xff]
    %v824 = vld [vmem:[#allocation10 + $0x758] sm:$0xff]
    %v825 = vld [vmem:[#allocation10 + $0x760] sm:$0xff]
    %v826 = vld [vmem:[#allocation10 + $0x768] sm:$0xff]
    %v827 = vld [vmem:[#allocation10 + $0x770] sm:$0xff]
    %v828 = vld [vmem:[#allocation10 + $0x778] sm:$0xff]
    %v829 = vld [vmem:[#allocation10 + $0x780] sm:$0xff]
    %v830 = vld [vmem:[#allocation10 + $0x788] sm:$0xff]
    %v831 = vld [vmem:[#allocation10 + $0x790] sm:$0xff]
    %v832 = vld [vmem:[#allocation10 + $0x798] sm:$0xff]
    %v833 = vld [vmem:[#allocation10 + $0x7a0] sm:$0xff]
    %v834 = vld [vmem:[#allocation10 + $0x7a8] sm:$0xff]
    %v835 = vld [vmem:[#allocation10 + $0x7b0] sm:$0xff]
    %v836 = vld [vmem:[#allocation10 + $0x7b8] sm:$0xff]
    %v837 = vld [vmem:[#allocation10 + $0x7c0] sm:$0xff]
    %v838 = vld [vmem:[#allocation10 + $0x7c8] sm:$0xff]
    %v839 = vld [vmem:[#allocation10 + $0x7d0] sm:$0xff]
    %v840 = vld [vmem:[#allocation10 + $0x7d8] sm:$0xff]
    %v841 = vld [vmem:[#allocation10 + $0x7e0] sm:$0xff]
    %v842 = vld [vmem:[#allocation10 + $0x7e8] sm:$0xff]
    %v843 = vld [vmem:[#allocation10 + $0x7f0] sm:$0xff]
    %v844 = vld [vmem:[#allocation10 + $0x7f8] sm:$0xff]
    %v845 = vld [vmem:[#allocation10 + $0x800] sm:$0xff]
    %v846 = vld [vmem:[#allocation10 + $0x808] sm:$0xff]
    %v847 = vld [vmem:[#allocation10 + $0x810] sm:$0xff]
    %v848 = vld [vmem:[#allocation10 + $0x818] sm:$0xff]
    %v849 = vld [vmem:[#allocation10 + $0x820] sm:$0xff]
    %v850 = vld [vmem:[#allocation10 + $0x828] sm:$0xff]
    %v851 = vld [vmem:[#allocation10 + $0x830] sm:$0xff]
    %v852 = vld [vmem:[#allocation10 + $0x838] sm:$0xff]
    %v853 = vld [vmem:[#allocation10 + $0x840] sm:$0xff]
    %v854 = vld [vmem:[#allocation10 + $0x848] sm:$0xff]
    %v855 = vld [vmem:[#allocation10 + $0x850] sm:$0xff]
    %v856 = vld [vmem:[#allocation10 + $0x858] sm:$0xff]
    %v857 = vld [vmem:[#allocation10 + $0x860] sm:$0xff]
    %v858 = vld [vmem:[#allocation10 + $0x868] sm:$0xff]
    %v859 = vld [vmem:[#allocation10 + $0x870] sm:$0xff]
    %v860 = vld [vmem:[#allocation10 + $0x878] sm:$0xff]
    %v861 = vld [vmem:[#allocation10 + $0x880] sm:$0xff]
    %v862 = vld [vmem:[#allocation10 + $0x888] sm:$0xff]
    %v863 = vld [vmem:[#allocation10 + $0x890] sm:$0xff]
    %v864 = vld [vmem:[#allocation10 + $0x898] sm:$0xff]
    %v865 = vld [vmem:[#allocation10 + $0x8a0] sm:$0xff]
    %v866 = vld [vmem:[#allocation10 + $0x8a8] sm:$0xff]
    %v867 = vld [vmem:[#allocation10 + $0x8b0] sm:$0xff]
    %v868 = vld [vmem:[#allocation10 + $0x8b8] sm:$0xff]
    %v869 = vld [vmem:[#allocation10 + $0x8c0] sm:$0xff]
    %v870 = vld [vmem:[#allocation10 + $0x8c8] sm:$0xff]
    %v871 = vld [vmem:[#allocation10 + $0x8d0] sm:$0xff]
    %v872 = vld [vmem:[#allocation10 + $0x8d8] sm:$0xff]
    %v873 = vld [vmem:[#allocation10 + $0x8e0] sm:$0xff]
    %v874 = vld [vmem:[#allocation10 + $0x8e8] sm:$0xff]
    %v875 = vld [vmem:[#allocation10 + $0x8f0] sm:$0xff]
    %v876 = vld [vmem:[#allocation10 + $0x8f8] sm:$0xff]
    %v877 = vld [vmem:[#allocation10 + $0x900] sm:$0xff]
    %v878 = vld [vmem:[#allocation10 + $0x908] sm:$0xff]
    %v879 = vld [vmem:[#allocation10 + $0x910] sm:$0xff]
    %v880 = vld [vmem:[#allocation10 + $0x918] sm:$0xff]
    %v881 = vld [vmem:[#allocation10 + $0x920] sm:$0xff]
    %v882 = vld [vmem:[#allocation10 + $0x928] sm:$0xff]
    %v883 = vld [vmem:[#allocation10 + $0x930] sm:$0xff]
    %v884 = vld [vmem:[#allocation10 + $0x938] sm:$0xff]
    %v885 = vld [vmem:[#allocation10 + $0x940] sm:$0xff]
    %v886 = vld [vmem:[#allocation10 + $0x948] sm:$0xff]
    %v887 = vld [vmem:[#allocation10 + $0x950] sm:$0xff]
    %v888 = vld [vmem:[#allocation10 + $0x958] sm:$0xff]
    %v889 = vld [vmem:[#allocation10 + $0x960] sm:$0xff]
    %v890 = vld [vmem:[#allocation10 + $0x968] sm:$0xff]
    %v891 = vld [vmem:[#allocation10 + $0x970] sm:$0xff]
    %v892 = vld [vmem:[#allocation10 + $0x978] sm:$0xff]
    %v893 = vld [vmem:[#allocation10 + $0x980] sm:$0xff]
    %v894 = vld [vmem:[#allocation10 + $0x988] sm:$0xff]
    %v895 = vld [vmem:[#allocation10 + $0x990] sm:$0xff]
    %v896 = vld [vmem:[#allocation10 + $0x998] sm:$0xff]
    %v897 = vld [vmem:[#allocation10 + $0x9a0] sm:$0xff]
    %v898 = vld [vmem:[#allocation10 + $0x9a8] sm:$0xff]
    %v899 = vld [vmem:[#allocation10 + $0x9b0] sm:$0xff]
    %v900 = vld [vmem:[#allocation10 + $0x9b8] sm:$0xff]
    %v901 = vld [vmem:[#allocation10 + $0x9c0] sm:$0xff]
    %v902 = vld [vmem:[#allocation10 + $0x9c8] sm:$0xff]
    %v903 = vld [vmem:[#allocation10 + $0x9d0] sm:$0xff]
    %v904 = vld [vmem:[#allocation10 + $0x9d8] sm:$0xff]
    %v905 = vld [vmem:[#allocation10 + $0x9e0] sm:$0xff]
    %v906 = vld [vmem:[#allocation10 + $0x9e8] sm:$0xff]
    %v907 = vld [vmem:[#allocation10 + $0x9f0] sm:$0xff]
    %v908 = vld [vmem:[#allocation10 + $0x9f8] sm:$0xff]
    %v909 = vld [vmem:[#allocation10 + $0xa00] sm:$0xff]
    %v910 = vld [vmem:[#allocation10 + $0xa08] sm:$0xff]
    %v911 = vld [vmem:[#allocation10 + $0xa10] sm:$0xff]
    %v912 = vld [vmem:[#allocation10 + $0xa18] sm:$0xff]
    %v913 = vld [vmem:[#allocation10 + $0xa20] sm:$0xff]
    %v914 = vld [vmem:[#allocation10 + $0xa28] sm:$0xff]
    %v915 = vld [vmem:[#allocation10 + $0xa30] sm:$0xff]
    %v916 = vld [vmem:[#allocation10 + $0xa38] sm:$0xff]
    %v917 = vld [vmem:[#allocation10 + $0xa40] sm:$0xff]
    %v918 = vld [vmem:[#allocation10 + $0xa48] sm:$0xff]
    %v919 = vld [vmem:[#allocation10 + $0xa50] sm:$0xff]
    %v920 = vld [vmem:[#allocation10 + $0xa58] sm:$0xff]
    %v921 = vld [vmem:[#allocation10 + $0xa60] sm:$0xff]
    %v922 = vld [vmem:[#allocation10 + $0xa68] sm:$0xff]
    %v923 = vld [vmem:[#allocation10 + $0xa70] sm:$0xff]
    %v924 = vld [vmem:[#allocation10 + $0xa78] sm:$0xff]
    %v925 = vld [vmem:[#allocation10 + $0xa80] sm:$0xff]
    %v926 = vld [vmem:[#allocation10 + $0xa88] sm:$0xff]
    %v927 = vld [vmem:[#allocation10 + $0xa90] sm:$0xff]
    %v928 = vld [vmem:[#allocation10 + $0xa98] sm:$0xff]
    %v929 = vld [vmem:[#allocation10 + $0xaa0] sm:$0xff]
    %v930 = vld [vmem:[#allocation10 + $0xaa8] sm:$0xff]
    %v931 = vld [vmem:[#allocation10 + $0xab0] sm:$0xff]
    %v932 = vld [vmem:[#allocation10 + $0xab8] sm:$0xff]
    %v933 = vld [vmem:[#allocation10 + $0xac0] sm:$0xff]
    %v934 = vld [vmem:[#allocation10 + $0xac8] sm:$0xff]
    %v935 = vld [vmem:[#allocation10 + $0xad0] sm:$0xff]
    %v936 = vld [vmem:[#allocation10 + $0xad8] sm:$0xff]
    %v937 = vld [vmem:[#allocation10 + $0xae0] sm:$0xff]
    %v938 = vld [vmem:[#allocation10 + $0xae8] sm:$0xff]
    %v939 = vld [vmem:[#allocation10 + $0xaf0] sm:$0xff]
    %v940 = vld [vmem:[#allocation10 + $0xaf8] sm:$0xff]
    %v941 = vld [vmem:[#allocation10 + $0xb00] sm:$0xff]
    %v942 = vld [vmem:[#allocation10 + $0xb08] sm:$0xff]
    %v943 = vld [vmem:[#allocation10 + $0xb10] sm:$0xff]
    %v944 = vld [vmem:[#allocation10 + $0xb18] sm:$0xff]
    %v945 = vld [vmem:[#allocation10 + $0xb20] sm:$0xff]
    %v946 = vld [vmem:[#allocation10 + $0xb28] sm:$0xff]
    %v947 = vld [vmem:[#allocation10 + $0xb30] sm:$0xff]
    %v948 = vld [vmem:[#allocation10 + $0xb38] sm:$0xff]
    %v949 = vld [vmem:[#allocation10 + $0xb40] sm:$0xff]
    %v950 = vld [vmem:[#allocation10 + $0xb48] sm:$0xff]
    %v951 = vld [vmem:[#allocation10 + $0xb50] sm:$0xff]
    %v952 = vld [vmem:[#allocation10 + $0xb58] sm:$0xff]
    %v953 = vld [vmem:[#allocation10 + $0xb60] sm:$0xff]
    %v954 = vld [vmem:[#allocation10 + $0xb68] sm:$0xff]
    %v955 = vld [vmem:[#allocation10 + $0xb70] sm:$0xff]
    %v956 = vld [vmem:[#allocation10 + $0xb78] sm:$0xff]
    %v957 = vld [vmem:[#allocation10 + $0xb80] sm:$0xff]
    %v958 = vld [vmem:[#allocation10 + $0xb88] sm:$0xff]
    %v959 = vld [vmem:[#allocation10 + $0xb90] sm:$0xff]
    %v960 = vld [vmem:[#allocation10 + $0xb98] sm:$0xff]
    %v961 = vld [vmem:[#allocation10 + $0xba0] sm:$0xff]
    %v962 = vld [vmem:[#allocation10 + $0xba8] sm:$0xff]
    %v963 = vld [vmem:[#allocation10 + $0xbb0] sm:$0xff]
    %v964 = vld [vmem:[#allocation10 + $0xbb8] sm:$0xff]
    %v965 = vld [vmem:[#allocation10 + $0xbc0] sm:$0xff]
    %v966 = vld [vmem:[#allocation10 + $0xbc8] sm:$0xff]
    %v967 = vld [vmem:[#allocation10 + $0xbd0] sm:$0xff]
    %v968 = vld [vmem:[#allocation10 + $0xbd8] sm:$0xff]
    %v969 = vld [vmem:[#allocation10 + $0xbe0] sm:$0xff]
    %v970 = vld [vmem:[#allocation10 + $0xbe8] sm:$0xff]
    %v971 = vld [vmem:[#allocation10 + $0xbf0] sm:$0xff]
    %v972 = vld [vmem:[#allocation10 + $0xbf8] sm:$0xff]
    %v973 = vld [vmem:[#allocation10 + $0xc00] sm:$0xff]
    %v974 = vld [vmem:[#allocation10 + $0xc08] sm:$0xff]
    %v975 = vld [vmem:[#allocation10 + $0xc10] sm:$0xff]
    %v976 = vld [vmem:[#allocation10 + $0xc18] sm:$0xff]
    %v977 = vld [vmem:[#allocation10 + $0xc20] sm:$0xff]
    %v978 = vld [vmem:[#allocation10 + $0xc28] sm:$0xff]
    %v979 = vld [vmem:[#allocation10 + $0xc30] sm:$0xff]
    %v980 = vld [vmem:[#allocation10 + $0xc38] sm:$0xff]
    %v981 = vld [vmem:[#allocation10 + $0xc40] sm:$0xff]
    %v982 = vld [vmem:[#allocation10 + $0xc48] sm:$0xff]
    %v983 = vld [vmem:[#allocation10 + $0xc50] sm:$0xff]
    %v984 = vld [vmem:[#allocation10 + $0xc58] sm:$0xff]
    %v985 = vld [vmem:[#allocation10 + $0xc60] sm:$0xff]
    %v986 = vld [vmem:[#allocation10 + $0xc68] sm:$0xff]
    %v987 = vld [vmem:[#allocation10 + $0xc70] sm:$0xff]
    %v988 = vld [vmem:[#allocation10 + $0xc78] sm:$0xff]
    %v989 = vld [vmem:[#allocation10 + $0xc80] sm:$0xff]
    %v990 = vld [vmem:[#allocation10 + $0xc88] sm:$0xff]
    %v991 = vld [vmem:[#allocation10 + $0xc90] sm:$0xff]
    %v992 = vld [vmem:[#allocation10 + $0xc98] sm:$0xff]
    %v993 = vld [vmem:[#allocation10 + $0xca0] sm:$0xff]
    %v994 = vld [vmem:[#allocation10 + $0xca8] sm:$0xff]
    %v995 = vld [vmem:[#allocation10 + $0xcb0] sm:$0xff]
    %v996 = vld [vmem:[#allocation10 + $0xcb8] sm:$0xff]
    %v997 = vld [vmem:[#allocation10 + $0xcc0] sm:$0xff]
    %v998 = vld [vmem:[#allocation10 + $0xcc8] sm:$0xff]
    %v999 = vld [vmem:[#allocation10 + $0xcd0] sm:$0xff]
    %v1000 = vld [vmem:[#allocation10 + $0xcd8] sm:$0xff]
    %v1001 = vld [vmem:[#allocation10 + $0xce0] sm:$0xff]
    %v1002 = vld [vmem:[#allocation10 + $0xce8] sm:$0xff]
    %v1003 = vld [vmem:[#allocation10 + $0xcf0] sm:$0xff]
    %v1004 = vld [vmem:[#allocation10 + $0xcf8] sm:$0xff]
    %v1005 = vld [vmem:[#allocation10 + $0xd00] sm:$0xff]
    %v1006 = vld [vmem:[#allocation10 + $0xd08] sm:$0xff]
    %v1007 = vld [vmem:[#allocation10 + $0xd10] sm:$0xff]
    %v1008 = vld [vmem:[#allocation10 + $0xd18] sm:$0xff]
    %v1009 = vld [vmem:[#allocation10 + $0xd20] sm:$0xff]
    %v1010 = vld [vmem:[#allocation10 + $0xd28] sm:$0xff]
    %v1011 = vld [vmem:[#allocation10 + $0xd30] sm:$0xff]
    %v1012 = vld [vmem:[#allocation10 + $0xd38] sm:$0xff]
    %v1013 = vld [vmem:[#allocation10 + $0xd40] sm:$0xff]
    %v1014 = vld [vmem:[#allocation10 + $0xd48] sm:$0xff]
    %v1015 = vld [vmem:[#allocation10 + $0xd50] sm:$0xff]
    %v1016 = vld [vmem:[#allocation10 + $0xd58] sm:$0xff]
    %v1017 = vld [vmem:[#allocation10 + $0xd60] sm:$0xff]
    %v1018 = vld [vmem:[#allocation10 + $0xd68] sm:$0xff]
    %v1019 = vld [vmem:[#allocation10 + $0xd70] sm:$0xff]
    %v1020 = vld [vmem:[#allocation10 + $0xd78] sm:$0xff]
    %v1021 = vld [vmem:[#allocation10 + $0xd80] sm:$0xff]
    %v1022 = vld [vmem:[#allocation10 + $0xd88] sm:$0xff]
    %v1023 = vld [vmem:[#allocation10 + $0xd90] sm:$0xff]
    %v1024 = vld [vmem:[#allocation10 + $0xd98] sm:$0xff]
    %v1025 = vld [vmem:[#allocation10 + $0xda0] sm:$0xff]
    %v1026 = vld [vmem:[#allocation10 + $0xda8] sm:$0xff]
    %v1027 = vld [vmem:[#allocation10 + $0xdb0] sm:$0xff]
    %v1028 = vld [vmem:[#allocation10 + $0xdb8] sm:$0xff]
    %v1029 = vld [vmem:[#allocation10 + $0xdc0] sm:$0xff]
    %v1030 = vld [vmem:[#allocation10 + $0xdc8] sm:$0xff]
    %v1031 = vld [vmem:[#allocation10 + $0xdd0] sm:$0xff]
    %v1032 = vld [vmem:[#allocation10 + $0xdd8] sm:$0xff]
    %v1033 = vld [vmem:[#allocation10 + $0xde0] sm:$0xff]
    %v1034 = vld [vmem:[#allocation10 + $0xde8] sm:$0xff]
    %v1035 = vld [vmem:[#allocation10 + $0xdf0] sm:$0xff]
    %v1036 = vld [vmem:[#allocation10 + $0xdf8] sm:$0xff]
    %v1037 = vld [vmem:[#allocation10 + $0xe00] sm:$0xff]
    %v1038 = vld [vmem:[#allocation10 + $0xe08] sm:$0xff]
    %v1039 = vld [vmem:[#allocation10 + $0xe10] sm:$0xff]
    %v1040 = vld [vmem:[#allocation10 + $0xe18] sm:$0xff]
    %v1041 = vld [vmem:[#allocation10 + $0xe20] sm:$0xff]
    %v1042 = vld [vmem:[#allocation10 + $0xe28] sm:$0xff]
    %v1043 = vld [vmem:[#allocation10 + $0xe30] sm:$0xff]
    %v1044 = vld [vmem:[#allocation10 + $0xe38] sm:$0xff]
    %v1045 = vld [vmem:[#allocation10 + $0xe40] sm:$0xff]
    %v1046 = vld [vmem:[#allocation10 + $0xe48] sm:$0xff]
    %v1047 = vld [vmem:[#allocation10 + $0xe50] sm:$0xff]
    %v1048 = vld [vmem:[#allocation10 + $0xe58] sm:$0xff]
    %v1049 = vld [vmem:[#allocation10 + $0xe60] sm:$0xff]
    %v1050 = vld [vmem:[#allocation10 + $0xe68] sm:$0xff]
    %v1051 = vld [vmem:[#allocation10 + $0xe70] sm:$0xff]
    %v1052 = vld [vmem:[#allocation10 + $0xe78] sm:$0xff]
    %v1053 = vld [vmem:[#allocation10 + $0xe80] sm:$0xff]
    %v1054 = vld [vmem:[#allocation10 + $0xe88] sm:$0xff]
    %v1055 = vld [vmem:[#allocation10 + $0xe90] sm:$0xff]
    %v1056 = vld [vmem:[#allocation10 + $0xe98] sm:$0xff]
    %v1057 = vld [vmem:[#allocation10 + $0xea0] sm:$0xff]
    %v1058 = vld [vmem:[#allocation10 + $0xea8] sm:$0xff]
    %v1059 = vld [vmem:[#allocation10 + $0xeb0] sm:$0xff]
    %v1060 = vld [vmem:[#allocation10 + $0xeb8] sm:$0xff]
    %v1061 = vld [vmem:[#allocation10 + $0xec0] sm:$0xff]
    %v1062 = vld [vmem:[#allocation10 + $0xec8] sm:$0xff]
    %v1063 = vld [vmem:[#allocation10 + $0xed0] sm:$0xff]
    %v1064 = vld [vmem:[#allocation10 + $0xed8] sm:$0xff]
    %v1065 = vld [vmem:[#allocation10 + $0xee0] sm:$0xff]
    %v1066 = vld [vmem:[#allocation10 + $0xee8] sm:$0xff]
    %v1067 = vld [vmem:[#allocation10 + $0xef0] sm:$0xff]
    %v1068 = vld [vmem:[#allocation10 + $0xef8] sm:$0xff]
    %v1069 = vld [vmem:[#allocation10 + $0xf00] sm:$0xff]
    %v1070 = vld [vmem:[#allocation10 + $0xf08] sm:$0xff]
    %v1071 = vld [vmem:[#allocation10 + $0xf10] sm:$0xff]
    %v1072 = vld [vmem:[#allocation10 + $0xf18] sm:$0xff]
    %v1073 = vld [vmem:[#allocation10 + $0xf20] sm:$0xff]
    %v1074 = vld [vmem:[#allocation10 + $0xf28] sm:$0xff]
    %v1075 = vld [vmem:[#allocation10 + $0xf30] sm:$0xff]
    %v1076 = vld [vmem:[#allocation10 + $0xf38] sm:$0xff]
    %v1077 = vld [vmem:[#allocation10 + $0xf40] sm:$0xff]
    %v1078 = vld [vmem:[#allocation10 + $0xf48] sm:$0xff]
    %v1079 = vld [vmem:[#allocation10 + $0xf50] sm:$0xff]
    %v1080 = vld [vmem:[#allocation10 + $0xf58] sm:$0xff]
    %v1081 = vld [vmem:[#allocation10 + $0xf60] sm:$0xff]
    %v1082 = vld [vmem:[#allocation10 + $0xf68] sm:$0xff]
    %v1083 = vld [vmem:[#allocation10 + $0xf70] sm:$0xff]
    %v1084 = vld [vmem:[#allocation10 + $0xf78] sm:$0xff]
    %v1085 = vld [vmem:[#allocation10 + $0xf80] sm:$0xff]
    %v1086 = vld [vmem:[#allocation10 + $0xf88] sm:$0xff]
    %v1087 = vld [vmem:[#allocation10 + $0xf90] sm:$0xff]
    %v1088 = vld [vmem:[#allocation10 + $0xf98] sm:$0xff]
    %v1089 = vld [vmem:[#allocation10 + $0xfa0] sm:$0xff]
    %v1090 = vld [vmem:[#allocation10 + $0xfa8] sm:$0xff]
    %v1091 = vld [vmem:[#allocation10 + $0xfb0] sm:$0xff]
    %v1092 = vld [vmem:[#allocation10 + $0xfb8] sm:$0xff]
    %v1093 = vld [vmem:[#allocation10 + $0xfc0] sm:$0xff]
    %v1094 = vld [vmem:[#allocation10 + $0xfc8] sm:$0xff]
    %v1095 = vld [vmem:[#allocation10 + $0xfd0] sm:$0xff]
    %v1096 = vld [vmem:[#allocation10 + $0xfd8] sm:$0xff]
    %v1097 = vld [vmem:[#allocation10 + $0xfe0] sm:$0xff]
    %v1098 = vld [vmem:[#allocation10 + $0xfe8] sm:$0xff]
    %v1099 = vld [vmem:[#allocation10 + $0xff0] sm:$0xff]
    %v1100 = vld [vmem:[#allocation10 + $0xff8] sm:$0xff]
    %v1101 = vld [vmem:[#allocation12] sm:$0xf]
    %v1103 = vperm.slane %v1101, 0
    %v1104 = vperm.slane %v1101, 1
    %v1105 = vperm.slane %v1101, 2
    %v1106 = vperm.slane %v1101, 3
    %v1623 = vunpack.c.l.b16 %v589
    %v1624 = vunpack.c.h.b16 %v589
    %v1625 = vunpack.c.l.b16 %v590
    %v1626 = vunpack.c.h.b16 %v590
    %v1627 = vunpack.c.l.b16 %v591
    %v1628 = vunpack.c.h.b16 %v591
    %v1629 = vunpack.c.l.b16 %v592
    %v1630 = vunpack.c.h.b16 %v592
    %v1631 = vunpack.c.l.b16 %v593
    %v1632 = vunpack.c.h.b16 %v593
    %v1633 = vunpack.c.l.b16 %v594
    %v1634 = vunpack.c.h.b16 %v594
    %v1635 = vunpack.c.l.b16 %v595
    %v1636 = vunpack.c.h.b16 %v595
    %v1637 = vunpack.c.l.b16 %v596
    %v1638 = vunpack.c.h.b16 %v596
    %v1639 = vunpack.c.l.b16 %v597
    %v1640 = vunpack.c.h.b16 %v597
    %v1641 = vunpack.c.l.b16 %v598
    %v1642 = vunpack.c.h.b16 %v598
    %v1643 = vunpack.c.l.b16 %v599
    %v1644 = vunpack.c.h.b16 %v599
    %v1645 = vunpack.c.l.b16 %v600
    %v1646 = vunpack.c.h.b16 %v600
    %v1647 = vunpack.c.l.b16 %v601
    %v1648 = vunpack.c.h.b16 %v601
    %v1649 = vunpack.c.l.b16 %v602
    %v1650 = vunpack.c.h.b16 %v602
    %v1651 = vunpack.c.l.b16 %v603
    %v1652 = vunpack.c.h.b16 %v603
    %v1653 = vunpack.c.l.b16 %v604
    %v1654 = vunpack.c.h.b16 %v604
    %v1655 = vunpack.c.l.b16 %v605
    %v1656 = vunpack.c.h.b16 %v605
    %v1657 = vunpack.c.l.b16 %v606
    %v1658 = vunpack.c.h.b16 %v606
    %v1659 = vunpack.c.l.b16 %v607
    %v1660 = vunpack.c.h.b16 %v607
    %v1661 = vunpack.c.l.b16 %v608
    %v1662 = vunpack.c.h.b16 %v608
    %v1663 = vunpack.c.l.b16 %v609
    %v1664 = vunpack.c.h.b16 %v609
    %v1665 = vunpack.c.l.b16 %v610
    %v1666 = vunpack.c.h.b16 %v610
    %v1667 = vunpack.c.l.b16 %v611
    %v1668 = vunpack.c.h.b16 %v611
    %v1669 = vunpack.c.l.b16 %v612
    %v1670 = vunpack.c.h.b16 %v612
    %v1671 = vunpack.c.l.b16 %v613
    %v1672 = vunpack.c.h.b16 %v613
    %v1673 = vunpack.c.l.b16 %v614
    %v1674 = vunpack.c.h.b16 %v614
    %v1675 = vunpack.c.l.b16 %v615
    %v1676 = vunpack.c.h.b16 %v615
    %v1677 = vunpack.c.l.b16 %v616
    %v1678 = vunpack.c.h.b16 %v616
    %v1679 = vunpack.c.l.b16 %v617
    %v1680 = vunpack.c.h.b16 %v617
    %v1681 = vunpack.c.l.b16 %v618
    %v1682 = vunpack.c.h.b16 %v618
    %v1683 = vunpack.c.l.b16 %v619
    %v1684 = vunpack.c.h.b16 %v619
    %v1685 = vunpack.c.l.b16 %v620
    %v1686 = vunpack.c.h.b16 %v620
    %v1687 = vunpack.c.l.b16 %v621
    %v1688 = vunpack.c.h.b16 %v621
    %v1689 = vunpack.c.l.b16 %v622
    %v1690 = vunpack.c.h.b16 %v622
    %v1691 = vunpack.c.l.b16 %v623
    %v1692 = vunpack.c.h.b16 %v623
    %v1693 = vunpack.c.l.b16 %v624
    %v1694 = vunpack.c.h.b16 %v624
    %v1695 = vunpack.c.l.b16 %v625
    %v1696 = vunpack.c.h.b16 %v625
    %v1697 = vunpack.c.l.b16 %v626
    %v1698 = vunpack.c.h.b16 %v626
    %v1699 = vunpack.c.l.b16 %v627
    %v1700 = vunpack.c.h.b16 %v627
    %v1701 = vunpack.c.l.b16 %v628
    %v1702 = vunpack.c.h.b16 %v628
    %v1703 = vunpack.c.l.b16 %v629
    %v1704 = vunpack.c.h.b16 %v629
    %v1705 = vunpack.c.l.b16 %v630
    %v1706 = vunpack.c.h.b16 %v630
    %v1707 = vunpack.c.l.b16 %v631
    %v1708 = vunpack.c.h.b16 %v631
    %v1709 = vunpack.c.l.b16 %v632
    %v1710 = vunpack.c.h.b16 %v632
    %v1711 = vunpack.c.l.b16 %v633
    %v1712 = vunpack.c.h.b16 %v633
    %v1713 = vunpack.c.l.b16 %v634
    %v1714 = vunpack.c.h.b16 %v634
    %v1715 = vunpack.c.l.b16 %v635
    %v1716 = vunpack.c.h.b16 %v635
    %v1717 = vunpack.c.l.b16 %v636
    %v1718 = vunpack.c.h.b16 %v636
    %v1719 = vunpack.c.l.b16 %v637
    %v1720 = vunpack.c.h.b16 %v637
    %v1721 = vunpack.c.l.b16 %v638
    %v1722 = vunpack.c.h.b16 %v638
    %v1723 = vunpack.c.l.b16 %v639
    %v1724 = vunpack.c.h.b16 %v639
    %v1725 = vunpack.c.l.b16 %v640
    %v1726 = vunpack.c.h.b16 %v640
    %v1727 = vunpack.c.l.b16 %v641
    %v1728 = vunpack.c.h.b16 %v641
    %v1729 = vunpack.c.l.b16 %v642
    %v1730 = vunpack.c.h.b16 %v642
    %v1731 = vunpack.c.l.b16 %v643
    %v1732 = vunpack.c.h.b16 %v643
    %v1733 = vunpack.c.l.b16 %v644
    %v1734 = vunpack.c.h.b16 %v644
    %v1735 = vunpack.c.l.b16 %v645
    %v1736 = vunpack.c.h.b16 %v645
    %v1737 = vunpack.c.l.b16 %v646
    %v1738 = vunpack.c.h.b16 %v646
    %v1739 = vunpack.c.l.b16 %v647
    %v1740 = vunpack.c.h.b16 %v647
    %v1741 = vunpack.c.l.b16 %v648
    %v1742 = vunpack.c.h.b16 %v648
    %v1743 = vunpack.c.l.b16 %v649
    %v1744 = vunpack.c.h.b16 %v649
    %v1745 = vunpack.c.l.b16 %v650
    %v1746 = vunpack.c.h.b16 %v650
    %v1747 = vunpack.c.l.b16 %v651
    %v1748 = vunpack.c.h.b16 %v651
    %v1749 = vunpack.c.l.b16 %v652
    %v1750 = vunpack.c.h.b16 %v652
    %v1751 = vunpack.c.l.b16 %v653
    %v1752 = vunpack.c.h.b16 %v653
    %v1753 = vunpack.c.l.b16 %v654
    %v1754 = vunpack.c.h.b16 %v654
    %v1755 = vunpack.c.l.b16 %v655
    %v1756 = vunpack.c.h.b16 %v655
    %v1757 = vunpack.c.l.b16 %v656
    %v1758 = vunpack.c.h.b16 %v656
    %v1759 = vunpack.c.l.b16 %v657
    %v1760 = vunpack.c.h.b16 %v657
    %v1761 = vunpack.c.l.b16 %v658
    %v1762 = vunpack.c.h.b16 %v658
    %v1763 = vunpack.c.l.b16 %v659
    %v1764 = vunpack.c.h.b16 %v659
    %v1765 = vunpack.c.l.b16 %v660
    %v1766 = vunpack.c.h.b16 %v660
    %v1767 = vunpack.c.l.b16 %v661
    %v1768 = vunpack.c.h.b16 %v661
    %v1769 = vunpack.c.l.b16 %v662
    %v1770 = vunpack.c.h.b16 %v662
    %v1771 = vunpack.c.l.b16 %v663
    %v1772 = vunpack.c.h.b16 %v663
    %v1773 = vunpack.c.l.b16 %v664
    %v1774 = vunpack.c.h.b16 %v664
    %v1775 = vunpack.c.l.b16 %v665
    %v1776 = vunpack.c.h.b16 %v665
    %v1777 = vunpack.c.l.b16 %v666
    %v1778 = vunpack.c.h.b16 %v666
    %v1779 = vunpack.c.l.b16 %v667
    %v1780 = vunpack.c.h.b16 %v667
    %v1781 = vunpack.c.l.b16 %v668
    %v1782 = vunpack.c.h.b16 %v668
    %v1783 = vunpack.c.l.b16 %v669
    %v1784 = vunpack.c.h.b16 %v669
    %v1785 = vunpack.c.l.b16 %v670
    %v1786 = vunpack.c.h.b16 %v670
    %v1787 = vunpack.c.l.b16 %v671
    %v1788 = vunpack.c.h.b16 %v671
    %v1789 = vunpack.c.l.b16 %v672
    %v1790 = vunpack.c.h.b16 %v672
    %v1791 = vunpack.c.l.b16 %v673
    %v1792 = vunpack.c.h.b16 %v673
    %v1793 = vunpack.c.l.b16 %v674
    %v1794 = vunpack.c.h.b16 %v674
    %v1795 = vunpack.c.l.b16 %v675
    %v1796 = vunpack.c.h.b16 %v675
    %v1797 = vunpack.c.l.b16 %v676
    %v1798 = vunpack.c.h.b16 %v676
    %v1799 = vunpack.c.l.b16 %v677
    %v1800 = vunpack.c.h.b16 %v677
    %v1801 = vunpack.c.l.b16 %v678
    %v1802 = vunpack.c.h.b16 %v678
    %v1803 = vunpack.c.l.b16 %v679
    %v1804 = vunpack.c.h.b16 %v679
    %v1805 = vunpack.c.l.b16 %v680
    %v1806 = vunpack.c.h.b16 %v680
    %v1807 = vunpack.c.l.b16 %v681
    %v1808 = vunpack.c.h.b16 %v681
    %v1809 = vunpack.c.l.b16 %v682
    %v1810 = vunpack.c.h.b16 %v682
    %v1811 = vunpack.c.l.b16 %v683
    %v1812 = vunpack.c.h.b16 %v683
    %v1813 = vunpack.c.l.b16 %v684
    %v1814 = vunpack.c.h.b16 %v684
    %v1815 = vunpack.c.l.b16 %v685
    %v1816 = vunpack.c.h.b16 %v685
    %v1817 = vunpack.c.l.b16 %v686
    %v1818 = vunpack.c.h.b16 %v686
    %v1819 = vunpack.c.l.b16 %v687
    %v1820 = vunpack.c.h.b16 %v687
    %v1821 = vunpack.c.l.b16 %v688
    %v1822 = vunpack.c.h.b16 %v688
    %v1823 = vunpack.c.l.b16 %v689
    %v1824 = vunpack.c.h.b16 %v689
    %v1825 = vunpack.c.l.b16 %v690
    %v1826 = vunpack.c.h.b16 %v690
    %v1827 = vunpack.c.l.b16 %v691
    %v1828 = vunpack.c.h.b16 %v691
    %v1829 = vunpack.c.l.b16 %v692
    %v1830 = vunpack.c.h.b16 %v692
    %v1831 = vunpack.c.l.b16 %v693
    %v1832 = vunpack.c.h.b16 %v693
    %v1833 = vunpack.c.l.b16 %v694
    %v1834 = vunpack.c.h.b16 %v694
    %v1835 = vunpack.c.l.b16 %v695
    %v1836 = vunpack.c.h.b16 %v695
    %v1837 = vunpack.c.l.b16 %v696
    %v1838 = vunpack.c.h.b16 %v696
    %v1839 = vunpack.c.l.b16 %v697
    %v1840 = vunpack.c.h.b16 %v697
    %v1841 = vunpack.c.l.b16 %v698
    %v1842 = vunpack.c.h.b16 %v698
    %v1843 = vunpack.c.l.b16 %v699
    %v1844 = vunpack.c.h.b16 %v699
    %v1845 = vunpack.c.l.b16 %v700
    %v1846 = vunpack.c.h.b16 %v700
    %v1847 = vunpack.c.l.b16 %v701
    %v1848 = vunpack.c.h.b16 %v701
    %v1849 = vunpack.c.l.b16 %v702
    %v1850 = vunpack.c.h.b16 %v702
    %v1851 = vunpack.c.l.b16 %v703
    %v1852 = vunpack.c.h.b16 %v703
    %v1853 = vunpack.c.l.b16 %v704
    %v1854 = vunpack.c.h.b16 %v704
    %v1855 = vunpack.c.l.b16 %v705
    %v1856 = vunpack.c.h.b16 %v705
    %v1857 = vunpack.c.l.b16 %v706
    %v1858 = vunpack.c.h.b16 %v706
    %v1859 = vunpack.c.l.b16 %v707
    %v1860 = vunpack.c.h.b16 %v707
    %v1861 = vunpack.c.l.b16 %v708
    %v1862 = vunpack.c.h.b16 %v708
    %v1863 = vunpack.c.l.b16 %v709
    %v1864 = vunpack.c.h.b16 %v709
    %v1865 = vunpack.c.l.b16 %v710
    %v1866 = vunpack.c.h.b16 %v710
    %v1867 = vunpack.c.l.b16 %v711
    %v1868 = vunpack.c.h.b16 %v711
    %v1869 = vunpack.c.l.b16 %v712
    %v1870 = vunpack.c.h.b16 %v712
    %v1871 = vunpack.c.l.b16 %v713
    %v1872 = vunpack.c.h.b16 %v713
    %v1873 = vunpack.c.l.b16 %v714
    %v1874 = vunpack.c.h.b16 %v714
    %v1875 = vunpack.c.l.b16 %v715
    %v1876 = vunpack.c.h.b16 %v715
    %v1877 = vunpack.c.l.b16 %v716
    %v1878 = vunpack.c.h.b16 %v716
    %v1879 = vunpack.c.l.b16 %v717
    %v1880 = vunpack.c.h.b16 %v717
    %v1881 = vunpack.c.l.b16 %v718
    %v1882 = vunpack.c.h.b16 %v718
    %v1883 = vunpack.c.l.b16 %v719
    %v1884 = vunpack.c.h.b16 %v719
    %v1885 = vunpack.c.l.b16 %v720
    %v1886 = vunpack.c.h.b16 %v720
    %v1887 = vunpack.c.l.b16 %v721
    %v1888 = vunpack.c.h.b16 %v721
    %v1889 = vunpack.c.l.b16 %v722
    %v1890 = vunpack.c.h.b16 %v722
    %v1891 = vunpack.c.l.b16 %v723
    %v1892 = vunpack.c.h.b16 %v723
    %v1893 = vunpack.c.l.b16 %v724
    %v1894 = vunpack.c.h.b16 %v724
    %v1895 = vunpack.c.l.b16 %v725
    %v1896 = vunpack.c.h.b16 %v725
    %v1897 = vunpack.c.l.b16 %v726
    %v1898 = vunpack.c.h.b16 %v726
    %v1899 = vunpack.c.l.b16 %v727
    %v1900 = vunpack.c.h.b16 %v727
    %v1901 = vunpack.c.l.b16 %v728
    %v1902 = vunpack.c.h.b16 %v728
    %v1903 = vunpack.c.l.b16 %v729
    %v1904 = vunpack.c.h.b16 %v729
    %v1905 = vunpack.c.l.b16 %v730
    %v1906 = vunpack.c.h.b16 %v730
    %v1907 = vunpack.c.l.b16 %v731
    %v1908 = vunpack.c.h.b16 %v731
    %v1909 = vunpack.c.l.b16 %v732
    %v1910 = vunpack.c.h.b16 %v732
    %v1911 = vunpack.c.l.b16 %v733
    %v1912 = vunpack.c.h.b16 %v733
    %v1913 = vunpack.c.l.b16 %v734
    %v1914 = vunpack.c.h.b16 %v734
    %v1915 = vunpack.c.l.b16 %v735
    %v1916 = vunpack.c.h.b16 %v735
    %v1917 = vunpack.c.l.b16 %v736
    %v1918 = vunpack.c.h.b16 %v736
    %v1919 = vunpack.c.l.b16 %v737
    %v1920 = vunpack.c.h.b16 %v737
    %v1921 = vunpack.c.l.b16 %v738
    %v1922 = vunpack.c.h.b16 %v738
    %v1923 = vunpack.c.l.b16 %v739
    %v1924 = vunpack.c.h.b16 %v739
    %v1925 = vunpack.c.l.b16 %v740
    %v1926 = vunpack.c.h.b16 %v740
    %v1927 = vunpack.c.l.b16 %v741
    %v1928 = vunpack.c.h.b16 %v741
    %v1929 = vunpack.c.l.b16 %v742
    %v1930 = vunpack.c.h.b16 %v742
    %v1931 = vunpack.c.l.b16 %v743
    %v1932 = vunpack.c.h.b16 %v743
    %v1933 = vunpack.c.l.b16 %v744
    %v1934 = vunpack.c.h.b16 %v744
    %v1935 = vunpack.c.l.b16 %v745
    %v1936 = vunpack.c.h.b16 %v745
    %v1937 = vunpack.c.l.b16 %v746
    %v1938 = vunpack.c.h.b16 %v746
    %v1939 = vunpack.c.l.b16 %v747
    %v1940 = vunpack.c.h.b16 %v747
    %v1941 = vunpack.c.l.b16 %v748
    %v1942 = vunpack.c.h.b16 %v748
    %v1943 = vunpack.c.l.b16 %v749
    %v1944 = vunpack.c.h.b16 %v749
    %v1945 = vunpack.c.l.b16 %v750
    %v1946 = vunpack.c.h.b16 %v750
    %v1947 = vunpack.c.l.b16 %v751
    %v1948 = vunpack.c.h.b16 %v751
    %v1949 = vunpack.c.l.b16 %v752
    %v1950 = vunpack.c.h.b16 %v752
    %v1951 = vunpack.c.l.b16 %v753
    %v1952 = vunpack.c.h.b16 %v753
    %v1953 = vunpack.c.l.b16 %v754
    %v1954 = vunpack.c.h.b16 %v754
    %v1955 = vunpack.c.l.b16 %v755
    %v1956 = vunpack.c.h.b16 %v755
    %v1957 = vunpack.c.l.b16 %v756
    %v1958 = vunpack.c.h.b16 %v756
    %v1959 = vunpack.c.l.b16 %v757
    %v1960 = vunpack.c.h.b16 %v757
    %v1961 = vunpack.c.l.b16 %v758
    %v1962 = vunpack.c.h.b16 %v758
    %v1963 = vunpack.c.l.b16 %v759
    %v1964 = vunpack.c.h.b16 %v759
    %v1965 = vunpack.c.l.b16 %v760
    %v1966 = vunpack.c.h.b16 %v760
    %v1967 = vunpack.c.l.b16 %v761
    %v1968 = vunpack.c.h.b16 %v761
    %v1969 = vunpack.c.l.b16 %v762
    %v1970 = vunpack.c.h.b16 %v762
    %v1971 = vunpack.c.l.b16 %v763
    %v1972 = vunpack.c.h.b16 %v763
    %v1973 = vunpack.c.l.b16 %v764
    %v1974 = vunpack.c.h.b16 %v764
    %v1975 = vunpack.c.l.b16 %v765
    %v1976 = vunpack.c.h.b16 %v765
    %v1977 = vunpack.c.l.b16 %v766
    %v1978 = vunpack.c.h.b16 %v766
    %v1979 = vunpack.c.l.b16 %v767
    %v1980 = vunpack.c.h.b16 %v767
    %v1981 = vunpack.c.l.b16 %v768
    %v1982 = vunpack.c.h.b16 %v768
    %v1983 = vunpack.c.l.b16 %v769
    %v1984 = vunpack.c.h.b16 %v769
    %v1985 = vunpack.c.l.b16 %v770
    %v1986 = vunpack.c.h.b16 %v770
    %v1987 = vunpack.c.l.b16 %v771
    %v1988 = vunpack.c.h.b16 %v771
    %v1989 = vunpack.c.l.b16 %v772
    %v1990 = vunpack.c.h.b16 %v772
    %v1991 = vunpack.c.l.b16 %v773
    %v1992 = vunpack.c.h.b16 %v773
    %v1993 = vunpack.c.l.b16 %v774
    %v1994 = vunpack.c.h.b16 %v774
    %v1995 = vunpack.c.l.b16 %v775
    %v1996 = vunpack.c.h.b16 %v775
    %v1997 = vunpack.c.l.b16 %v776
    %v1998 = vunpack.c.h.b16 %v776
    %v1999 = vunpack.c.l.b16 %v777
    %v2000 = vunpack.c.h.b16 %v777
    %v2001 = vunpack.c.l.b16 %v778
    %v2002 = vunpack.c.h.b16 %v778
    %v2003 = vunpack.c.l.b16 %v779
    %v2004 = vunpack.c.h.b16 %v779
    %v2005 = vunpack.c.l.b16 %v780
    %v2006 = vunpack.c.h.b16 %v780
    %v2007 = vunpack.c.l.b16 %v781
    %v2008 = vunpack.c.h.b16 %v781
    %v2009 = vunpack.c.l.b16 %v782
    %v2010 = vunpack.c.h.b16 %v782
    %v2011 = vunpack.c.l.b16 %v783
    %v2012 = vunpack.c.h.b16 %v783
    %v2013 = vunpack.c.l.b16 %v784
    %v2014 = vunpack.c.h.b16 %v784
    %v2015 = vunpack.c.l.b16 %v785
    %v2016 = vunpack.c.h.b16 %v785
    %v2017 = vunpack.c.l.b16 %v786
    %v2018 = vunpack.c.h.b16 %v786
    %v2019 = vunpack.c.l.b16 %v787
    %v2020 = vunpack.c.h.b16 %v787
    %v2021 = vunpack.c.l.b16 %v788
    %v2022 = vunpack.c.h.b16 %v788
    %v2023 = vunpack.c.l.b16 %v789
    %v2024 = vunpack.c.h.b16 %v789
    %v2025 = vunpack.c.l.b16 %v790
    %v2026 = vunpack.c.h.b16 %v790
    %v2027 = vunpack.c.l.b16 %v791
    %v2028 = vunpack.c.h.b16 %v791
    %v2029 = vunpack.c.l.b16 %v792
    %v2030 = vunpack.c.h.b16 %v792
    %v2031 = vunpack.c.l.b16 %v793
    %v2032 = vunpack.c.h.b16 %v793
    %v2033 = vunpack.c.l.b16 %v794
    %v2034 = vunpack.c.h.b16 %v794
    %v2035 = vunpack.c.l.b16 %v795
    %v2036 = vunpack.c.h.b16 %v795
    %v2037 = vunpack.c.l.b16 %v796
    %v2038 = vunpack.c.h.b16 %v796
    %v2039 = vunpack.c.l.b16 %v797
    %v2040 = vunpack.c.h.b16 %v797
    %v2041 = vunpack.c.l.b16 %v798
    %v2042 = vunpack.c.h.b16 %v798
    %v2043 = vunpack.c.l.b16 %v799
    %v2044 = vunpack.c.h.b16 %v799
    %v2045 = vunpack.c.l.b16 %v800
    %v2046 = vunpack.c.h.b16 %v800
    %v2047 = vunpack.c.l.b16 %v801
    %v2048 = vunpack.c.h.b16 %v801
    %v2049 = vunpack.c.l.b16 %v802
    %v2050 = vunpack.c.h.b16 %v802
    %v2051 = vunpack.c.l.b16 %v803
    %v2052 = vunpack.c.h.b16 %v803
    %v2053 = vunpack.c.l.b16 %v804
    %v2054 = vunpack.c.h.b16 %v804
    %v2055 = vunpack.c.l.b16 %v805
    %v2056 = vunpack.c.h.b16 %v805
    %v2057 = vunpack.c.l.b16 %v806
    %v2058 = vunpack.c.h.b16 %v806
    %v2059 = vunpack.c.l.b16 %v807
    %v2060 = vunpack.c.h.b16 %v807
    %v2061 = vunpack.c.l.b16 %v808
    %v2062 = vunpack.c.h.b16 %v808
    %v2063 = vunpack.c.l.b16 %v809
    %v2064 = vunpack.c.h.b16 %v809
    %v2065 = vunpack.c.l.b16 %v810
    %v2066 = vunpack.c.h.b16 %v810
    %v2067 = vunpack.c.l.b16 %v811
    %v2068 = vunpack.c.h.b16 %v811
    %v2069 = vunpack.c.l.b16 %v812
    %v2070 = vunpack.c.h.b16 %v812
    %v2071 = vunpack.c.l.b16 %v813
    %v2072 = vunpack.c.h.b16 %v813
    %v2073 = vunpack.c.l.b16 %v814
    %v2074 = vunpack.c.h.b16 %v814
    %v2075 = vunpack.c.l.b16 %v815
    %v2076 = vunpack.c.h.b16 %v815
    %v2077 = vunpack.c.l.b16 %v816
    %v2078 = vunpack.c.h.b16 %v816
    %v2079 = vunpack.c.l.b16 %v817
    %v2080 = vunpack.c.h.b16 %v817
    %v2081 = vunpack.c.l.b16 %v818
    %v2082 = vunpack.c.h.b16 %v818
    %v2083 = vunpack.c.l.b16 %v819
    %v2084 = vunpack.c.h.b16 %v819
    %v2085 = vunpack.c.l.b16 %v820
    %v2086 = vunpack.c.h.b16 %v820
    %v2087 = vunpack.c.l.b16 %v821
    %v2088 = vunpack.c.h.b16 %v821
    %v2089 = vunpack.c.l.b16 %v822
    %v2090 = vunpack.c.h.b16 %v822
    %v2091 = vunpack.c.l.b16 %v823
    %v2092 = vunpack.c.h.b16 %v823
    %v2093 = vunpack.c.l.b16 %v824
    %v2094 = vunpack.c.h.b16 %v824
    %v2095 = vunpack.c.l.b16 %v825
    %v2096 = vunpack.c.h.b16 %v825
    %v2097 = vunpack.c.l.b16 %v826
    %v2098 = vunpack.c.h.b16 %v826
    %v2099 = vunpack.c.l.b16 %v827
    %v2100 = vunpack.c.h.b16 %v827
    %v2101 = vunpack.c.l.b16 %v828
    %v2102 = vunpack.c.h.b16 %v828
    %v2103 = vunpack.c.l.b16 %v829
    %v2104 = vunpack.c.h.b16 %v829
    %v2105 = vunpack.c.l.b16 %v830
    %v2106 = vunpack.c.h.b16 %v830
    %v2107 = vunpack.c.l.b16 %v831
    %v2108 = vunpack.c.h.b16 %v831
    %v2109 = vunpack.c.l.b16 %v832
    %v2110 = vunpack.c.h.b16 %v832
    %v2111 = vunpack.c.l.b16 %v833
    %v2112 = vunpack.c.h.b16 %v833
    %v2113 = vunpack.c.l.b16 %v834
    %v2114 = vunpack.c.h.b16 %v834
    %v2115 = vunpack.c.l.b16 %v835
    %v2116 = vunpack.c.h.b16 %v835
    %v2117 = vunpack.c.l.b16 %v836
    %v2118 = vunpack.c.h.b16 %v836
    %v2119 = vunpack.c.l.b16 %v837
    %v2120 = vunpack.c.h.b16 %v837
    %v2121 = vunpack.c.l.b16 %v838
    %v2122 = vunpack.c.h.b16 %v838
    %v2123 = vunpack.c.l.b16 %v839
    %v2124 = vunpack.c.h.b16 %v839
    %v2125 = vunpack.c.l.b16 %v840
    %v2126 = vunpack.c.h.b16 %v840
    %v2127 = vunpack.c.l.b16 %v841
    %v2128 = vunpack.c.h.b16 %v841
    %v2129 = vunpack.c.l.b16 %v842
    %v2130 = vunpack.c.h.b16 %v842
    %v2131 = vunpack.c.l.b16 %v843
    %v2132 = vunpack.c.h.b16 %v843
    %v2133 = vunpack.c.l.b16 %v844
    %v2134 = vunpack.c.h.b16 %v844
    %v2135 = vunpack.c.l.b16 %v845
    %v2136 = vunpack.c.h.b16 %v845
    %v2137 = vunpack.c.l.b16 %v846
    %v2138 = vunpack.c.h.b16 %v846
    %v2139 = vunpack.c.l.b16 %v847
    %v2140 = vunpack.c.h.b16 %v847
    %v2141 = vunpack.c.l.b16 %v848
    %v2142 = vunpack.c.h.b16 %v848
    %v2143 = vunpack.c.l.b16 %v849
    %v2144 = vunpack.c.h.b16 %v849
    %v2145 = vunpack.c.l.b16 %v850
    %v2146 = vunpack.c.h.b16 %v850
    %v2147 = vunpack.c.l.b16 %v851
    %v2148 = vunpack.c.h.b16 %v851
    %v2149 = vunpack.c.l.b16 %v852
    %v2150 = vunpack.c.h.b16 %v852
    %v2151 = vunpack.c.l.b16 %v853
    %v2152 = vunpack.c.h.b16 %v853
    %v2153 = vunpack.c.l.b16 %v854
    %v2154 = vunpack.c.h.b16 %v854
    %v2155 = vunpack.c.l.b16 %v855
    %v2156 = vunpack.c.h.b16 %v855
    %v2157 = vunpack.c.l.b16 %v856
    %v2158 = vunpack.c.h.b16 %v856
    %v2159 = vunpack.c.l.b16 %v857
    %v2160 = vunpack.c.h.b16 %v857
    %v2161 = vunpack.c.l.b16 %v858
    %v2162 = vunpack.c.h.b16 %v858
    %v2163 = vunpack.c.l.b16 %v859
    %v2164 = vunpack.c.h.b16 %v859
    %v2165 = vunpack.c.l.b16 %v860
    %v2166 = vunpack.c.h.b16 %v860
    %v2167 = vunpack.c.l.b16 %v861
    %v2168 = vunpack.c.h.b16 %v861
    %v2169 = vunpack.c.l.b16 %v862
    %v2170 = vunpack.c.h.b16 %v862
    %v2171 = vunpack.c.l.b16 %v863
    %v2172 = vunpack.c.h.b16 %v863
    %v2173 = vunpack.c.l.b16 %v864
    %v2174 = vunpack.c.h.b16 %v864
    %v2175 = vunpack.c.l.b16 %v865
    %v2176 = vunpack.c.h.b16 %v865
    %v2177 = vunpack.c.l.b16 %v866
    %v2178 = vunpack.c.h.b16 %v866
    %v2179 = vunpack.c.l.b16 %v867
    %v2180 = vunpack.c.h.b16 %v867
    %v2181 = vunpack.c.l.b16 %v868
    %v2182 = vunpack.c.h.b16 %v868
    %v2183 = vunpack.c.l.b16 %v869
    %v2184 = vunpack.c.h.b16 %v869
    %v2185 = vunpack.c.l.b16 %v870
    %v2186 = vunpack.c.h.b16 %v870
    %v2187 = vunpack.c.l.b16 %v871
    %v2188 = vunpack.c.h.b16 %v871
    %v2189 = vunpack.c.l.b16 %v872
    %v2190 = vunpack.c.h.b16 %v872
    %v2191 = vunpack.c.l.b16 %v873
    %v2192 = vunpack.c.h.b16 %v873
    %v2193 = vunpack.c.l.b16 %v874
    %v2194 = vunpack.c.h.b16 %v874
    %v2195 = vunpack.c.l.b16 %v875
    %v2196 = vunpack.c.h.b16 %v875
    %v2197 = vunpack.c.l.b16 %v876
    %v2198 = vunpack.c.h.b16 %v876
    %v2199 = vunpack.c.l.b16 %v877
    %v2200 = vunpack.c.h.b16 %v877
    %v2201 = vunpack.c.l.b16 %v878
    %v2202 = vunpack.c.h.b16 %v878
    %v2203 = vunpack.c.l.b16 %v879
    %v2204 = vunpack.c.h.b16 %v879
    %v2205 = vunpack.c.l.b16 %v880
    %v2206 = vunpack.c.h.b16 %v880
    %v2207 = vunpack.c.l.b16 %v881
    %v2208 = vunpack.c.h.b16 %v881
    %v2209 = vunpack.c.l.b16 %v882
    %v2210 = vunpack.c.h.b16 %v882
    %v2211 = vunpack.c.l.b16 %v883
    %v2212 = vunpack.c.h.b16 %v883
    %v2213 = vunpack.c.l.b16 %v884
    %v2214 = vunpack.c.h.b16 %v884
    %v2215 = vunpack.c.l.b16 %v885
    %v2216 = vunpack.c.h.b16 %v885
    %v2217 = vunpack.c.l.b16 %v886
    %v2218 = vunpack.c.h.b16 %v886
    %v2219 = vunpack.c.l.b16 %v887
    %v2220 = vunpack.c.h.b16 %v887
    %v2221 = vunpack.c.l.b16 %v888
    %v2222 = vunpack.c.h.b16 %v888
    %v2223 = vunpack.c.l.b16 %v889
    %v2224 = vunpack.c.h.b16 %v889
    %v2225 = vunpack.c.l.b16 %v890
    %v2226 = vunpack.c.h.b16 %v890
    %v2227 = vunpack.c.l.b16 %v891
    %v2228 = vunpack.c.h.b16 %v891
    %v2229 = vunpack.c.l.b16 %v892
    %v2230 = vunpack.c.h.b16 %v892
    %v2231 = vunpack.c.l.b16 %v893
    %v2232 = vunpack.c.h.b16 %v893
    %v2233 = vunpack.c.l.b16 %v894
    %v2234 = vunpack.c.h.b16 %v894
    %v2235 = vunpack.c.l.b16 %v895
    %v2236 = vunpack.c.h.b16 %v895
    %v2237 = vunpack.c.l.b16 %v896
    %v2238 = vunpack.c.h.b16 %v896
    %v2239 = vunpack.c.l.b16 %v897
    %v2240 = vunpack.c.h.b16 %v897
    %v2241 = vunpack.c.l.b16 %v898
    %v2242 = vunpack.c.h.b16 %v898
    %v2243 = vunpack.c.l.b16 %v899
    %v2244 = vunpack.c.h.b16 %v899
    %v2245 = vunpack.c.l.b16 %v900
    %v2246 = vunpack.c.h.b16 %v900
    %v2247 = vunpack.c.l.b16 %v901
    %v2248 = vunpack.c.h.b16 %v901
    %v2249 = vunpack.c.l.b16 %v902
    %v2250 = vunpack.c.h.b16 %v902
    %v2251 = vunpack.c.l.b16 %v903
    %v2252 = vunpack.c.h.b16 %v903
    %v2253 = vunpack.c.l.b16 %v904
    %v2254 = vunpack.c.h.b16 %v904
    %v2255 = vunpack.c.l.b16 %v905
    %v2256 = vunpack.c.h.b16 %v905
    %v2257 = vunpack.c.l.b16 %v906
    %v2258 = vunpack.c.h.b16 %v906
    %v2259 = vunpack.c.l.b16 %v907
    %v2260 = vunpack.c.h.b16 %v907
    %v2261 = vunpack.c.l.b16 %v908
    %v2262 = vunpack.c.h.b16 %v908
    %v2263 = vunpack.c.l.b16 %v909
    %v2264 = vunpack.c.h.b16 %v909
    %v2265 = vunpack.c.l.b16 %v910
    %v2266 = vunpack.c.h.b16 %v910
    %v2267 = vunpack.c.l.b16 %v911
    %v2268 = vunpack.c.h.b16 %v911
    %v2269 = vunpack.c.l.b16 %v912
    %v2270 = vunpack.c.h.b16 %v912
    %v2271 = vunpack.c.l.b16 %v913
    %v2272 = vunpack.c.h.b16 %v913
    %v2273 = vunpack.c.l.b16 %v914
    %v2274 = vunpack.c.h.b16 %v914
    %v2275 = vunpack.c.l.b16 %v915
    %v2276 = vunpack.c.h.b16 %v915
    %v2277 = vunpack.c.l.b16 %v916
    %v2278 = vunpack.c.h.b16 %v916
    %v2279 = vunpack.c.l.b16 %v917
    %v2280 = vunpack.c.h.b16 %v917
    %v2281 = vunpack.c.l.b16 %v918
    %v2282 = vunpack.c.h.b16 %v918
    %v2283 = vunpack.c.l.b16 %v919
    %v2284 = vunpack.c.h.b16 %v919
    %v2285 = vunpack.c.l.b16 %v920
    %v2286 = vunpack.c.h.b16 %v920
    %v2287 = vunpack.c.l.b16 %v921
    %v2288 = vunpack.c.h.b16 %v921
    %v2289 = vunpack.c.l.b16 %v922
    %v2290 = vunpack.c.h.b16 %v922
    %v2291 = vunpack.c.l.b16 %v923
    %v2292 = vunpack.c.h.b16 %v923
    %v2293 = vunpack.c.l.b16 %v924
    %v2294 = vunpack.c.h.b16 %v924
    %v2295 = vunpack.c.l.b16 %v925
    %v2296 = vunpack.c.h.b16 %v925
    %v2297 = vunpack.c.l.b16 %v926
    %v2298 = vunpack.c.h.b16 %v926
    %v2299 = vunpack.c.l.b16 %v927
    %v2300 = vunpack.c.h.b16 %v927
    %v2301 = vunpack.c.l.b16 %v928
    %v2302 = vunpack.c.h.b16 %v928
    %v2303 = vunpack.c.l.b16 %v929
    %v2304 = vunpack.c.h.b16 %v929
    %v2305 = vunpack.c.l.b16 %v930
    %v2306 = vunpack.c.h.b16 %v930
    %v2307 = vunpack.c.l.b16 %v931
    %v2308 = vunpack.c.h.b16 %v931
    %v2309 = vunpack.c.l.b16 %v932
    %v2310 = vunpack.c.h.b16 %v932
    %v2311 = vunpack.c.l.b16 %v933
    %v2312 = vunpack.c.h.b16 %v933
    %v2313 = vunpack.c.l.b16 %v934
    %v2314 = vunpack.c.h.b16 %v934
    %v2315 = vunpack.c.l.b16 %v935
    %v2316 = vunpack.c.h.b16 %v935
    %v2317 = vunpack.c.l.b16 %v936
    %v2318 = vunpack.c.h.b16 %v936
    %v2319 = vunpack.c.l.b16 %v937
    %v2320 = vunpack.c.h.b16 %v937
    %v2321 = vunpack.c.l.b16 %v938
    %v2322 = vunpack.c.h.b16 %v938
    %v2323 = vunpack.c.l.b16 %v939
    %v2324 = vunpack.c.h.b16 %v939
    %v2325 = vunpack.c.l.b16 %v940
    %v2326 = vunpack.c.h.b16 %v940
    %v2327 = vunpack.c.l.b16 %v941
    %v2328 = vunpack.c.h.b16 %v941
    %v2329 = vunpack.c.l.b16 %v942
    %v2330 = vunpack.c.h.b16 %v942
    %v2331 = vunpack.c.l.b16 %v943
    %v2332 = vunpack.c.h.b16 %v943
    %v2333 = vunpack.c.l.b16 %v944
    %v2334 = vunpack.c.h.b16 %v944
    %v2335 = vunpack.c.l.b16 %v945
    %v2336 = vunpack.c.h.b16 %v945
    %v2337 = vunpack.c.l.b16 %v946
    %v2338 = vunpack.c.h.b16 %v946
    %v2339 = vunpack.c.l.b16 %v947
    %v2340 = vunpack.c.h.b16 %v947
    %v2341 = vunpack.c.l.b16 %v948
    %v2342 = vunpack.c.h.b16 %v948
    %v2343 = vunpack.c.l.b16 %v949
    %v2344 = vunpack.c.h.b16 %v949
    %v2345 = vunpack.c.l.b16 %v950
    %v2346 = vunpack.c.h.b16 %v950
    %v2347 = vunpack.c.l.b16 %v951
    %v2348 = vunpack.c.h.b16 %v951
    %v2349 = vunpack.c.l.b16 %v952
    %v2350 = vunpack.c.h.b16 %v952
    %v2351 = vunpack.c.l.b16 %v953
    %v2352 = vunpack.c.h.b16 %v953
    %v2353 = vunpack.c.l.b16 %v954
    %v2354 = vunpack.c.h.b16 %v954
    %v2355 = vunpack.c.l.b16 %v955
    %v2356 = vunpack.c.h.b16 %v955
    %v2357 = vunpack.c.l.b16 %v956
    %v2358 = vunpack.c.h.b16 %v956
    %v2359 = vunpack.c.l.b16 %v957
    %v2360 = vunpack.c.h.b16 %v957
    %v2361 = vunpack.c.l.b16 %v958
    %v2362 = vunpack.c.h.b16 %v958
    %v2363 = vunpack.c.l.b16 %v959
    %v2364 = vunpack.c.h.b16 %v959
    %v2365 = vunpack.c.l.b16 %v960
    %v2366 = vunpack.c.h.b16 %v960
    %v2367 = vunpack.c.l.b16 %v961
    %v2368 = vunpack.c.h.b16 %v961
    %v2369 = vunpack.c.l.b16 %v962
    %v2370 = vunpack.c.h.b16 %v962
    %v2371 = vunpack.c.l.b16 %v963
    %v2372 = vunpack.c.h.b16 %v963
    %v2373 = vunpack.c.l.b16 %v964
    %v2374 = vunpack.c.h.b16 %v964
    %v2375 = vunpack.c.l.b16 %v965
    %v2376 = vunpack.c.h.b16 %v965
    %v2377 = vunpack.c.l.b16 %v966
    %v2378 = vunpack.c.h.b16 %v966
    %v2379 = vunpack.c.l.b16 %v967
    %v2380 = vunpack.c.h.b16 %v967
    %v2381 = vunpack.c.l.b16 %v968
    %v2382 = vunpack.c.h.b16 %v968
    %v2383 = vunpack.c.l.b16 %v969
    %v2384 = vunpack.c.h.b16 %v969
    %v2385 = vunpack.c.l.b16 %v970
    %v2386 = vunpack.c.h.b16 %v970
    %v2387 = vunpack.c.l.b16 %v971
    %v2388 = vunpack.c.h.b16 %v971
    %v2389 = vunpack.c.l.b16 %v972
    %v2390 = vunpack.c.h.b16 %v972
    %v2391 = vunpack.c.l.b16 %v973
    %v2392 = vunpack.c.h.b16 %v973
    %v2393 = vunpack.c.l.b16 %v974
    %v2394 = vunpack.c.h.b16 %v974
    %v2395 = vunpack.c.l.b16 %v975
    %v2396 = vunpack.c.h.b16 %v975
    %v2397 = vunpack.c.l.b16 %v976
    %v2398 = vunpack.c.h.b16 %v976
    %v2399 = vunpack.c.l.b16 %v977
    %v2400 = vunpack.c.h.b16 %v977
    %v2401 = vunpack.c.l.b16 %v978
    %v2402 = vunpack.c.h.b16 %v978
    %v2403 = vunpack.c.l.b16 %v979
    %v2404 = vunpack.c.h.b16 %v979
    %v2405 = vunpack.c.l.b16 %v980
    %v2406 = vunpack.c.h.b16 %v980
    %v2407 = vunpack.c.l.b16 %v981
    %v2408 = vunpack.c.h.b16 %v981
    %v2409 = vunpack.c.l.b16 %v982
    %v2410 = vunpack.c.h.b16 %v982
    %v2411 = vunpack.c.l.b16 %v983
    %v2412 = vunpack.c.h.b16 %v983
    %v2413 = vunpack.c.l.b16 %v984
    %v2414 = vunpack.c.h.b16 %v984
    %v2415 = vunpack.c.l.b16 %v985
    %v2416 = vunpack.c.h.b16 %v985
    %v2417 = vunpack.c.l.b16 %v986
    %v2418 = vunpack.c.h.b16 %v986
    %v2419 = vunpack.c.l.b16 %v987
    %v2420 = vunpack.c.h.b16 %v987
    %v2421 = vunpack.c.l.b16 %v988
    %v2422 = vunpack.c.h.b16 %v988
    %v2423 = vunpack.c.l.b16 %v989
    %v2424 = vunpack.c.h.b16 %v989
    %v2425 = vunpack.c.l.b16 %v990
    %v2426 = vunpack.c.h.b16 %v990
    %v2427 = vunpack.c.l.b16 %v991
    %v2428 = vunpack.c.h.b16 %v991
    %v2429 = vunpack.c.l.b16 %v992
    %v2430 = vunpack.c.h.b16 %v992
    %v2431 = vunpack.c.l.b16 %v993
    %v2432 = vunpack.c.h.b16 %v993
    %v2433 = vunpack.c.l.b16 %v994
    %v2434 = vunpack.c.h.b16 %v994
    %v2435 = vunpack.c.l.b16 %v995
    %v2436 = vunpack.c.h.b16 %v995
    %v2437 = vunpack.c.l.b16 %v996
    %v2438 = vunpack.c.h.b16 %v996
    %v2439 = vunpack.c.l.b16 %v997
    %v2440 = vunpack.c.h.b16 %v997
    %v2441 = vunpack.c.l.b16 %v998
    %v2442 = vunpack.c.h.b16 %v998
    %v2443 = vunpack.c.l.b16 %v999
    %v2444 = vunpack.c.h.b16 %v999
    %v2445 = vunpack.c.l.b16 %v1000
    %v2446 = vunpack.c.h.b16 %v1000
    %v2447 = vunpack.c.l.b16 %v1001
    %v2448 = vunpack.c.h.b16 %v1001
    %v2449 = vunpack.c.l.b16 %v1002
    %v2450 = vunpack.c.h.b16 %v1002
    %v2451 = vunpack.c.l.b16 %v1003
    %v2452 = vunpack.c.h.b16 %v1003
    %v2453 = vunpack.c.l.b16 %v1004
    %v2454 = vunpack.c.h.b16 %v1004
    %v2455 = vunpack.c.l.b16 %v1005
    %v2456 = vunpack.c.h.b16 %v1005
    %v2457 = vunpack.c.l.b16 %v1006
    %v2458 = vunpack.c.h.b16 %v1006
    %v2459 = vunpack.c.l.b16 %v1007
    %v2460 = vunpack.c.h.b16 %v1007
    %v2461 = vunpack.c.l.b16 %v1008
    %v2462 = vunpack.c.h.b16 %v1008
    %v2463 = vunpack.c.l.b16 %v1009
    %v2464 = vunpack.c.h.b16 %v1009
    %v2465 = vunpack.c.l.b16 %v1010
    %v2466 = vunpack.c.h.b16 %v1010
    %v2467 = vunpack.c.l.b16 %v1011
    %v2468 = vunpack.c.h.b16 %v1011
    %v2469 = vunpack.c.l.b16 %v1012
    %v2470 = vunpack.c.h.b16 %v1012
    %v2471 = vunpack.c.l.b16 %v1013
    %v2472 = vunpack.c.h.b16 %v1013
    %v2473 = vunpack.c.l.b16 %v1014
    %v2474 = vunpack.c.h.b16 %v1014
    %v2475 = vunpack.c.l.b16 %v1015
    %v2476 = vunpack.c.h.b16 %v1015
    %v2477 = vunpack.c.l.b16 %v1016
    %v2478 = vunpack.c.h.b16 %v1016
    %v2479 = vunpack.c.l.b16 %v1017
    %v2480 = vunpack.c.h.b16 %v1017
    %v2481 = vunpack.c.l.b16 %v1018
    %v2482 = vunpack.c.h.b16 %v1018
    %v2483 = vunpack.c.l.b16 %v1019
    %v2484 = vunpack.c.h.b16 %v1019
    %v2485 = vunpack.c.l.b16 %v1020
    %v2486 = vunpack.c.h.b16 %v1020
    %v2487 = vunpack.c.l.b16 %v1021
    %v2488 = vunpack.c.h.b16 %v1021
    %v2489 = vunpack.c.l.b16 %v1022
    %v2490 = vunpack.c.h.b16 %v1022
    %v2491 = vunpack.c.l.b16 %v1023
    %v2492 = vunpack.c.h.b16 %v1023
    %v2493 = vunpack.c.l.b16 %v1024
    %v2494 = vunpack.c.h.b16 %v1024
    %v2495 = vunpack.c.l.b16 %v1025
    %v2496 = vunpack.c.h.b16 %v1025
    %v2497 = vunpack.c.l.b16 %v1026
    %v2498 = vunpack.c.h.b16 %v1026
    %v2499 = vunpack.c.l.b16 %v1027
    %v2500 = vunpack.c.h.b16 %v1027
    %v2501 = vunpack.c.l.b16 %v1028
    %v2502 = vunpack.c.h.b16 %v1028
    %v2503 = vunpack.c.l.b16 %v1029
    %v2504 = vunpack.c.h.b16 %v1029
    %v2505 = vunpack.c.l.b16 %v1030
    %v2506 = vunpack.c.h.b16 %v1030
    %v2507 = vunpack.c.l.b16 %v1031
    %v2508 = vunpack.c.h.b16 %v1031
    %v2509 = vunpack.c.l.b16 %v1032
    %v2510 = vunpack.c.h.b16 %v1032
    %v2511 = vunpack.c.l.b16 %v1033
    %v2512 = vunpack.c.h.b16 %v1033
    %v2513 = vunpack.c.l.b16 %v1034
    %v2514 = vunpack.c.h.b16 %v1034
    %v2515 = vunpack.c.l.b16 %v1035
    %v2516 = vunpack.c.h.b16 %v1035
    %v2517 = vunpack.c.l.b16 %v1036
    %v2518 = vunpack.c.h.b16 %v1036
    %v2519 = vunpack.c.l.b16 %v1037
    %v2520 = vunpack.c.h.b16 %v1037
    %v2521 = vunpack.c.l.b16 %v1038
    %v2522 = vunpack.c.h.b16 %v1038
    %v2523 = vunpack.c.l.b16 %v1039
    %v2524 = vunpack.c.h.b16 %v1039
    %v2525 = vunpack.c.l.b16 %v1040
    %v2526 = vunpack.c.h.b16 %v1040
    %v2527 = vunpack.c.l.b16 %v1041
    %v2528 = vunpack.c.h.b16 %v1041
    %v2529 = vunpack.c.l.b16 %v1042
    %v2530 = vunpack.c.h.b16 %v1042
    %v2531 = vunpack.c.l.b16 %v1043
    %v2532 = vunpack.c.h.b16 %v1043
    %v2533 = vunpack.c.l.b16 %v1044
    %v2534 = vunpack.c.h.b16 %v1044
    %v2535 = vunpack.c.l.b16 %v1045
    %v2536 = vunpack.c.h.b16 %v1045
    %v2537 = vunpack.c.l.b16 %v1046
    %v2538 = vunpack.c.h.b16 %v1046
    %v2539 = vunpack.c.l.b16 %v1047
    %v2540 = vunpack.c.h.b16 %v1047
    %v2541 = vunpack.c.l.b16 %v1048
    %v2542 = vunpack.c.h.b16 %v1048
    %v2543 = vunpack.c.l.b16 %v1049
    %v2544 = vunpack.c.h.b16 %v1049
    %v2545 = vunpack.c.l.b16 %v1050
    %v2546 = vunpack.c.h.b16 %v1050
    %v2547 = vunpack.c.l.b16 %v1051
    %v2548 = vunpack.c.h.b16 %v1051
    %v2549 = vunpack.c.l.b16 %v1052
    %v2550 = vunpack.c.h.b16 %v1052
    %v2551 = vunpack.c.l.b16 %v1053
    %v2552 = vunpack.c.h.b16 %v1053
    %v2553 = vunpack.c.l.b16 %v1054
    %v2554 = vunpack.c.h.b16 %v1054
    %v2555 = vunpack.c.l.b16 %v1055
    %v2556 = vunpack.c.h.b16 %v1055
    %v2557 = vunpack.c.l.b16 %v1056
    %v2558 = vunpack.c.h.b16 %v1056
    %v2559 = vunpack.c.l.b16 %v1057
    %v2560 = vunpack.c.h.b16 %v1057
    %v2561 = vunpack.c.l.b16 %v1058
    %v2562 = vunpack.c.h.b16 %v1058
    %v2563 = vunpack.c.l.b16 %v1059
    %v2564 = vunpack.c.h.b16 %v1059
    %v2565 = vunpack.c.l.b16 %v1060
    %v2566 = vunpack.c.h.b16 %v1060
    %v2567 = vunpack.c.l.b16 %v1061
    %v2568 = vunpack.c.h.b16 %v1061
    %v2569 = vunpack.c.l.b16 %v1062
    %v2570 = vunpack.c.h.b16 %v1062
    %v2571 = vunpack.c.l.b16 %v1063
    %v2572 = vunpack.c.h.b16 %v1063
    %v2573 = vunpack.c.l.b16 %v1064
    %v2574 = vunpack.c.h.b16 %v1064
    %v2575 = vunpack.c.l.b16 %v1065
    %v2576 = vunpack.c.h.b16 %v1065
    %v2577 = vunpack.c.l.b16 %v1066
    %v2578 = vunpack.c.h.b16 %v1066
    %v2579 = vunpack.c.l.b16 %v1067
    %v2580 = vunpack.c.h.b16 %v1067
    %v2581 = vunpack.c.l.b16 %v1068
    %v2582 = vunpack.c.h.b16 %v1068
    %v2583 = vunpack.c.l.b16 %v1069
    %v2584 = vunpack.c.h.b16 %v1069
    %v2585 = vunpack.c.l.b16 %v1070
    %v2586 = vunpack.c.h.b16 %v1070
    %v2587 = vunpack.c.l.b16 %v1071
    %v2588 = vunpack.c.h.b16 %v1071
    %v2589 = vunpack.c.l.b16 %v1072
    %v2590 = vunpack.c.h.b16 %v1072
    %v2591 = vunpack.c.l.b16 %v1073
    %v2592 = vunpack.c.h.b16 %v1073
    %v2593 = vunpack.c.l.b16 %v1074
    %v2594 = vunpack.c.h.b16 %v1074
    %v2595 = vunpack.c.l.b16 %v1075
    %v2596 = vunpack.c.h.b16 %v1075
    %v2597 = vunpack.c.l.b16 %v1076
    %v2598 = vunpack.c.h.b16 %v1076
    %v2599 = vunpack.c.l.b16 %v1077
    %v2600 = vunpack.c.h.b16 %v1077
    %v2601 = vunpack.c.l.b16 %v1078
    %v2602 = vunpack.c.h.b16 %v1078
    %v2603 = vunpack.c.l.b16 %v1079
    %v2604 = vunpack.c.h.b16 %v1079
    %v2605 = vunpack.c.l.b16 %v1080
    %v2606 = vunpack.c.h.b16 %v1080
    %v2607 = vunpack.c.l.b16 %v1081
    %v2608 = vunpack.c.h.b16 %v1081
    %v2609 = vunpack.c.l.b16 %v1082
    %v2610 = vunpack.c.h.b16 %v1082
    %v2611 = vunpack.c.l.b16 %v1083
    %v2612 = vunpack.c.h.b16 %v1083
    %v2613 = vunpack.c.l.b16 %v1084
    %v2614 = vunpack.c.h.b16 %v1084
    %v2615 = vunpack.c.l.b16 %v1085
    %v2616 = vunpack.c.h.b16 %v1085
    %v2617 = vunpack.c.l.b16 %v1086
    %v2618 = vunpack.c.h.b16 %v1086
    %v2619 = vunpack.c.l.b16 %v1087
    %v2620 = vunpack.c.h.b16 %v1087
    %v2621 = vunpack.c.l.b16 %v1088
    %v2622 = vunpack.c.h.b16 %v1088
    %v2623 = vunpack.c.l.b16 %v1089
    %v2624 = vunpack.c.h.b16 %v1089
    %v2625 = vunpack.c.l.b16 %v1090
    %v2626 = vunpack.c.h.b16 %v1090
    %v2627 = vunpack.c.l.b16 %v1091
    %v2628 = vunpack.c.h.b16 %v1091
    %v2629 = vunpack.c.l.b16 %v1092
    %v2630 = vunpack.c.h.b16 %v1092
    %v2631 = vunpack.c.l.b16 %v1093
    %v2632 = vunpack.c.h.b16 %v1093
    %v2633 = vunpack.c.l.b16 %v1094
    %v2634 = vunpack.c.h.b16 %v1094
    %v2635 = vunpack.c.l.b16 %v1095
    %v2636 = vunpack.c.h.b16 %v1095
    %v2637 = vunpack.c.l.b16 %v1096
    %v2638 = vunpack.c.h.b16 %v1096
    %v2639 = vunpack.c.l.b16 %v1097
    %v2640 = vunpack.c.h.b16 %v1097
    %v2641 = vunpack.c.l.b16 %v1098
    %v2642 = vunpack.c.h.b16 %v1098
    %v2643 = vunpack.c.l.b16 %v1099
    %v2644 = vunpack.c.h.b16 %v1099
    %v2645 = vunpack.c.l.b16 %v1100
    %v2646 = vunpack.c.h.b16 %v1100
    %v2647 = vpack.c.b16 %v1627, %v1623
    %v2648 = vpack.c.b16 %v1628, %v1624
    %v2649 = vpack.c.b16 %v1629, %v1625
    %v2650 = vpack.c.b16 %v1630, %v1626
    %v2651 = vpack.c.b16 %v1635, %v1631
    %v2652 = vpack.c.b16 %v1636, %v1632
    %v2653 = vpack.c.b16 %v1637, %v1633
    %v2654 = vpack.c.b16 %v1638, %v1634
    %v2655 = vpack.c.b16 %v1643, %v1639
    %v2656 = vpack.c.b16 %v1644, %v1640
    %v2657 = vpack.c.b16 %v1645, %v1641
    %v2658 = vpack.c.b16 %v1646, %v1642
    %v2659 = vpack.c.b16 %v1651, %v1647
    %v2660 = vpack.c.b16 %v1652, %v1648
    %v2661 = vpack.c.b16 %v1653, %v1649
    %v2662 = vpack.c.b16 %v1654, %v1650
    %v2663 = vpack.c.b16 %v1659, %v1655
    %v2664 = vpack.c.b16 %v1660, %v1656
    %v2665 = vpack.c.b16 %v1661, %v1657
    %v2666 = vpack.c.b16 %v1662, %v1658
    %v2667 = vpack.c.b16 %v1667, %v1663
    %v2668 = vpack.c.b16 %v1668, %v1664
    %v2669 = vpack.c.b16 %v1669, %v1665
    %v2670 = vpack.c.b16 %v1670, %v1666
    %v2671 = vpack.c.b16 %v1675, %v1671
    %v2672 = vpack.c.b16 %v1676, %v1672
    %v2673 = vpack.c.b16 %v1677, %v1673
    %v2674 = vpack.c.b16 %v1678, %v1674
    %v2675 = vpack.c.b16 %v1683, %v1679
    %v2676 = vpack.c.b16 %v1684, %v1680
    %v2677 = vpack.c.b16 %v1685, %v1681
    %v2678 = vpack.c.b16 %v1686, %v1682
    %v2679 = vpack.c.b16 %v1691, %v1687
    %v2680 = vpack.c.b16 %v1692, %v1688
    %v2681 = vpack.c.b16 %v1693, %v1689
    %v2682 = vpack.c.b16 %v1694, %v1690
    %v2683 = vpack.c.b16 %v1699, %v1695
    %v2684 = vpack.c.b16 %v1700, %v1696
    %v2685 = vpack.c.b16 %v1701, %v1697
    %v2686 = vpack.c.b16 %v1702, %v1698
    %v2687 = vpack.c.b16 %v1707, %v1703
    %v2688 = vpack.c.b16 %v1708, %v1704
    %v2689 = vpack.c.b16 %v1709, %v1705
    %v2690 = vpack.c.b16 %v1710, %v1706
    %v2691 = vpack.c.b16 %v1715, %v1711
    %v2692 = vpack.c.b16 %v1716, %v1712
    %v2693 = vpack.c.b16 %v1717, %v1713
    %v2694 = vpack.c.b16 %v1718, %v1714
    %v2695 = vpack.c.b16 %v1723, %v1719
    %v2696 = vpack.c.b16 %v1724, %v1720
    %v2697 = vpack.c.b16 %v1725, %v1721
    %v2698 = vpack.c.b16 %v1726, %v1722
    %v2699 = vpack.c.b16 %v1731, %v1727
    %v2700 = vpack.c.b16 %v1732, %v1728
    %v2701 = vpack.c.b16 %v1733, %v1729
    %v2702 = vpack.c.b16 %v1734, %v1730
    %v2703 = vpack.c.b16 %v1739, %v1735
    %v2704 = vpack.c.b16 %v1740, %v1736
    %v2705 = vpack.c.b16 %v1741, %v1737
    %v2706 = vpack.c.b16 %v1742, %v1738
    %v2707 = vpack.c.b16 %v1747, %v1743
    %v2708 = vpack.c.b16 %v1748, %v1744
    %v2709 = vpack.c.b16 %v1749, %v1745
    %v2710 = vpack.c.b16 %v1750, %v1746
    %v2711 = vpack.c.b16 %v1755, %v1751
    %v2712 = vpack.c.b16 %v1756, %v1752
    %v2713 = vpack.c.b16 %v1757, %v1753
    %v2714 = vpack.c.b16 %v1758, %v1754
    %v2715 = vpack.c.b16 %v1763, %v1759
    %v2716 = vpack.c.b16 %v1764, %v1760
    %v2717 = vpack.c.b16 %v1765, %v1761
    %v2718 = vpack.c.b16 %v1766, %v1762
    %v2719 = vpack.c.b16 %v1771, %v1767
    %v2720 = vpack.c.b16 %v1772, %v1768
    %v2721 = vpack.c.b16 %v1773, %v1769
    %v2722 = vpack.c.b16 %v1774, %v1770
    %v2723 = vpack.c.b16 %v1779, %v1775
    %v2724 = vpack.c.b16 %v1780, %v1776
    %v2725 = vpack.c.b16 %v1781, %v1777
    %v2726 = vpack.c.b16 %v1782, %v1778
    %v2727 = vpack.c.b16 %v1787, %v1783
    %v2728 = vpack.c.b16 %v1788, %v1784
    %v2729 = vpack.c.b16 %v1789, %v1785
    %v2730 = vpack.c.b16 %v1790, %v1786
    %v2731 = vpack.c.b16 %v1795, %v1791
    %v2732 = vpack.c.b16 %v1796, %v1792
    %v2733 = vpack.c.b16 %v1797, %v1793
    %v2734 = vpack.c.b16 %v1798, %v1794
    %v2735 = vpack.c.b16 %v1803, %v1799
    %v2736 = vpack.c.b16 %v1804, %v1800
    %v2737 = vpack.c.b16 %v1805, %v1801
    %v2738 = vpack.c.b16 %v1806, %v1802
    %v2739 = vpack.c.b16 %v1811, %v1807
    %v2740 = vpack.c.b16 %v1812, %v1808
    %v2741 = vpack.c.b16 %v1813, %v1809
    %v2742 = vpack.c.b16 %v1814, %v1810
    %v2743 = vpack.c.b16 %v1819, %v1815
    %v2744 = vpack.c.b16 %v1820, %v1816
    %v2745 = vpack.c.b16 %v1821, %v1817
    %v2746 = vpack.c.b16 %v1822, %v1818
    %v2747 = vpack.c.b16 %v1827, %v1823
    %v2748 = vpack.c.b16 %v1828, %v1824
    %v2749 = vpack.c.b16 %v1829, %v1825
    %v2750 = vpack.c.b16 %v1830, %v1826
    %v2751 = vpack.c.b16 %v1835, %v1831
    %v2752 = vpack.c.b16 %v1836, %v1832
    %v2753 = vpack.c.b16 %v1837, %v1833
    %v2754 = vpack.c.b16 %v1838, %v1834
    %v2755 = vpack.c.b16 %v1843, %v1839
    %v2756 = vpack.c.b16 %v1844, %v1840
    %v2757 = vpack.c.b16 %v1845, %v1841
    %v2758 = vpack.c.b16 %v1846, %v1842
    %v2759 = vpack.c.b16 %v1851, %v1847
    %v2760 = vpack.c.b16 %v1852, %v1848
    %v2761 = vpack.c.b16 %v1853, %v1849
    %v2762 = vpack.c.b16 %v1854, %v1850
    %v2763 = vpack.c.b16 %v1859, %v1855
    %v2764 = vpack.c.b16 %v1860, %v1856
    %v2765 = vpack.c.b16 %v1861, %v1857
    %v2766 = vpack.c.b16 %v1862, %v1858
    %v2767 = vpack.c.b16 %v1867, %v1863
    %v2768 = vpack.c.b16 %v1868, %v1864
    %v2769 = vpack.c.b16 %v1869, %v1865
    %v2770 = vpack.c.b16 %v1870, %v1866
    %v2771 = vpack.c.b16 %v1875, %v1871
    %v2772 = vpack.c.b16 %v1876, %v1872
    %v2773 = vpack.c.b16 %v1877, %v1873
    %v2774 = vpack.c.b16 %v1878, %v1874
    %v2775 = vpack.c.b16 %v1883, %v1879
    %v2776 = vpack.c.b16 %v1884, %v1880
    %v2777 = vpack.c.b16 %v1885, %v1881
    %v2778 = vpack.c.b16 %v1886, %v1882
    %v2779 = vpack.c.b16 %v1891, %v1887
    %v2780 = vpack.c.b16 %v1892, %v1888
    %v2781 = vpack.c.b16 %v1893, %v1889
    %v2782 = vpack.c.b16 %v1894, %v1890
    %v2783 = vpack.c.b16 %v1899, %v1895
    %v2784 = vpack.c.b16 %v1900, %v1896
    %v2785 = vpack.c.b16 %v1901, %v1897
    %v2786 = vpack.c.b16 %v1902, %v1898
    %v2787 = vpack.c.b16 %v1907, %v1903
    %v2788 = vpack.c.b16 %v1908, %v1904
    %v2789 = vpack.c.b16 %v1909, %v1905
    %v2790 = vpack.c.b16 %v1910, %v1906
    %v2791 = vpack.c.b16 %v1915, %v1911
    %v2792 = vpack.c.b16 %v1916, %v1912
    %v2793 = vpack.c.b16 %v1917, %v1913
    %v2794 = vpack.c.b16 %v1918, %v1914
    %v2795 = vpack.c.b16 %v1923, %v1919
    %v2796 = vpack.c.b16 %v1924, %v1920
    %v2797 = vpack.c.b16 %v1925, %v1921
    %v2798 = vpack.c.b16 %v1926, %v1922
    %v2799 = vpack.c.b16 %v1931, %v1927
    %v2800 = vpack.c.b16 %v1932, %v1928
    %v2801 = vpack.c.b16 %v1933, %v1929
    %v2802 = vpack.c.b16 %v1934, %v1930
    %v2803 = vpack.c.b16 %v1939, %v1935
    %v2804 = vpack.c.b16 %v1940, %v1936
    %v2805 = vpack.c.b16 %v1941, %v1937
    %v2806 = vpack.c.b16 %v1942, %v1938
    %v2807 = vpack.c.b16 %v1947, %v1943
    %v2808 = vpack.c.b16 %v1948, %v1944
    %v2809 = vpack.c.b16 %v1949, %v1945
    %v2810 = vpack.c.b16 %v1950, %v1946
    %v2811 = vpack.c.b16 %v1955, %v1951
    %v2812 = vpack.c.b16 %v1956, %v1952
    %v2813 = vpack.c.b16 %v1957, %v1953
    %v2814 = vpack.c.b16 %v1958, %v1954
    %v2815 = vpack.c.b16 %v1963, %v1959
    %v2816 = vpack.c.b16 %v1964, %v1960
    %v2817 = vpack.c.b16 %v1965, %v1961
    %v2818 = vpack.c.b16 %v1966, %v1962
    %v2819 = vpack.c.b16 %v1971, %v1967
    %v2820 = vpack.c.b16 %v1972, %v1968
    %v2821 = vpack.c.b16 %v1973, %v1969
    %v2822 = vpack.c.b16 %v1974, %v1970
    %v2823 = vpack.c.b16 %v1979, %v1975
    %v2824 = vpack.c.b16 %v1980, %v1976
    %v2825 = vpack.c.b16 %v1981, %v1977
    %v2826 = vpack.c.b16 %v1982, %v1978
    %v2827 = vpack.c.b16 %v1987, %v1983
    %v2828 = vpack.c.b16 %v1988, %v1984
    %v2829 = vpack.c.b16 %v1989, %v1985
    %v2830 = vpack.c.b16 %v1990, %v1986
    %v2831 = vpack.c.b16 %v1995, %v1991
    %v2832 = vpack.c.b16 %v1996, %v1992
    %v2833 = vpack.c.b16 %v1997, %v1993
    %v2834 = vpack.c.b16 %v1998, %v1994
    %v2835 = vpack.c.b16 %v2003, %v1999
    %v2836 = vpack.c.b16 %v2004, %v2000
    %v2837 = vpack.c.b16 %v2005, %v2001
    %v2838 = vpack.c.b16 %v2006, %v2002
    %v2839 = vpack.c.b16 %v2011, %v2007
    %v2840 = vpack.c.b16 %v2012, %v2008
    %v2841 = vpack.c.b16 %v2013, %v2009
    %v2842 = vpack.c.b16 %v2014, %v2010
    %v2843 = vpack.c.b16 %v2019, %v2015
    %v2844 = vpack.c.b16 %v2020, %v2016
    %v2845 = vpack.c.b16 %v2021, %v2017
    %v2846 = vpack.c.b16 %v2022, %v2018
    %v2847 = vpack.c.b16 %v2027, %v2023
    %v2848 = vpack.c.b16 %v2028, %v2024
    %v2849 = vpack.c.b16 %v2029, %v2025
    %v2850 = vpack.c.b16 %v2030, %v2026
    %v2851 = vpack.c.b16 %v2035, %v2031
    %v2852 = vpack.c.b16 %v2036, %v2032
    %v2853 = vpack.c.b16 %v2037, %v2033
    %v2854 = vpack.c.b16 %v2038, %v2034
    %v2855 = vpack.c.b16 %v2043, %v2039
    %v2856 = vpack.c.b16 %v2044, %v2040
    %v2857 = vpack.c.b16 %v2045, %v2041
    %v2858 = vpack.c.b16 %v2046, %v2042
    %v2859 = vpack.c.b16 %v2051, %v2047
    %v2860 = vpack.c.b16 %v2052, %v2048
    %v2861 = vpack.c.b16 %v2053, %v2049
    %v2862 = vpack.c.b16 %v2054, %v2050
    %v2863 = vpack.c.b16 %v2059, %v2055
    %v2864 = vpack.c.b16 %v2060, %v2056
    %v2865 = vpack.c.b16 %v2061, %v2057
    %v2866 = vpack.c.b16 %v2062, %v2058
    %v2867 = vpack.c.b16 %v2067, %v2063
    %v2868 = vpack.c.b16 %v2068, %v2064
    %v2869 = vpack.c.b16 %v2069, %v2065
    %v2870 = vpack.c.b16 %v2070, %v2066
    %v2871 = vpack.c.b16 %v2075, %v2071
    %v2872 = vpack.c.b16 %v2076, %v2072
    %v2873 = vpack.c.b16 %v2077, %v2073
    %v2874 = vpack.c.b16 %v2078, %v2074
    %v2875 = vpack.c.b16 %v2083, %v2079
    %v2876 = vpack.c.b16 %v2084, %v2080
    %v2877 = vpack.c.b16 %v2085, %v2081
    %v2878 = vpack.c.b16 %v2086, %v2082
    %v2879 = vpack.c.b16 %v2091, %v2087
    %v2880 = vpack.c.b16 %v2092, %v2088
    %v2881 = vpack.c.b16 %v2093, %v2089
    %v2882 = vpack.c.b16 %v2094, %v2090
    %v2883 = vpack.c.b16 %v2099, %v2095
    %v2884 = vpack.c.b16 %v2100, %v2096
    %v2885 = vpack.c.b16 %v2101, %v2097
    %v2886 = vpack.c.b16 %v2102, %v2098
    %v2887 = vpack.c.b16 %v2107, %v2103
    %v2888 = vpack.c.b16 %v2108, %v2104
    %v2889 = vpack.c.b16 %v2109, %v2105
    %v2890 = vpack.c.b16 %v2110, %v2106
    %v2891 = vpack.c.b16 %v2115, %v2111
    %v2892 = vpack.c.b16 %v2116, %v2112
    %v2893 = vpack.c.b16 %v2117, %v2113
    %v2894 = vpack.c.b16 %v2118, %v2114
    %v2895 = vpack.c.b16 %v2123, %v2119
    %v2896 = vpack.c.b16 %v2124, %v2120
    %v2897 = vpack.c.b16 %v2125, %v2121
    %v2898 = vpack.c.b16 %v2126, %v2122
    %v2899 = vpack.c.b16 %v2131, %v2127
    %v2900 = vpack.c.b16 %v2132, %v2128
    %v2901 = vpack.c.b16 %v2133, %v2129
    %v2902 = vpack.c.b16 %v2134, %v2130
    %v2903 = vpack.c.b16 %v2139, %v2135
    %v2904 = vpack.c.b16 %v2140, %v2136
    %v2905 = vpack.c.b16 %v2141, %v2137
    %v2906 = vpack.c.b16 %v2142, %v2138
    %v2907 = vpack.c.b16 %v2147, %v2143
    %v2908 = vpack.c.b16 %v2148, %v2144
    %v2909 = vpack.c.b16 %v2149, %v2145
    %v2910 = vpack.c.b16 %v2150, %v2146
    %v2911 = vpack.c.b16 %v2155, %v2151
    %v2912 = vpack.c.b16 %v2156, %v2152
    %v2913 = vpack.c.b16 %v2157, %v2153
    %v2914 = vpack.c.b16 %v2158, %v2154
    %v2915 = vpack.c.b16 %v2163, %v2159
    %v2916 = vpack.c.b16 %v2164, %v2160
    %v2917 = vpack.c.b16 %v2165, %v2161
    %v2918 = vpack.c.b16 %v2166, %v2162
    %v2919 = vpack.c.b16 %v2171, %v2167
    %v2920 = vpack.c.b16 %v2172, %v2168
    %v2921 = vpack.c.b16 %v2173, %v2169
    %v2922 = vpack.c.b16 %v2174, %v2170
    %v2923 = vpack.c.b16 %v2179, %v2175
    %v2924 = vpack.c.b16 %v2180, %v2176
    %v2925 = vpack.c.b16 %v2181, %v2177
    %v2926 = vpack.c.b16 %v2182, %v2178
    %v2927 = vpack.c.b16 %v2187, %v2183
    %v2928 = vpack.c.b16 %v2188, %v2184
    %v2929 = vpack.c.b16 %v2189, %v2185
    %v2930 = vpack.c.b16 %v2190, %v2186
    %v2931 = vpack.c.b16 %v2195, %v2191
    %v2932 = vpack.c.b16 %v2196, %v2192
    %v2933 = vpack.c.b16 %v2197, %v2193
    %v2934 = vpack.c.b16 %v2198, %v2194
    %v2935 = vpack.c.b16 %v2203, %v2199
    %v2936 = vpack.c.b16 %v2204, %v2200
    %v2937 = vpack.c.b16 %v2205, %v2201
    %v2938 = vpack.c.b16 %v2206, %v2202
    %v2939 = vpack.c.b16 %v2211, %v2207
    %v2940 = vpack.c.b16 %v2212, %v2208
    %v2941 = vpack.c.b16 %v2213, %v2209
    %v2942 = vpack.c.b16 %v2214, %v2210
    %v2943 = vpack.c.b16 %v2219, %v2215
    %v2944 = vpack.c.b16 %v2220, %v2216
    %v2945 = vpack.c.b16 %v2221, %v2217
    %v2946 = vpack.c.b16 %v2222, %v2218
    %v2947 = vpack.c.b16 %v2227, %v2223
    %v2948 = vpack.c.b16 %v2228, %v2224
    %v2949 = vpack.c.b16 %v2229, %v2225
    %v2950 = vpack.c.b16 %v2230, %v2226
    %v2951 = vpack.c.b16 %v2235, %v2231
    %v2952 = vpack.c.b16 %v2236, %v2232
    %v2953 = vpack.c.b16 %v2237, %v2233
    %v2954 = vpack.c.b16 %v2238, %v2234
    %v2955 = vpack.c.b16 %v2243, %v2239
    %v2956 = vpack.c.b16 %v2244, %v2240
    %v2957 = vpack.c.b16 %v2245, %v2241
    %v2958 = vpack.c.b16 %v2246, %v2242
    %v2959 = vpack.c.b16 %v2251, %v2247
    %v2960 = vpack.c.b16 %v2252, %v2248
    %v2961 = vpack.c.b16 %v2253, %v2249
    %v2962 = vpack.c.b16 %v2254, %v2250
    %v2963 = vpack.c.b16 %v2259, %v2255
    %v2964 = vpack.c.b16 %v2260, %v2256
    %v2965 = vpack.c.b16 %v2261, %v2257
    %v2966 = vpack.c.b16 %v2262, %v2258
    %v2967 = vpack.c.b16 %v2267, %v2263
    %v2968 = vpack.c.b16 %v2268, %v2264
    %v2969 = vpack.c.b16 %v2269, %v2265
    %v2970 = vpack.c.b16 %v2270, %v2266
    %v2971 = vpack.c.b16 %v2275, %v2271
    %v2972 = vpack.c.b16 %v2276, %v2272
    %v2973 = vpack.c.b16 %v2277, %v2273
    %v2974 = vpack.c.b16 %v2278, %v2274
    %v2975 = vpack.c.b16 %v2283, %v2279
    %v2976 = vpack.c.b16 %v2284, %v2280
    %v2977 = vpack.c.b16 %v2285, %v2281
    %v2978 = vpack.c.b16 %v2286, %v2282
    %v2979 = vpack.c.b16 %v2291, %v2287
    %v2980 = vpack.c.b16 %v2292, %v2288
    %v2981 = vpack.c.b16 %v2293, %v2289
    %v2982 = vpack.c.b16 %v2294, %v2290
    %v2983 = vpack.c.b16 %v2299, %v2295
    %v2984 = vpack.c.b16 %v2300, %v2296
    %v2985 = vpack.c.b16 %v2301, %v2297
    %v2986 = vpack.c.b16 %v2302, %v2298
    %v2987 = vpack.c.b16 %v2307, %v2303
    %v2988 = vpack.c.b16 %v2308, %v2304
    %v2989 = vpack.c.b16 %v2309, %v2305
    %v2990 = vpack.c.b16 %v2310, %v2306
    %v2991 = vpack.c.b16 %v2315, %v2311
    %v2992 = vpack.c.b16 %v2316, %v2312
    %v2993 = vpack.c.b16 %v2317, %v2313
    %v2994 = vpack.c.b16 %v2318, %v2314
    %v2995 = vpack.c.b16 %v2323, %v2319
    %v2996 = vpack.c.b16 %v2324, %v2320
    %v2997 = vpack.c.b16 %v2325, %v2321
    %v2998 = vpack.c.b16 %v2326, %v2322
    %v2999 = vpack.c.b16 %v2331, %v2327
    %v3000 = vpack.c.b16 %v2332, %v2328
    %v3001 = vpack.c.b16 %v2333, %v2329
    %v3002 = vpack.c.b16 %v2334, %v2330
    %v3003 = vpack.c.b16 %v2339, %v2335
    %v3004 = vpack.c.b16 %v2340, %v2336
    %v3005 = vpack.c.b16 %v2341, %v2337
    %v3006 = vpack.c.b16 %v2342, %v2338
    %v3007 = vpack.c.b16 %v2347, %v2343
    %v3008 = vpack.c.b16 %v2348, %v2344
    %v3009 = vpack.c.b16 %v2349, %v2345
    %v3010 = vpack.c.b16 %v2350, %v2346
    %v3011 = vpack.c.b16 %v2355, %v2351
    %v3012 = vpack.c.b16 %v2356, %v2352
    %v3013 = vpack.c.b16 %v2357, %v2353
    %v3014 = vpack.c.b16 %v2358, %v2354
    %v3015 = vpack.c.b16 %v2363, %v2359
    %v3016 = vpack.c.b16 %v2364, %v2360
    %v3017 = vpack.c.b16 %v2365, %v2361
    %v3018 = vpack.c.b16 %v2366, %v2362
    %v3019 = vpack.c.b16 %v2371, %v2367
    %v3020 = vpack.c.b16 %v2372, %v2368
    %v3021 = vpack.c.b16 %v2373, %v2369
    %v3022 = vpack.c.b16 %v2374, %v2370
    %v3023 = vpack.c.b16 %v2379, %v2375
    %v3024 = vpack.c.b16 %v2380, %v2376
    %v3025 = vpack.c.b16 %v2381, %v2377
    %v3026 = vpack.c.b16 %v2382, %v2378
    %v3027 = vpack.c.b16 %v2387, %v2383
    %v3028 = vpack.c.b16 %v2388, %v2384
    %v3029 = vpack.c.b16 %v2389, %v2385
    %v3030 = vpack.c.b16 %v2390, %v2386
    %v3031 = vpack.c.b16 %v2395, %v2391
    %v3032 = vpack.c.b16 %v2396, %v2392
    %v3033 = vpack.c.b16 %v2397, %v2393
    %v3034 = vpack.c.b16 %v2398, %v2394
    %v3035 = vpack.c.b16 %v2403, %v2399
    %v3036 = vpack.c.b16 %v2404, %v2400
    %v3037 = vpack.c.b16 %v2405, %v2401
    %v3038 = vpack.c.b16 %v2406, %v2402
    %v3039 = vpack.c.b16 %v2411, %v2407
    %v3040 = vpack.c.b16 %v2412, %v2408
    %v3041 = vpack.c.b16 %v2413, %v2409
    %v3042 = vpack.c.b16 %v2414, %v2410
    %v3043 = vpack.c.b16 %v2419, %v2415
    %v3044 = vpack.c.b16 %v2420, %v2416
    %v3045 = vpack.c.b16 %v2421, %v2417
    %v3046 = vpack.c.b16 %v2422, %v2418
    %v3047 = vpack.c.b16 %v2427, %v2423
    %v3048 = vpack.c.b16 %v2428, %v2424
    %v3049 = vpack.c.b16 %v2429, %v2425
    %v3050 = vpack.c.b16 %v2430, %v2426
    %v3051 = vpack.c.b16 %v2435, %v2431
    %v3052 = vpack.c.b16 %v2436, %v2432
    %v3053 = vpack.c.b16 %v2437, %v2433
    %v3054 = vpack.c.b16 %v2438, %v2434
    %v3055 = vpack.c.b16 %v2443, %v2439
    %v3056 = vpack.c.b16 %v2444, %v2440
    %v3057 = vpack.c.b16 %v2445, %v2441
    %v3058 = vpack.c.b16 %v2446, %v2442
    %v3059 = vpack.c.b16 %v2451, %v2447
    %v3060 = vpack.c.b16 %v2452, %v2448
    %v3061 = vpack.c.b16 %v2453, %v2449
    %v3062 = vpack.c.b16 %v2454, %v2450
    %v3063 = vpack.c.b16 %v2459, %v2455
    %v3064 = vpack.c.b16 %v2460, %v2456
    %v3065 = vpack.c.b16 %v2461, %v2457
    %v3066 = vpack.c.b16 %v2462, %v2458
    %v3067 = vpack.c.b16 %v2467, %v2463
    %v3068 = vpack.c.b16 %v2468, %v2464
    %v3069 = vpack.c.b16 %v2469, %v2465
    %v3070 = vpack.c.b16 %v2470, %v2466
    %v3071 = vpack.c.b16 %v2475, %v2471
    %v3072 = vpack.c.b16 %v2476, %v2472
    %v3073 = vpack.c.b16 %v2477, %v2473
    %v3074 = vpack.c.b16 %v2478, %v2474
    %v3075 = vpack.c.b16 %v2483, %v2479
    %v3076 = vpack.c.b16 %v2484, %v2480
    %v3077 = vpack.c.b16 %v2485, %v2481
    %v3078 = vpack.c.b16 %v2486, %v2482
    %v3079 = vpack.c.b16 %v2491, %v2487
    %v3080 = vpack.c.b16 %v2492, %v2488
    %v3081 = vpack.c.b16 %v2493, %v2489
    %v3082 = vpack.c.b16 %v2494, %v2490
    %v3083 = vpack.c.b16 %v2499, %v2495
    %v3084 = vpack.c.b16 %v2500, %v2496
    %v3085 = vpack.c.b16 %v2501, %v2497
    %v3086 = vpack.c.b16 %v2502, %v2498
    %v3087 = vpack.c.b16 %v2507, %v2503
    %v3088 = vpack.c.b16 %v2508, %v2504
    %v3089 = vpack.c.b16 %v2509, %v2505
    %v3090 = vpack.c.b16 %v2510, %v2506
    %v3091 = vpack.c.b16 %v2515, %v2511
    %v3092 = vpack.c.b16 %v2516, %v2512
    %v3093 = vpack.c.b16 %v2517, %v2513
    %v3094 = vpack.c.b16 %v2518, %v2514
    %v3095 = vpack.c.b16 %v2523, %v2519
    %v3096 = vpack.c.b16 %v2524, %v2520
    %v3097 = vpack.c.b16 %v2525, %v2521
    %v3098 = vpack.c.b16 %v2526, %v2522
    %v3099 = vpack.c.b16 %v2531, %v2527
    %v3100 = vpack.c.b16 %v2532, %v2528
    %v3101 = vpack.c.b16 %v2533, %v2529
    %v3102 = vpack.c.b16 %v2534, %v2530
    %v3103 = vpack.c.b16 %v2539, %v2535
    %v3104 = vpack.c.b16 %v2540, %v2536
    %v3105 = vpack.c.b16 %v2541, %v2537
    %v3106 = vpack.c.b16 %v2542, %v2538
    %v3107 = vpack.c.b16 %v2547, %v2543
    %v3108 = vpack.c.b16 %v2548, %v2544
    %v3109 = vpack.c.b16 %v2549, %v2545
    %v3110 = vpack.c.b16 %v2550, %v2546
    %v3111 = vpack.c.b16 %v2555, %v2551
    %v3112 = vpack.c.b16 %v2556, %v2552
    %v3113 = vpack.c.b16 %v2557, %v2553
    %v3114 = vpack.c.b16 %v2558, %v2554
    %v3115 = vpack.c.b16 %v2563, %v2559
    %v3116 = vpack.c.b16 %v2564, %v2560
    %v3117 = vpack.c.b16 %v2565, %v2561
    %v3118 = vpack.c.b16 %v2566, %v2562
    %v3119 = vpack.c.b16 %v2571, %v2567
    %v3120 = vpack.c.b16 %v2572, %v2568
    %v3121 = vpack.c.b16 %v2573, %v2569
    %v3122 = vpack.c.b16 %v2574, %v2570
    %v3123 = vpack.c.b16 %v2579, %v2575
    %v3124 = vpack.c.b16 %v2580, %v2576
    %v3125 = vpack.c.b16 %v2581, %v2577
    %v3126 = vpack.c.b16 %v2582, %v2578
    %v3127 = vpack.c.b16 %v2587, %v2583
    %v3128 = vpack.c.b16 %v2588, %v2584
    %v3129 = vpack.c.b16 %v2589, %v2585
    %v3130 = vpack.c.b16 %v2590, %v2586
    %v3131 = vpack.c.b16 %v2595, %v2591
    %v3132 = vpack.c.b16 %v2596, %v2592
    %v3133 = vpack.c.b16 %v2597, %v2593
    %v3134 = vpack.c.b16 %v2598, %v2594
    %v3135 = vpack.c.b16 %v2603, %v2599
    %v3136 = vpack.c.b16 %v2604, %v2600
    %v3137 = vpack.c.b16 %v2605, %v2601
    %v3138 = vpack.c.b16 %v2606, %v2602
    %v3139 = vpack.c.b16 %v2611, %v2607
    %v3140 = vpack.c.b16 %v2612, %v2608
    %v3141 = vpack.c.b16 %v2613, %v2609
    %v3142 = vpack.c.b16 %v2614, %v2610
    %v3143 = vpack.c.b16 %v2619, %v2615
    %v3144 = vpack.c.b16 %v2620, %v2616
    %v3145 = vpack.c.b16 %v2621, %v2617
    %v3146 = vpack.c.b16 %v2622, %v2618
    %v3147 = vpack.c.b16 %v2627, %v2623
    %v3148 = vpack.c.b16 %v2628, %v2624
    %v3149 = vpack.c.b16 %v2629, %v2625
    %v3150 = vpack.c.b16 %v2630, %v2626
    %v3151 = vpack.c.b16 %v2635, %v2631
    %v3152 = vpack.c.b16 %v2636, %v2632
    %v3153 = vpack.c.b16 %v2637, %v2633
    %v3154 = vpack.c.b16 %v2638, %v2634
    %v3155 = vpack.c.b16 %v2643, %v2639
    %v3156 = vpack.c.b16 %v2644, %v2640
    %v3157 = vpack.c.b16 %v2645, %v2641
    %v3158 = vpack.c.b16 %v2646, %v2642
    %3671 = vmatpush.bf16.msra.mxu0 %v2675
    %3672 = vmatpush.bf16.msra.mxu0 %v2671
    %3673 = vmatpush.bf16.msra.mxu0 %v2667
    %3674 = vmatpush.bf16.msra.mxu0 %v2663
    %3675 = vmatpush.bf16.msra.mxu0 %v2659
    %3676 = vmatpush.bf16.msra.mxu0 %v2655
    %3677 = vmatpush.bf16.msra.mxu0 %v2651
    %3678 = vmatpush.bf16.msra.mxu0 %v2647
    %3679 = vmatmul.bf16.gmra.mxu0 %v477
    %v3680 = vpop.f32.mrf.mxu0
    %v3681 = vadd.f32 %v1103, %v3680
    %v3682 = vpop.f32.mrf.mxu0
    %v3683 = vadd.f32 %v1103, %v3682
    %3684 = vmatmul.bf16.gmra.mxu0 %v557
    %v3685 = vpop.f32.mrf.mxu0
    %v3686 = vadd.f32 %v1103, %v3685
    %v3687 = vpop.f32.mrf.mxu0
    %v3688 = vadd.f32 %v1103, %v3687
    %3689 = vdwg.mxu0
    %3690 = vmatpush.bf16.msra.mxu0 %v2707
    %3691 = vmatpush.bf16.msra.mxu0 %v2703
    %3692 = vmatpush.bf16.msra.mxu0 %v2699
    %3693 = vmatpush.bf16.msra.mxu0 %v2695
    %3694 = vmatpush.bf16.msra.mxu0 %v2691
    %3695 = vmatpush.bf16.msra.mxu0 %v2687
    %3696 = vmatpush.bf16.msra.mxu0 %v2683
    %3697 = vmatpush.bf16.msra.mxu0 %v2679
    %3698 = vmatmul.bf16.gmra.mxu0 %v478
    %v3699 = vpop.f32.mrf.mxu0
    %v3700 = vadd.f32 %v3681, %v3699
    %v3701 = vpop.f32.mrf.mxu0
    %v3702 = vadd.f32 %v3683, %v3701
    %3703 = vmatmul.bf16.gmra.mxu0 %v558
    %v3704 = vpop.f32.mrf.mxu0
    %v3705 = vadd.f32 %v3686, %v3704
    %v3706 = vpop.f32.mrf.mxu0
    %v3707 = vadd.f32 %v3688, %v3706
    %3708 = vdwg.mxu0
    %3709 = vmatpush.bf16.msra.mxu0 %v2739
    %3710 = vmatpush.bf16.msra.mxu0 %v2735
    %3711 = vmatpush.bf16.msra.mxu0 %v2731
    %3712 = vmatpush.bf16.msra.mxu0 %v2727
    %3713 = vmatpush.bf16.msra.mxu0 %v2723
    %3714 = vmatpush.bf16.msra.mxu0 %v2719
    %3715 = vmatpush.bf16.msra.mxu0 %v2715
    %3716 = vmatpush.bf16.msra.mxu0 %v2711
    %3717 = vmatmul.bf16.gmra.mxu0 %v479
    %v3718 = vpop.f32.mrf.mxu0
    %v3719 = vadd.f32 %v3700, %v3718
    %v3720 = vpop.f32.mrf.mxu0
    %v3721 = vadd.f32 %v3702, %v3720
    %3722 = vmatmul.bf16.gmra.mxu0 %v559
    %v3723 = vpop.f32.mrf.mxu0
    %v3724 = vadd.f32 %v3705, %v3723
    %v3725 = vpop.f32.mrf.mxu0
    %v3726 = vadd.f32 %v3707, %v3725
    %3727 = vdwg.mxu0
    %3728 = vmatpush.bf16.msra.mxu0 %v2771
    %3729 = vmatpush.bf16.msra.mxu0 %v2767
    %3730 = vmatpush.bf16.msra.mxu0 %v2763
    %3731 = vmatpush.bf16.msra.mxu0 %v2759
    %3732 = vmatpush.bf16.msra.mxu0 %v2755
    %3733 = vmatpush.bf16.msra.mxu0 %v2751
    %3734 = vmatpush.bf16.msra.mxu0 %v2747
    %3735 = vmatpush.bf16.msra.mxu0 %v2743
    %3736 = vmatmul.bf16.gmra.mxu0 %v480
    %v3737 = vpop.f32.mrf.mxu0
    %v3738 = vadd.f32 %v3719, %v3737
    %v3739 = vpop.f32.mrf.mxu0
    %v3740 = vadd.f32 %v3721, %v3739
    %3741 = vmatmul.bf16.gmra.mxu0 %v560
    %v3742 = vpop.f32.mrf.mxu0
    %v3743 = vadd.f32 %v3724, %v3742
    %v3744 = vpop.f32.mrf.mxu0
    %v3745 = vadd.f32 %v3726, %v3744
    %3746 = vdwg.mxu0
    %3747 = vmatpush.bf16.msra.mxu0 %v2803
    %3748 = vmatpush.bf16.msra.mxu0 %v2799
    %3749 = vmatpush.bf16.msra.mxu0 %v2795
    %3750 = vmatpush.bf16.msra.mxu0 %v2791
    %3751 = vmatpush.bf16.msra.mxu0 %v2787
    %3752 = vmatpush.bf16.msra.mxu0 %v2783
    %3753 = vmatpush.bf16.msra.mxu0 %v2779
    %3754 = vmatpush.bf16.msra.mxu0 %v2775
    %3755 = vmatmul.bf16.gmra.mxu0 %v481
    %v3756 = vpop.f32.mrf.mxu0
    %v3757 = vadd.f32 %v3738, %v3756
    %v3758 = vpop.f32.mrf.mxu0
    %v3759 = vadd.f32 %v3740, %v3758
    %3760 = vmatmul.bf16.gmra.mxu0 %v561
    %v3761 = vpop.f32.mrf.mxu0
    %v3762 = vadd.f32 %v3743, %v3761
    %v3763 = vpop.f32.mrf.mxu0
    %v3764 = vadd.f32 %v3745, %v3763
    %3765 = vdwg.mxu0
    %3766 = vmatpush.bf16.msra.mxu0 %v2835
    %3767 = vmatpush.bf16.msra.mxu0 %v2831
    %3768 = vmatpush.bf16.msra.mxu0 %v2827
    %3769 = vmatpush.bf16.msra.mxu0 %v2823
    %3770 = vmatpush.bf16.msra.mxu0 %v2819
    %3771 = vmatpush.bf16.msra.mxu0 %v2815
    %3772 = vmatpush.bf16.msra.mxu0 %v2811
    %3773 = vmatpush.bf16.msra.mxu0 %v2807
    %3774 = vmatmul.bf16.gmra.mxu0 %v482
    %v3775 = vpop.f32.mrf.mxu0
    %v3776 = vadd.f32 %v3757, %v3775
    %v3777 = vpop.f32.mrf.mxu0
    %v3778 = vadd.f32 %v3759, %v3777
    %3779 = vmatmul.bf16.gmra.mxu0 %v562
    %v3780 = vpop.f32.mrf.mxu0
    %v3781 = vadd.f32 %v3762, %v3780
    %v3782 = vpop.f32.mrf.mxu0
    %v3783 = vadd.f32 %v3764, %v3782
    %3784 = vdwg.mxu0
    %3785 = vmatpush.bf16.msra.mxu0 %v2867
    %3786 = vmatpush.bf16.msra.mxu0 %v2863
    %3787 = vmatpush.bf16.msra.mxu0 %v2859
    %3788 = vmatpush.bf16.msra.mxu0 %v2855
    %3789 = vmatpush.bf16.msra.mxu0 %v2851
    %3790 = vmatpush.bf16.msra.mxu0 %v2847
    %3791 = vmatpush.bf16.msra.mxu0 %v2843
    %3792 = vmatpush.bf16.msra.mxu0 %v2839
    %3793 = vmatmul.bf16.gmra.mxu0 %v483
    %v3794 = vpop.f32.mrf.mxu0
    %v3795 = vadd.f32 %v3776, %v3794
    %v3796 = vpop.f32.mrf.mxu0
    %v3797 = vadd.f32 %v3778, %v3796
    %3798 = vmatmul.bf16.gmra.mxu0 %v563
    %v3799 = vpop.f32.mrf.mxu0
    %v3800 = vadd.f32 %v3781, %v3799
    %v3801 = vpop.f32.mrf.mxu0
    %v3802 = vadd.f32 %v3783, %v3801
    %3803 = vdwg.mxu0
    %3804 = vmatpush.bf16.msra.mxu0 %v2899
    %3805 = vmatpush.bf16.msra.mxu0 %v2895
    %3806 = vmatpush.bf16.msra.mxu0 %v2891
    %3807 = vmatpush.bf16.msra.mxu0 %v2887
    %3808 = vmatpush.bf16.msra.mxu0 %v2883
    %3809 = vmatpush.bf16.msra.mxu0 %v2879
    %3810 = vmatpush.bf16.msra.mxu0 %v2875
    %3811 = vmatpush.bf16.msra.mxu0 %v2871
    %3812 = vmatmul.bf16.gmra.mxu0 %v484
    %v3813 = vpop.f32.mrf.mxu0
    %v3814 = vadd.f32 %v3795, %v3813
    %v3815 = vpop.f32.mrf.mxu0
    %v3816 = vadd.f32 %v3797, %v3815
    %3817 = vmatmul.bf16.gmra.mxu0 %v564
    %v3818 = vpop.f32.mrf.mxu0
    %v3819 = vadd.f32 %v3800, %v3818
    %v3820 = vpop.f32.mrf.mxu0
    %v3821 = vadd.f32 %v3802, %v3820
    %3822 = vdwg.mxu0
    %3823 = vmatpush.bf16.msra.mxu0 %v2931
    %3824 = vmatpush.bf16.msra.mxu0 %v2927
    %3825 = vmatpush.bf16.msra.mxu0 %v2923
    %3826 = vmatpush.bf16.msra.mxu0 %v2919
    %3827 = vmatpush.bf16.msra.mxu0 %v2915
    %3828 = vmatpush.bf16.msra.mxu0 %v2911
    %3829 = vmatpush.bf16.msra.mxu0 %v2907
    %3830 = vmatpush.bf16.msra.mxu0 %v2903
    %3831 = vmatmul.bf16.gmra.mxu0 %v485
    %v3832 = vpop.f32.mrf.mxu0
    %v3833 = vadd.f32 %v3814, %v3832
    %v3834 = vpop.f32.mrf.mxu0
    %v3835 = vadd.f32 %v3816, %v3834
    %3836 = vmatmul.bf16.gmra.mxu0 %v565
    %v3837 = vpop.f32.mrf.mxu0
    %v3838 = vadd.f32 %v3819, %v3837
    %v3839 = vpop.f32.mrf.mxu0
    %v3840 = vadd.f32 %v3821, %v3839
    %3841 = vdwg.mxu0
    %3842 = vmatpush.bf16.msra.mxu0 %v2963
    %3843 = vmatpush.bf16.msra.mxu0 %v2959
    %3844 = vmatpush.bf16.msra.mxu0 %v2955
    %3845 = vmatpush.bf16.msra.mxu0 %v2951
    %3846 = vmatpush.bf16.msra.mxu0 %v2947
    %3847 = vmatpush.bf16.msra.mxu0 %v2943
    %3848 = vmatpush.bf16.msra.mxu0 %v2939
    %3849 = vmatpush.bf16.msra.mxu0 %v2935
    %3850 = vmatmul.bf16.gmra.mxu0 %v486
    %v3851 = vpop.f32.mrf.mxu0
    %v3852 = vadd.f32 %v3833, %v3851
    %v3853 = vpop.f32.mrf.mxu0
    %v3854 = vadd.f32 %v3835, %v3853
    %3855 = vmatmul.bf16.gmra.mxu0 %v566
    %v3856 = vpop.f32.mrf.mxu0
    %v3857 = vadd.f32 %v3838, %v3856
    %v3858 = vpop.f32.mrf.mxu0
    %v3859 = vadd.f32 %v3840, %v3858
    %3860 = vdwg.mxu0
    %3861 = vmatpush.bf16.msra.mxu0 %v2995
    %3862 = vmatpush.bf16.msra.mxu0 %v2991
    %3863 = vmatpush.bf16.msra.mxu0 %v2987
    %3864 = vmatpush.bf16.msra.mxu0 %v2983
    %3865 = vmatpush.bf16.msra.mxu0 %v2979
    %3866 = vmatpush.bf16.msra.mxu0 %v2975
    %3867 = vmatpush.bf16.msra.mxu0 %v2971
    %3868 = vmatpush.bf16.msra.mxu0 %v2967
    %3869 = vmatmul.bf16.gmra.mxu0 %v487
    %v3870 = vpop.f32.mrf.mxu0
    %v3871 = vadd.f32 %v3852, %v3870
    %v3872 = vpop.f32.mrf.mxu0
    %v3873 = vadd.f32 %v3854, %v3872
    %3874 = vmatmul.bf16.gmra.mxu0 %v567
    %v3875 = vpop.f32.mrf.mxu0
    %v3876 = vadd.f32 %v3857, %v3875
    %v3877 = vpop.f32.mrf.mxu0
    %v3878 = vadd.f32 %v3859, %v3877
    %3879 = vdwg.mxu0
    %3880 = vmatpush.bf16.msra.mxu0 %v3027
    %3881 = vmatpush.bf16.msra.mxu0 %v3023
    %3882 = vmatpush.bf16.msra.mxu0 %v3019
    %3883 = vmatpush.bf16.msra.mxu0 %v3015
    %3884 = vmatpush.bf16.msra.mxu0 %v3011
    %3885 = vmatpush.bf16.msra.mxu0 %v3007
    %3886 = vmatpush.bf16.msra.mxu0 %v3003
    %3887 = vmatpush.bf16.msra.mxu0 %v2999
    %3888 = vmatmul.bf16.gmra.mxu0 %v488
    %v3889 = vpop.f32.mrf.mxu0
    %v3890 = vadd.f32 %v3871, %v3889
    %v3891 = vpop.f32.mrf.mxu0
    %v3892 = vadd.f32 %v3873, %v3891
    %3893 = vmatmul.bf16.gmra.mxu0 %v568
    %v3894 = vpop.f32.mrf.mxu0
    %v3895 = vadd.f32 %v3876, %v3894
    %v3896 = vpop.f32.mrf.mxu0
    %v3897 = vadd.f32 %v3878, %v3896
    %3898 = vdwg.mxu0
    %3899 = vmatpush.bf16.msra.mxu0 %v3059
    %3900 = vmatpush.bf16.msra.mxu0 %v3055
    %3901 = vmatpush.bf16.msra.mxu0 %v3051
    %3902 = vmatpush.bf16.msra.mxu0 %v3047
    %3903 = vmatpush.bf16.msra.mxu0 %v3043
    %3904 = vmatpush.bf16.msra.mxu0 %v3039
    %3905 = vmatpush.bf16.msra.mxu0 %v3035
    %3906 = vmatpush.bf16.msra.mxu0 %v3031
    %3907 = vmatmul.bf16.gmra.mxu0 %v489
    %v3908 = vpop.f32.mrf.mxu0
    %v3909 = vadd.f32 %v3890, %v3908
    %v3910 = vpop.f32.mrf.mxu0
    %v3911 = vadd.f32 %v3892, %v3910
    %3912 = vmatmul.bf16.gmra.mxu0 %v569
    %v3913 = vpop.f32.mrf.mxu0
    %v3914 = vadd.f32 %v3895, %v3913
    %v3915 = vpop.f32.mrf.mxu0
    %v3916 = vadd.f32 %v3897, %v3915
    %3917 = vdwg.mxu0
    %3918 = vmatpush.bf16.msra.mxu0 %v3091
    %3919 = vmatpush.bf16.msra.mxu0 %v3087
    %3920 = vmatpush.bf16.msra.mxu0 %v3083
    %3921 = vmatpush.bf16.msra.mxu0 %v3079
    %3922 = vmatpush.bf16.msra.mxu0 %v3075
    %3923 = vmatpush.bf16.msra.mxu0 %v3071
    %3924 = vmatpush.bf16.msra.mxu0 %v3067
    %3925 = vmatpush.bf16.msra.mxu0 %v3063
    %3926 = vmatmul.bf16.gmra.mxu0 %v490
    %v3927 = vpop.f32.mrf.mxu0
    %v3928 = vadd.f32 %v3909, %v3927
    %v3929 = vpop.f32.mrf.mxu0
    %v3930 = vadd.f32 %v3911, %v3929
    %3931 = vmatmul.bf16.gmra.mxu0 %v570
    %v3932 = vpop.f32.mrf.mxu0
    %v3933 = vadd.f32 %v3914, %v3932
    %v3934 = vpop.f32.mrf.mxu0
    %v3935 = vadd.f32 %v3916, %v3934
    %3936 = vdwg.mxu0
    %3937 = vmatpush.bf16.msra.mxu0 %v3123
    %3938 = vmatpush.bf16.msra.mxu0 %v3119
    %3939 = vmatpush.bf16.msra.mxu0 %v3115
    %3940 = vmatpush.bf16.msra.mxu0 %v3111
    %3941 = vmatpush.bf16.msra.mxu0 %v3107
    %3942 = vmatpush.bf16.msra.mxu0 %v3103
    %3943 = vmatpush.bf16.msra.mxu0 %v3099
    %3944 = vmatpush.bf16.msra.mxu0 %v3095
    %3945 = vmatmul.bf16.gmra.mxu0 %v491
    %v3946 = vpop.f32.mrf.mxu0
    %v3947 = vadd.f32 %v3928, %v3946
    %v3948 = vpop.f32.mrf.mxu0
    %v3949 = vadd.f32 %v3930, %v3948
    %3950 = vmatmul.bf16.gmra.mxu0 %v571
    %v3951 = vpop.f32.mrf.mxu0
    %v3952 = vadd.f32 %v3933, %v3951
    %v3953 = vpop.f32.mrf.mxu0
    %v3954 = vadd.f32 %v3935, %v3953
    %3955 = vdwg.mxu0
    %3956 = vmatpush.bf16.msra.mxu0 %v3155
    %3957 = vmatpush.bf16.msra.mxu0 %v3151
    %3958 = vmatpush.bf16.msra.mxu0 %v3147
    %3959 = vmatpush.bf16.msra.mxu0 %v3143
    %3960 = vmatpush.bf16.msra.mxu0 %v3139
    %3961 = vmatpush.bf16.msra.mxu0 %v3135
    %3962 = vmatpush.bf16.msra.mxu0 %v3131
    %3963 = vmatpush.bf16.msra.mxu0 %v3127
    %3964 = vmatmul.bf16.gmra.mxu0 %v492
    %v3965 = vpop.f32.mrf.mxu0
    %v3966 = vadd.f32 %v3947, %v3965
    %v3967 = vpop.f32.mrf.mxu0
    %v3968 = vadd.f32 %v3949, %v3967
    %3969 = vmatmul.bf16.gmra.mxu0 %v572
    %v3970 = vpop.f32.mrf.mxu0
    %v3971 = vadd.f32 %v3952, %v3970
    %v3972 = vpop.f32.mrf.mxu0
    %v3973 = vadd.f32 %v3954, %v3972
    %3974 = vdwg.mxu0
    %3975 = vmatpush.bf16.msra.mxu0 %v2676
    %3976 = vmatpush.bf16.msra.mxu0 %v2672
    %3977 = vmatpush.bf16.msra.mxu0 %v2668
    %3978 = vmatpush.bf16.msra.mxu0 %v2664
    %3979 = vmatpush.bf16.msra.mxu0 %v2660
    %3980 = vmatpush.bf16.msra.mxu0 %v2656
    %3981 = vmatpush.bf16.msra.mxu0 %v2652
    %3982 = vmatpush.bf16.msra.mxu0 %v2648
    %3983 = vmatmul.bf16.gmra.mxu0 %v477
    %v3984 = vpop.f32.mrf.mxu0
    %v3985 = vadd.f32 %v1104, %v3984
    %v3986 = vpop.f32.mrf.mxu0
    %v3987 = vadd.f32 %v1104, %v3986
    %3988 = vmatmul.bf16.gmra.mxu0 %v557
    %v3989 = vpop.f32.mrf.mxu0
    %v3990 = vadd.f32 %v1104, %v3989
    %v3991 = vpop.f32.mrf.mxu0
    %v3992 = vadd.f32 %v1104, %v3991
    %3993 = vdwg.mxu0
    %3994 = vmatpush.bf16.msra.mxu0 %v2708
    %3995 = vmatpush.bf16.msra.mxu0 %v2704
    %3996 = vmatpush.bf16.msra.mxu0 %v2700
    %3997 = vmatpush.bf16.msra.mxu0 %v2696
    %3998 = vmatpush.bf16.msra.mxu0 %v2692
    %3999 = vmatpush.bf16.msra.mxu0 %v2688
    %4000 = vmatpush.bf16.msra.mxu0 %v2684
    %4001 = vmatpush.bf16.msra.mxu0 %v2680
    %4002 = vmatmul.bf16.gmra.mxu0 %v478
    %v4003 = vpop.f32.mrf.mxu0
    %v4004 = vadd.f32 %v3985, %v4003
    %v4005 = vpop.f32.mrf.mxu0
    %v4006 = vadd.f32 %v3987, %v4005
    %4007 = vmatmul.bf16.gmra.mxu0 %v558
    %v4008 = vpop.f32.mrf.mxu0
    %v4009 = vadd.f32 %v3990, %v4008
    %v4010 = vpop.f32.mrf.mxu0
    %v4011 = vadd.f32 %v3992, %v4010
    %4012 = vdwg.mxu0
    %4013 = vmatpush.bf16.msra.mxu0 %v2740
    %4014 = vmatpush.bf16.msra.mxu0 %v2736
    %4015 = vmatpush.bf16.msra.mxu0 %v2732
    %4016 = vmatpush.bf16.msra.mxu0 %v2728
    %4017 = vmatpush.bf16.msra.mxu0 %v2724
    %4018 = vmatpush.bf16.msra.mxu0 %v2720
    %4019 = vmatpush.bf16.msra.mxu0 %v2716
    %4020 = vmatpush.bf16.msra.mxu0 %v2712
    %4021 = vmatmul.bf16.gmra.mxu0 %v479
    %v4022 = vpop.f32.mrf.mxu0
    %v4023 = vadd.f32 %v4004, %v4022
    %v4024 = vpop.f32.mrf.mxu0
    %v4025 = vadd.f32 %v4006, %v4024
    %4026 = vmatmul.bf16.gmra.mxu0 %v559
    %v4027 = vpop.f32.mrf.mxu0
    %v4028 = vadd.f32 %v4009, %v4027
    %v4029 = vpop.f32.mrf.mxu0
    %v4030 = vadd.f32 %v4011, %v4029
    %4031 = vdwg.mxu0
    %4032 = vmatpush.bf16.msra.mxu0 %v2772
    %4033 = vmatpush.bf16.msra.mxu0 %v2768
    %4034 = vmatpush.bf16.msra.mxu0 %v2764
    %4035 = vmatpush.bf16.msra.mxu0 %v2760
    %4036 = vmatpush.bf16.msra.mxu0 %v2756
    %4037 = vmatpush.bf16.msra.mxu0 %v2752
    %4038 = vmatpush.bf16.msra.mxu0 %v2748
    %4039 = vmatpush.bf16.msra.mxu0 %v2744
    %4040 = vmatmul.bf16.gmra.mxu0 %v480
    %v4041 = vpop.f32.mrf.mxu0
    %v4042 = vadd.f32 %v4023, %v4041
    %v4043 = vpop.f32.mrf.mxu0
    %v4044 = vadd.f32 %v4025, %v4043
    %4045 = vmatmul.bf16.gmra.mxu0 %v560
    %v4046 = vpop.f32.mrf.mxu0
    %v4047 = vadd.f32 %v4028, %v4046
    %v4048 = vpop.f32.mrf.mxu0
    %v4049 = vadd.f32 %v4030, %v4048
    %4050 = vdwg.mxu0
    %4051 = vmatpush.bf16.msra.mxu0 %v2804
    %4052 = vmatpush.bf16.msra.mxu0 %v2800
    %4053 = vmatpush.bf16.msra.mxu0 %v2796
    %4054 = vmatpush.bf16.msra.mxu0 %v2792
    %4055 = vmatpush.bf16.msra.mxu0 %v2788
    %4056 = vmatpush.bf16.msra.mxu0 %v2784
    %4057 = vmatpush.bf16.msra.mxu0 %v2780
    %4058 = vmatpush.bf16.msra.mxu0 %v2776
    %4059 = vmatmul.bf16.gmra.mxu0 %v481
    %v4060 = vpop.f32.mrf.mxu0
    %v4061 = vadd.f32 %v4042, %v4060
    %v4062 = vpop.f32.mrf.mxu0
    %v4063 = vadd.f32 %v4044, %v4062
    %4064 = vmatmul.bf16.gmra.mxu0 %v561
    %v4065 = vpop.f32.mrf.mxu0
    %v4066 = vadd.f32 %v4047, %v4065
    %v4067 = vpop.f32.mrf.mxu0
    %v4068 = vadd.f32 %v4049, %v4067
    %4069 = vdwg.mxu0
    %4070 = vmatpush.bf16.msra.mxu0 %v2836
    %4071 = vmatpush.bf16.msra.mxu0 %v2832
    %4072 = vmatpush.bf16.msra.mxu0 %v2828
    %4073 = vmatpush.bf16.msra.mxu0 %v2824
    %4074 = vmatpush.bf16.msra.mxu0 %v2820
    %4075 = vmatpush.bf16.msra.mxu0 %v2816
    %4076 = vmatpush.bf16.msra.mxu0 %v2812
    %4077 = vmatpush.bf16.msra.mxu0 %v2808
    %4078 = vmatmul.bf16.gmra.mxu0 %v482
    %v4079 = vpop.f32.mrf.mxu0
    %v4080 = vadd.f32 %v4061, %v4079
    %v4081 = vpop.f32.mrf.mxu0
    %v4082 = vadd.f32 %v4063, %v4081
    %4083 = vmatmul.bf16.gmra.mxu0 %v562
    %v4084 = vpop.f32.mrf.mxu0
    %v4085 = vadd.f32 %v4066, %v4084
    %v4086 = vpop.f32.mrf.mxu0
    %v4087 = vadd.f32 %v4068, %v4086
    %4088 = vdwg.mxu0
    %4089 = vmatpush.bf16.msra.mxu0 %v2868
    %4090 = vmatpush.bf16.msra.mxu0 %v2864
    %4091 = vmatpush.bf16.msra.mxu0 %v2860
    %4092 = vmatpush.bf16.msra.mxu0 %v2856
    %4093 = vmatpush.bf16.msra.mxu0 %v2852
    %4094 = vmatpush.bf16.msra.mxu0 %v2848
    %4095 = vmatpush.bf16.msra.mxu0 %v2844
    %4096 = vmatpush.bf16.msra.mxu0 %v2840
    %4097 = vmatmul.bf16.gmra.mxu0 %v483
    %v4098 = vpop.f32.mrf.mxu0
    %v4099 = vadd.f32 %v4080, %v4098
    %v4100 = vpop.f32.mrf.mxu0
    %v4101 = vadd.f32 %v4082, %v4100
    %4102 = vmatmul.bf16.gmra.mxu0 %v563
    %v4103 = vpop.f32.mrf.mxu0
    %v4104 = vadd.f32 %v4085, %v4103
    %v4105 = vpop.f32.mrf.mxu0
    %v4106 = vadd.f32 %v4087, %v4105
    %4107 = vdwg.mxu0
    %4108 = vmatpush.bf16.msra.mxu0 %v2900
    %4109 = vmatpush.bf16.msra.mxu0 %v2896
    %4110 = vmatpush.bf16.msra.mxu0 %v2892
    %4111 = vmatpush.bf16.msra.mxu0 %v2888
    %4112 = vmatpush.bf16.msra.mxu0 %v2884
    %4113 = vmatpush.bf16.msra.mxu0 %v2880
    %4114 = vmatpush.bf16.msra.mxu0 %v2876
    %4115 = vmatpush.bf16.msra.mxu0 %v2872
    %4116 = vmatmul.bf16.gmra.mxu0 %v484
    %v4117 = vpop.f32.mrf.mxu0
    %v4118 = vadd.f32 %v4099, %v4117
    %v4119 = vpop.f32.mrf.mxu0
    %v4120 = vadd.f32 %v4101, %v4119
    %4121 = vmatmul.bf16.gmra.mxu0 %v564
    %v4122 = vpop.f32.mrf.mxu0
    %v4123 = vadd.f32 %v4104, %v4122
    %v4124 = vpop.f32.mrf.mxu0
    %v4125 = vadd.f32 %v4106, %v4124
    %4126 = vdwg.mxu0
    %4127 = vmatpush.bf16.msra.mxu0 %v2932
    %4128 = vmatpush.bf16.msra.mxu0 %v2928
    %4129 = vmatpush.bf16.msra.mxu0 %v2924
    %4130 = vmatpush.bf16.msra.mxu0 %v2920
    %4131 = vmatpush.bf16.msra.mxu0 %v2916
    %4132 = vmatpush.bf16.msra.mxu0 %v2912
    %4133 = vmatpush.bf16.msra.mxu0 %v2908
    %4134 = vmatpush.bf16.msra.mxu0 %v2904
    %4135 = vmatmul.bf16.gmra.mxu0 %v485
    %v4136 = vpop.f32.mrf.mxu0
    %v4137 = vadd.f32 %v4118, %v4136
    %v4138 = vpop.f32.mrf.mxu0
    %v4139 = vadd.f32 %v4120, %v4138
    %4140 = vmatmul.bf16.gmra.mxu0 %v565
    %v4141 = vpop.f32.mrf.mxu0
    %v4142 = vadd.f32 %v4123, %v4141
    %v4143 = vpop.f32.mrf.mxu0
    %v4144 = vadd.f32 %v4125, %v4143
    %4145 = vdwg.mxu0
    %4146 = vmatpush.bf16.msra.mxu0 %v2964
    %4147 = vmatpush.bf16.msra.mxu0 %v2960
    %4148 = vmatpush.bf16.msra.mxu0 %v2956
    %4149 = vmatpush.bf16.msra.mxu0 %v2952
    %4150 = vmatpush.bf16.msra.mxu0 %v2948
    %4151 = vmatpush.bf16.msra.mxu0 %v2944
    %4152 = vmatpush.bf16.msra.mxu0 %v2940
    %4153 = vmatpush.bf16.msra.mxu0 %v2936
    %4154 = vmatmul.bf16.gmra.mxu0 %v486
    %v4155 = vpop.f32.mrf.mxu0
    %v4156 = vadd.f32 %v4137, %v4155
    %v4157 = vpop.f32.mrf.mxu0
    %v4158 = vadd.f32 %v4139, %v4157
    %4159 = vmatmul.bf16.gmra.mxu0 %v566
    %v4160 = vpop.f32.mrf.mxu0
    %v4161 = vadd.f32 %v4142, %v4160
    %v4162 = vpop.f32.mrf.mxu0
    %v4163 = vadd.f32 %v4144, %v4162
    %4164 = vdwg.mxu0
    %4165 = vmatpush.bf16.msra.mxu0 %v2996
    %4166 = vmatpush.bf16.msra.mxu0 %v2992
    %4167 = vmatpush.bf16.msra.mxu0 %v2988
    %4168 = vmatpush.bf16.msra.mxu0 %v2984
    %4169 = vmatpush.bf16.msra.mxu0 %v2980
    %4170 = vmatpush.bf16.msra.mxu0 %v2976
    %4171 = vmatpush.bf16.msra.mxu0 %v2972
    %4172 = vmatpush.bf16.msra.mxu0 %v2968
    %4173 = vmatmul.bf16.gmra.mxu0 %v487
    %v4174 = vpop.f32.mrf.mxu0
    %v4175 = vadd.f32 %v4156, %v4174
    %v4176 = vpop.f32.mrf.mxu0
    %v4177 = vadd.f32 %v4158, %v4176
    %4178 = vmatmul.bf16.gmra.mxu0 %v567
    %v4179 = vpop.f32.mrf.mxu0
    %v4180 = vadd.f32 %v4161, %v4179
    %v4181 = vpop.f32.mrf.mxu0
    %v4182 = vadd.f32 %v4163, %v4181
    %4183 = vdwg.mxu0
    %4184 = vmatpush.bf16.msra.mxu0 %v3028
    %4185 = vmatpush.bf16.msra.mxu0 %v3024
    %4186 = vmatpush.bf16.msra.mxu0 %v3020
    %4187 = vmatpush.bf16.msra.mxu0 %v3016
    %4188 = vmatpush.bf16.msra.mxu0 %v3012
    %4189 = vmatpush.bf16.msra.mxu0 %v3008
    %4190 = vmatpush.bf16.msra.mxu0 %v3004
    %4191 = vmatpush.bf16.msra.mxu0 %v3000
    %4192 = vmatmul.bf16.gmra.mxu0 %v488
    %v4193 = vpop.f32.mrf.mxu0
    %v4194 = vadd.f32 %v4175, %v4193
    %v4195 = vpop.f32.mrf.mxu0
    %v4196 = vadd.f32 %v4177, %v4195
    %4197 = vmatmul.bf16.gmra.mxu0 %v568
    %v4198 = vpop.f32.mrf.mxu0
    %v4199 = vadd.f32 %v4180, %v4198
    %v4200 = vpop.f32.mrf.mxu0
    %v4201 = vadd.f32 %v4182, %v4200
    %4202 = vdwg.mxu0
    %4203 = vmatpush.bf16.msra.mxu0 %v3060
    %4204 = vmatpush.bf16.msra.mxu0 %v3056
    %4205 = vmatpush.bf16.msra.mxu0 %v3052
    %4206 = vmatpush.bf16.msra.mxu0 %v3048
    %4207 = vmatpush.bf16.msra.mxu0 %v3044
    %4208 = vmatpush.bf16.msra.mxu0 %v3040
    %4209 = vmatpush.bf16.msra.mxu0 %v3036
    %4210 = vmatpush.bf16.msra.mxu0 %v3032
    %4211 = vmatmul.bf16.gmra.mxu0 %v489
    %v4212 = vpop.f32.mrf.mxu0
    %v4213 = vadd.f32 %v4194, %v4212
    %v4214 = vpop.f32.mrf.mxu0
    %v4215 = vadd.f32 %v4196, %v4214
    %4216 = vmatmul.bf16.gmra.mxu0 %v569
    %v4217 = vpop.f32.mrf.mxu0
    %v4218 = vadd.f32 %v4199, %v4217
    %v4219 = vpop.f32.mrf.mxu0
    %v4220 = vadd.f32 %v4201, %v4219
    %4221 = vdwg.mxu0
    %4222 = vmatpush.bf16.msra.mxu0 %v3092
    %4223 = vmatpush.bf16.msra.mxu0 %v3088
    %4224 = vmatpush.bf16.msra.mxu0 %v3084
    %4225 = vmatpush.bf16.msra.mxu0 %v3080
    %4226 = vmatpush.bf16.msra.mxu0 %v3076
    %4227 = vmatpush.bf16.msra.mxu0 %v3072
    %4228 = vmatpush.bf16.msra.mxu0 %v3068
    %4229 = vmatpush.bf16.msra.mxu0 %v3064
    %4230 = vmatmul.bf16.gmra.mxu0 %v490
    %v4231 = vpop.f32.mrf.mxu0
    %v4232 = vadd.f32 %v4213, %v4231
    %v4233 = vpop.f32.mrf.mxu0
    %v4234 = vadd.f32 %v4215, %v4233
    %4235 = vmatmul.bf16.gmra.mxu0 %v570
    %v4236 = vpop.f32.mrf.mxu0
    %v4237 = vadd.f32 %v4218, %v4236
    %v4238 = vpop.f32.mrf.mxu0
    %v4239 = vadd.f32 %v4220, %v4238
    %4240 = vdwg.mxu0
    %4241 = vmatpush.bf16.msra.mxu0 %v3124
    %4242 = vmatpush.bf16.msra.mxu0 %v3120
    %4243 = vmatpush.bf16.msra.mxu0 %v3116
    %4244 = vmatpush.bf16.msra.mxu0 %v3112
    %4245 = vmatpush.bf16.msra.mxu0 %v3108
    %4246 = vmatpush.bf16.msra.mxu0 %v3104
    %4247 = vmatpush.bf16.msra.mxu0 %v3100
    %4248 = vmatpush.bf16.msra.mxu0 %v3096
    %4249 = vmatmul.bf16.gmra.mxu0 %v491
    %v4250 = vpop.f32.mrf.mxu0
    %v4251 = vadd.f32 %v4232, %v4250
    %v4252 = vpop.f32.mrf.mxu0
    %v4253 = vadd.f32 %v4234, %v4252
    %4254 = vmatmul.bf16.gmra.mxu0 %v571
    %v4255 = vpop.f32.mrf.mxu0
    %v4256 = vadd.f32 %v4237, %v4255
    %v4257 = vpop.f32.mrf.mxu0
    %v4258 = vadd.f32 %v4239, %v4257
    %4259 = vdwg.mxu0
    %4260 = vmatpush.bf16.msra.mxu0 %v3156
    %4261 = vmatpush.bf16.msra.mxu0 %v3152
    %4262 = vmatpush.bf16.msra.mxu0 %v3148
    %4263 = vmatpush.bf16.msra.mxu0 %v3144
    %4264 = vmatpush.bf16.msra.mxu0 %v3140
    %4265 = vmatpush.bf16.msra.mxu0 %v3136
    %4266 = vmatpush.bf16.msra.mxu0 %v3132
    %4267 = vmatpush.bf16.msra.mxu0 %v3128
    %4268 = vmatmul.bf16.gmra.mxu0 %v492
    %v4269 = vpop.f32.mrf.mxu0
    %v4270 = vadd.f32 %v4251, %v4269
    %v4271 = vpop.f32.mrf.mxu0
    %v4272 = vadd.f32 %v4253, %v4271
    %4273 = vmatmul.bf16.gmra.mxu0 %v572
    %v4274 = vpop.f32.mrf.mxu0
    %v4275 = vadd.f32 %v4256, %v4274
    %v4276 = vpop.f32.mrf.mxu0
    %v4277 = vadd.f32 %v4258, %v4276
    %4278 = vdwg.mxu0
    %4279 = vmatpush.bf16.msra.mxu0 %v2677
    %4280 = vmatpush.bf16.msra.mxu0 %v2673
    %4281 = vmatpush.bf16.msra.mxu0 %v2669
    %4282 = vmatpush.bf16.msra.mxu0 %v2665
    %4283 = vmatpush.bf16.msra.mxu0 %v2661
    %4284 = vmatpush.bf16.msra.mxu0 %v2657
    %4285 = vmatpush.bf16.msra.mxu0 %v2653
    %4286 = vmatpush.bf16.msra.mxu0 %v2649
    %4287 = vmatmul.bf16.gmra.mxu0 %v477
    %v4288 = vpop.f32.mrf.mxu0
    %v4289 = vadd.f32 %v1105, %v4288
    %v4290 = vpop.f32.mrf.mxu0
    %v4291 = vadd.f32 %v1105, %v4290
    %4292 = vmatmul.bf16.gmra.mxu0 %v557
    %v4293 = vpop.f32.mrf.mxu0
    %v4294 = vadd.f32 %v1105, %v4293
    %v4295 = vpop.f32.mrf.mxu0
    %v4296 = vadd.f32 %v1105, %v4295
    %4297 = vdwg.mxu0
    %4298 = vmatpush.bf16.msra.mxu0 %v2709
    %4299 = vmatpush.bf16.msra.mxu0 %v2705
    %4300 = vmatpush.bf16.msra.mxu0 %v2701
    %4301 = vmatpush.bf16.msra.mxu0 %v2697
    %4302 = vmatpush.bf16.msra.mxu0 %v2693
    %4303 = vmatpush.bf16.msra.mxu0 %v2689
    %4304 = vmatpush.bf16.msra.mxu0 %v2685
    %4305 = vmatpush.bf16.msra.mxu0 %v2681
    %4306 = vmatmul.bf16.gmra.mxu0 %v478
    %v4307 = vpop.f32.mrf.mxu0
    %v4308 = vadd.f32 %v4289, %v4307
    %v4309 = vpop.f32.mrf.mxu0
    %v4310 = vadd.f32 %v4291, %v4309
    %4311 = vmatmul.bf16.gmra.mxu0 %v558
    %v4312 = vpop.f32.mrf.mxu0
    %v4313 = vadd.f32 %v4294, %v4312
    %v4314 = vpop.f32.mrf.mxu0
    %v4315 = vadd.f32 %v4296, %v4314
    %4316 = vdwg.mxu0
    %4317 = vmatpush.bf16.msra.mxu0 %v2741
    %4318 = vmatpush.bf16.msra.mxu0 %v2737
    %4319 = vmatpush.bf16.msra.mxu0 %v2733
    %4320 = vmatpush.bf16.msra.mxu0 %v2729
    %4321 = vmatpush.bf16.msra.mxu0 %v2725
    %4322 = vmatpush.bf16.msra.mxu0 %v2721
    %4323 = vmatpush.bf16.msra.mxu0 %v2717
    %4324 = vmatpush.bf16.msra.mxu0 %v2713
    %4325 = vmatmul.bf16.gmra.mxu0 %v479
    %v4326 = vpop.f32.mrf.mxu0
    %v4327 = vadd.f32 %v4308, %v4326
    %v4328 = vpop.f32.mrf.mxu0
    %v4329 = vadd.f32 %v4310, %v4328
    %4330 = vmatmul.bf16.gmra.mxu0 %v559
    %v4331 = vpop.f32.mrf.mxu0
    %v4332 = vadd.f32 %v4313, %v4331
    %v4333 = vpop.f32.mrf.mxu0
    %v4334 = vadd.f32 %v4315, %v4333
    %4335 = vdwg.mxu0
    %4336 = vmatpush.bf16.msra.mxu0 %v2773
    %4337 = vmatpush.bf16.msra.mxu0 %v2769
    %4338 = vmatpush.bf16.msra.mxu0 %v2765
    %4339 = vmatpush.bf16.msra.mxu0 %v2761
    %4340 = vmatpush.bf16.msra.mxu0 %v2757
    %4341 = vmatpush.bf16.msra.mxu0 %v2753
    %4342 = vmatpush.bf16.msra.mxu0 %v2749
    %4343 = vmatpush.bf16.msra.mxu0 %v2745
    %4344 = vmatmul.bf16.gmra.mxu0 %v480
    %v4345 = vpop.f32.mrf.mxu0
    %v4346 = vadd.f32 %v4327, %v4345
    %v4347 = vpop.f32.mrf.mxu0
    %v4348 = vadd.f32 %v4329, %v4347
    %4349 = vmatmul.bf16.gmra.mxu0 %v560
    %v4350 = vpop.f32.mrf.mxu0
    %v4351 = vadd.f32 %v4332, %v4350
    %v4352 = vpop.f32.mrf.mxu0
    %v4353 = vadd.f32 %v4334, %v4352
    %4354 = vdwg.mxu0
    %4355 = vmatpush.bf16.msra.mxu0 %v2805
    %4356 = vmatpush.bf16.msra.mxu0 %v2801
    %4357 = vmatpush.bf16.msra.mxu0 %v2797
    %4358 = vmatpush.bf16.msra.mxu0 %v2793
    %4359 = vmatpush.bf16.msra.mxu0 %v2789
    %4360 = vmatpush.bf16.msra.mxu0 %v2785
    %4361 = vmatpush.bf16.msra.mxu0 %v2781
    %4362 = vmatpush.bf16.msra.mxu0 %v2777
    %4363 = vmatmul.bf16.gmra.mxu0 %v481
    %v4364 = vpop.f32.mrf.mxu0
    %v4365 = vadd.f32 %v4346, %v4364
    %v4366 = vpop.f32.mrf.mxu0
    %v4367 = vadd.f32 %v4348, %v4366
    %4368 = vmatmul.bf16.gmra.mxu0 %v561
    %v4369 = vpop.f32.mrf.mxu0
    %v4370 = vadd.f32 %v4351, %v4369
    %v4371 = vpop.f32.mrf.mxu0
    %v4372 = vadd.f32 %v4353, %v4371
    %4373 = vdwg.mxu0
    %4374 = vmatpush.bf16.msra.mxu0 %v2837
    %4375 = vmatpush.bf16.msra.mxu0 %v2833
    %4376 = vmatpush.bf16.msra.mxu0 %v2829
    %4377 = vmatpush.bf16.msra.mxu0 %v2825
    %4378 = vmatpush.bf16.msra.mxu0 %v2821
    %4379 = vmatpush.bf16.msra.mxu0 %v2817
    %4380 = vmatpush.bf16.msra.mxu0 %v2813
    %4381 = vmatpush.bf16.msra.mxu0 %v2809
    %4382 = vmatmul.bf16.gmra.mxu0 %v482
    %v4383 = vpop.f32.mrf.mxu0
    %v4384 = vadd.f32 %v4365, %v4383
    %v4385 = vpop.f32.mrf.mxu0
    %v4386 = vadd.f32 %v4367, %v4385
    %4387 = vmatmul.bf16.gmra.mxu0 %v562
    %v4388 = vpop.f32.mrf.mxu0
    %v4389 = vadd.f32 %v4370, %v4388
    %v4390 = vpop.f32.mrf.mxu0
    %v4391 = vadd.f32 %v4372, %v4390
    %4392 = vdwg.mxu0
    %4393 = vmatpush.bf16.msra.mxu0 %v2869
    %4394 = vmatpush.bf16.msra.mxu0 %v2865
    %4395 = vmatpush.bf16.msra.mxu0 %v2861
    %4396 = vmatpush.bf16.msra.mxu0 %v2857
    %4397 = vmatpush.bf16.msra.mxu0 %v2853
    %4398 = vmatpush.bf16.msra.mxu0 %v2849
    %4399 = vmatpush.bf16.msra.mxu0 %v2845
    %4400 = vmatpush.bf16.msra.mxu0 %v2841
    %4401 = vmatmul.bf16.gmra.mxu0 %v483
    %v4402 = vpop.f32.mrf.mxu0
    %v4403 = vadd.f32 %v4384, %v4402
    %v4404 = vpop.f32.mrf.mxu0
    %v4405 = vadd.f32 %v4386, %v4404
    %4406 = vmatmul.bf16.gmra.mxu0 %v563
    %v4407 = vpop.f32.mrf.mxu0
    %v4408 = vadd.f32 %v4389, %v4407
    %v4409 = vpop.f32.mrf.mxu0
    %v4410 = vadd.f32 %v4391, %v4409
    %4411 = vdwg.mxu0
    %4412 = vmatpush.bf16.msra.mxu0 %v2901
    %4413 = vmatpush.bf16.msra.mxu0 %v2897
    %4414 = vmatpush.bf16.msra.mxu0 %v2893
    %4415 = vmatpush.bf16.msra.mxu0 %v2889
    %4416 = vmatpush.bf16.msra.mxu0 %v2885
    %4417 = vmatpush.bf16.msra.mxu0 %v2881
    %4418 = vmatpush.bf16.msra.mxu0 %v2877
    %4419 = vmatpush.bf16.msra.mxu0 %v2873
    %4420 = vmatmul.bf16.gmra.mxu0 %v484
    %v4421 = vpop.f32.mrf.mxu0
    %v4422 = vadd.f32 %v4403, %v4421
    %v4423 = vpop.f32.mrf.mxu0
    %v4424 = vadd.f32 %v4405, %v4423
    %4425 = vmatmul.bf16.gmra.mxu0 %v564
    %v4426 = vpop.f32.mrf.mxu0
    %v4427 = vadd.f32 %v4408, %v4426
    %v4428 = vpop.f32.mrf.mxu0
    %v4429 = vadd.f32 %v4410, %v4428
    %4430 = vdwg.mxu0
    %4431 = vmatpush.bf16.msra.mxu0 %v2933
    %4432 = vmatpush.bf16.msra.mxu0 %v2929
    %4433 = vmatpush.bf16.msra.mxu0 %v2925
    %4434 = vmatpush.bf16.msra.mxu0 %v2921
    %4435 = vmatpush.bf16.msra.mxu0 %v2917
    %4436 = vmatpush.bf16.msra.mxu0 %v2913
    %4437 = vmatpush.bf16.msra.mxu0 %v2909
    %4438 = vmatpush.bf16.msra.mxu0 %v2905
    %4439 = vmatmul.bf16.gmra.mxu0 %v485
    %v4440 = vpop.f32.mrf.mxu0
    %v4441 = vadd.f32 %v4422, %v4440
    %v4442 = vpop.f32.mrf.mxu0
    %v4443 = vadd.f32 %v4424, %v4442
    %4444 = vmatmul.bf16.gmra.mxu0 %v565
    %v4445 = vpop.f32.mrf.mxu0
    %v4446 = vadd.f32 %v4427, %v4445
    %v4447 = vpop.f32.mrf.mxu0
    %v4448 = vadd.f32 %v4429, %v4447
    %4449 = vdwg.mxu0
    %4450 = vmatpush.bf16.msra.mxu0 %v2965
    %4451 = vmatpush.bf16.msra.mxu0 %v2961
    %4452 = vmatpush.bf16.msra.mxu0 %v2957
    %4453 = vmatpush.bf16.msra.mxu0 %v2953
    %4454 = vmatpush.bf16.msra.mxu0 %v2949
    %4455 = vmatpush.bf16.msra.mxu0 %v2945
    %4456 = vmatpush.bf16.msra.mxu0 %v2941
    %4457 = vmatpush.bf16.msra.mxu0 %v2937
    %4458 = vmatmul.bf16.gmra.mxu0 %v486
    %v4459 = vpop.f32.mrf.mxu0
    %v4460 = vadd.f32 %v4441, %v4459
    %v4461 = vpop.f32.mrf.mxu0
    %v4462 = vadd.f32 %v4443, %v4461
    %4463 = vmatmul.bf16.gmra.mxu0 %v566
    %v4464 = vpop.f32.mrf.mxu0
    %v4465 = vadd.f32 %v4446, %v4464
    %v4466 = vpop.f32.mrf.mxu0
    %v4467 = vadd.f32 %v4448, %v4466
    %4468 = vdwg.mxu0
    %4469 = vmatpush.bf16.msra.mxu0 %v2997
    %4470 = vmatpush.bf16.msra.mxu0 %v2993
    %4471 = vmatpush.bf16.msra.mxu0 %v2989
    %4472 = vmatpush.bf16.msra.mxu0 %v2985
    %4473 = vmatpush.bf16.msra.mxu0 %v2981
    %4474 = vmatpush.bf16.msra.mxu0 %v2977
    %4475 = vmatpush.bf16.msra.mxu0 %v2973
    %4476 = vmatpush.bf16.msra.mxu0 %v2969
    %4477 = vmatmul.bf16.gmra.mxu0 %v487
    %v4478 = vpop.f32.mrf.mxu0
    %v4479 = vadd.f32 %v4460, %v4478
    %v4480 = vpop.f32.mrf.mxu0
    %v4481 = vadd.f32 %v4462, %v4480
    %4482 = vmatmul.bf16.gmra.mxu0 %v567
    %v4483 = vpop.f32.mrf.mxu0
    %v4484 = vadd.f32 %v4465, %v4483
    %v4485 = vpop.f32.mrf.mxu0
    %v4486 = vadd.f32 %v4467, %v4485
    %4487 = vdwg.mxu0
    %4488 = vmatpush.bf16.msra.mxu0 %v3029
    %4489 = vmatpush.bf16.msra.mxu0 %v3025
    %4490 = vmatpush.bf16.msra.mxu0 %v3021
    %4491 = vmatpush.bf16.msra.mxu0 %v3017
    %4492 = vmatpush.bf16.msra.mxu0 %v3013
    %4493 = vmatpush.bf16.msra.mxu0 %v3009
    %4494 = vmatpush.bf16.msra.mxu0 %v3005
    %4495 = vmatpush.bf16.msra.mxu0 %v3001
    %4496 = vmatmul.bf16.gmra.mxu0 %v488
    %v4497 = vpop.f32.mrf.mxu0
    %v4498 = vadd.f32 %v4479, %v4497
    %v4499 = vpop.f32.mrf.mxu0
    %v4500 = vadd.f32 %v4481, %v4499
    %4501 = vmatmul.bf16.gmra.mxu0 %v568
    %v4502 = vpop.f32.mrf.mxu0
    %v4503 = vadd.f32 %v4484, %v4502
    %v4504 = vpop.f32.mrf.mxu0
    %v4505 = vadd.f32 %v4486, %v4504
    %4506 = vdwg.mxu0
    %4507 = vmatpush.bf16.msra.mxu0 %v3061
    %4508 = vmatpush.bf16.msra.mxu0 %v3057
    %4509 = vmatpush.bf16.msra.mxu0 %v3053
    %4510 = vmatpush.bf16.msra.mxu0 %v3049
    %4511 = vmatpush.bf16.msra.mxu0 %v3045
    %4512 = vmatpush.bf16.msra.mxu0 %v3041
    %4513 = vmatpush.bf16.msra.mxu0 %v3037
    %4514 = vmatpush.bf16.msra.mxu0 %v3033
    %4515 = vmatmul.bf16.gmra.mxu0 %v489
    %v4516 = vpop.f32.mrf.mxu0
    %v4517 = vadd.f32 %v4498, %v4516
    %v4518 = vpop.f32.mrf.mxu0
    %v4519 = vadd.f32 %v4500, %v4518
    %4520 = vmatmul.bf16.gmra.mxu0 %v569
    %v4521 = vpop.f32.mrf.mxu0
    %v4522 = vadd.f32 %v4503, %v4521
    %v4523 = vpop.f32.mrf.mxu0
    %v4524 = vadd.f32 %v4505, %v4523
    %4525 = vdwg.mxu0
    %4526 = vmatpush.bf16.msra.mxu0 %v3093
    %4527 = vmatpush.bf16.msra.mxu0 %v3089
    %4528 = vmatpush.bf16.msra.mxu0 %v3085
    %4529 = vmatpush.bf16.msra.mxu0 %v3081
    %4530 = vmatpush.bf16.msra.mxu0 %v3077
    %4531 = vmatpush.bf16.msra.mxu0 %v3073
    %4532 = vmatpush.bf16.msra.mxu0 %v3069
    %4533 = vmatpush.bf16.msra.mxu0 %v3065
    %4534 = vmatmul.bf16.gmra.mxu0 %v490
    %v4535 = vpop.f32.mrf.mxu0
    %v4536 = vadd.f32 %v4517, %v4535
    %v4537 = vpop.f32.mrf.mxu0
    %v4538 = vadd.f32 %v4519, %v4537
    %4539 = vmatmul.bf16.gmra.mxu0 %v570
    %v4540 = vpop.f32.mrf.mxu0
    %v4541 = vadd.f32 %v4522, %v4540
    %v4542 = vpop.f32.mrf.mxu0
    %v4543 = vadd.f32 %v4524, %v4542
    %4544 = vdwg.mxu0
    %4545 = vmatpush.bf16.msra.mxu0 %v3125
    %4546 = vmatpush.bf16.msra.mxu0 %v3121
    %4547 = vmatpush.bf16.msra.mxu0 %v3117
    %4548 = vmatpush.bf16.msra.mxu0 %v3113
    %4549 = vmatpush.bf16.msra.mxu0 %v3109
    %4550 = vmatpush.bf16.msra.mxu0 %v3105
    %4551 = vmatpush.bf16.msra.mxu0 %v3101
    %4552 = vmatpush.bf16.msra.mxu0 %v3097
    %4553 = vmatmul.bf16.gmra.mxu0 %v491
    %v4554 = vpop.f32.mrf.mxu0
    %v4555 = vadd.f32 %v4536, %v4554
    %v4556 = vpop.f32.mrf.mxu0
    %v4557 = vadd.f32 %v4538, %v4556
    %4558 = vmatmul.bf16.gmra.mxu0 %v571
    %v4559 = vpop.f32.mrf.mxu0
    %v4560 = vadd.f32 %v4541, %v4559
    %v4561 = vpop.f32.mrf.mxu0
    %v4562 = vadd.f32 %v4543, %v4561
    %4563 = vdwg.mxu0
    %4564 = vmatpush.bf16.msra.mxu0 %v3157
    %4565 = vmatpush.bf16.msra.mxu0 %v3153
    %4566 = vmatpush.bf16.msra.mxu0 %v3149
    %4567 = vmatpush.bf16.msra.mxu0 %v3145
    %4568 = vmatpush.bf16.msra.mxu0 %v3141
    %4569 = vmatpush.bf16.msra.mxu0 %v3137
    %4570 = vmatpush.bf16.msra.mxu0 %v3133
    %4571 = vmatpush.bf16.msra.mxu0 %v3129
    %4572 = vmatmul.bf16.gmra.mxu0 %v492
    %v4573 = vpop.f32.mrf.mxu0
    %v4574 = vadd.f32 %v4555, %v4573
    %v4575 = vpop.f32.mrf.mxu0
    %v4576 = vadd.f32 %v4557, %v4575
    %4577 = vmatmul.bf16.gmra.mxu0 %v572
    %v4578 = vpop.f32.mrf.mxu0
    %v4579 = vadd.f32 %v4560, %v4578
    %v4580 = vpop.f32.mrf.mxu0
    %v4581 = vadd.f32 %v4562, %v4580
    %4582 = vdwg.mxu0
    %4583 = vmatpush.bf16.msra.mxu0 %v2678
    %4584 = vmatpush.bf16.msra.mxu0 %v2674
    %4585 = vmatpush.bf16.msra.mxu0 %v2670
    %4586 = vmatpush.bf16.msra.mxu0 %v2666
    %4587 = vmatpush.bf16.msra.mxu0 %v2662
    %4588 = vmatpush.bf16.msra.mxu0 %v2658
    %4589 = vmatpush.bf16.msra.mxu0 %v2654
    %4590 = vmatpush.bf16.msra.mxu0 %v2650
    %4591 = vmatmul.bf16.gmra.mxu0 %v477
    %v4592 = vpop.f32.mrf.mxu0
    %v4593 = vadd.f32 %v1106, %v4592
    %v4594 = vpop.f32.mrf.mxu0
    %v4595 = vadd.f32 %v1106, %v4594
    %4596 = vmatmul.bf16.gmra.mxu0 %v557
    %v4597 = vpop.f32.mrf.mxu0
    %v4598 = vadd.f32 %v1106, %v4597
    %v4599 = vpop.f32.mrf.mxu0
    %v4600 = vadd.f32 %v1106, %v4599
    %4601 = vdwg.mxu0
    %4602 = vmatpush.bf16.msra.mxu0 %v2710
    %4603 = vmatpush.bf16.msra.mxu0 %v2706
    %4604 = vmatpush.bf16.msra.mxu0 %v2702
    %4605 = vmatpush.bf16.msra.mxu0 %v2698
    %4606 = vmatpush.bf16.msra.mxu0 %v2694
    %4607 = vmatpush.bf16.msra.mxu0 %v2690
    %4608 = vmatpush.bf16.msra.mxu0 %v2686
    %4609 = vmatpush.bf16.msra.mxu0 %v2682
    %4610 = vmatmul.bf16.gmra.mxu0 %v478
    %v4611 = vpop.f32.mrf.mxu0
    %v4612 = vadd.f32 %v4593, %v4611
    %v4613 = vpop.f32.mrf.mxu0
    %v4614 = vadd.f32 %v4595, %v4613
    %4615 = vmatmul.bf16.gmra.mxu0 %v558
    %v4616 = vpop.f32.mrf.mxu0
    %v4617 = vadd.f32 %v4598, %v4616
    %v4618 = vpop.f32.mrf.mxu0
    %v4619 = vadd.f32 %v4600, %v4618
    %4620 = vdwg.mxu0
    %4621 = vmatpush.bf16.msra.mxu0 %v2742
    %4622 = vmatpush.bf16.msra.mxu0 %v2738
    %4623 = vmatpush.bf16.msra.mxu0 %v2734
    %4624 = vmatpush.bf16.msra.mxu0 %v2730
    %4625 = vmatpush.bf16.msra.mxu0 %v2726
    %4626 = vmatpush.bf16.msra.mxu0 %v2722
    %4627 = vmatpush.bf16.msra.mxu0 %v2718
    %4628 = vmatpush.bf16.msra.mxu0 %v2714
    %4629 = vmatmul.bf16.gmra.mxu0 %v479
    %v4630 = vpop.f32.mrf.mxu0
    %v4631 = vadd.f32 %v4612, %v4630
    %v4632 = vpop.f32.mrf.mxu0
    %v4633 = vadd.f32 %v4614, %v4632
    %4634 = vmatmul.bf16.gmra.mxu0 %v559
    %v4635 = vpop.f32.mrf.mxu0
    %v4636 = vadd.f32 %v4617, %v4635
    %v4637 = vpop.f32.mrf.mxu0
    %v4638 = vadd.f32 %v4619, %v4637
    %4639 = vdwg.mxu0
    %4640 = vmatpush.bf16.msra.mxu0 %v2774
    %4641 = vmatpush.bf16.msra.mxu0 %v2770
    %4642 = vmatpush.bf16.msra.mxu0 %v2766
    %4643 = vmatpush.bf16.msra.mxu0 %v2762
    %4644 = vmatpush.bf16.msra.mxu0 %v2758
    %4645 = vmatpush.bf16.msra.mxu0 %v2754
    %4646 = vmatpush.bf16.msra.mxu0 %v2750
    %4647 = vmatpush.bf16.msra.mxu0 %v2746
    %4648 = vmatmul.bf16.gmra.mxu0 %v480
    %v4649 = vpop.f32.mrf.mxu0
    %v4650 = vadd.f32 %v4631, %v4649
    %v4651 = vpop.f32.mrf.mxu0
    %v4652 = vadd.f32 %v4633, %v4651
    %4653 = vmatmul.bf16.gmra.mxu0 %v560
    %v4654 = vpop.f32.mrf.mxu0
    %v4655 = vadd.f32 %v4636, %v4654
    %v4656 = vpop.f32.mrf.mxu0
    %v4657 = vadd.f32 %v4638, %v4656
    %4658 = vdwg.mxu0
    %4659 = vmatpush.bf16.msra.mxu0 %v2806
    %4660 = vmatpush.bf16.msra.mxu0 %v2802
    %4661 = vmatpush.bf16.msra.mxu0 %v2798
    %4662 = vmatpush.bf16.msra.mxu0 %v2794
    %4663 = vmatpush.bf16.msra.mxu0 %v2790
    %4664 = vmatpush.bf16.msra.mxu0 %v2786
    %4665 = vmatpush.bf16.msra.mxu0 %v2782
    %4666 = vmatpush.bf16.msra.mxu0 %v2778
    %4667 = vmatmul.bf16.gmra.mxu0 %v481
    %v4668 = vpop.f32.mrf.mxu0
    %v4669 = vadd.f32 %v4650, %v4668
    %v4670 = vpop.f32.mrf.mxu0
    %v4671 = vadd.f32 %v4652, %v4670
    %4672 = vmatmul.bf16.gmra.mxu0 %v561
    %v4673 = vpop.f32.mrf.mxu0
    %v4674 = vadd.f32 %v4655, %v4673
    %v4675 = vpop.f32.mrf.mxu0
    %v4676 = vadd.f32 %v4657, %v4675
    %4677 = vdwg.mxu0
    %4678 = vmatpush.bf16.msra.mxu0 %v2838
    %4679 = vmatpush.bf16.msra.mxu0 %v2834
    %4680 = vmatpush.bf16.msra.mxu0 %v2830
    %4681 = vmatpush.bf16.msra.mxu0 %v2826
    %4682 = vmatpush.bf16.msra.mxu0 %v2822
    %4683 = vmatpush.bf16.msra.mxu0 %v2818
    %4684 = vmatpush.bf16.msra.mxu0 %v2814
    %4685 = vmatpush.bf16.msra.mxu0 %v2810
    %4686 = vmatmul.bf16.gmra.mxu0 %v482
    %v4687 = vpop.f32.mrf.mxu0
    %v4688 = vadd.f32 %v4669, %v4687
    %v4689 = vpop.f32.mrf.mxu0
    %v4690 = vadd.f32 %v4671, %v4689
    %4691 = vmatmul.bf16.gmra.mxu0 %v562
    %v4692 = vpop.f32.mrf.mxu0
    %v4693 = vadd.f32 %v4674, %v4692
    %v4694 = vpop.f32.mrf.mxu0
    %v4695 = vadd.f32 %v4676, %v4694
    %4696 = vdwg.mxu0
    %4697 = vmatpush.bf16.msra.mxu0 %v2870
    %4698 = vmatpush.bf16.msra.mxu0 %v2866
    %4699 = vmatpush.bf16.msra.mxu0 %v2862
    %4700 = vmatpush.bf16.msra.mxu0 %v2858
    %4701 = vmatpush.bf16.msra.mxu0 %v2854
    %4702 = vmatpush.bf16.msra.mxu0 %v2850
    %4703 = vmatpush.bf16.msra.mxu0 %v2846
    %4704 = vmatpush.bf16.msra.mxu0 %v2842
    %4705 = vmatmul.bf16.gmra.mxu0 %v483
    %v4706 = vpop.f32.mrf.mxu0
    %v4707 = vadd.f32 %v4688, %v4706
    %v4708 = vpop.f32.mrf.mxu0
    %v4709 = vadd.f32 %v4690, %v4708
    %4710 = vmatmul.bf16.gmra.mxu0 %v563
    %v4711 = vpop.f32.mrf.mxu0
    %v4712 = vadd.f32 %v4693, %v4711
    %v4713 = vpop.f32.mrf.mxu0
    %v4714 = vadd.f32 %v4695, %v4713
    %4715 = vdwg.mxu0
    %4716 = vmatpush.bf16.msra.mxu0 %v2902
    %4717 = vmatpush.bf16.msra.mxu0 %v2898
    %4718 = vmatpush.bf16.msra.mxu0 %v2894
    %4719 = vmatpush.bf16.msra.mxu0 %v2890
    %4720 = vmatpush.bf16.msra.mxu0 %v2886
    %4721 = vmatpush.bf16.msra.mxu0 %v2882
    %4722 = vmatpush.bf16.msra.mxu0 %v2878
    %4723 = vmatpush.bf16.msra.mxu0 %v2874
    %4724 = vmatmul.bf16.gmra.mxu0 %v484
    %v4725 = vpop.f32.mrf.mxu0
    %v4726 = vadd.f32 %v4707, %v4725
    %v4727 = vpop.f32.mrf.mxu0
    %v4728 = vadd.f32 %v4709, %v4727
    %4729 = vmatmul.bf16.gmra.mxu0 %v564
    %v4730 = vpop.f32.mrf.mxu0
    %v4731 = vadd.f32 %v4712, %v4730
    %v4732 = vpop.f32.mrf.mxu0
    %v4733 = vadd.f32 %v4714, %v4732
    %4734 = vdwg.mxu0
    %4735 = vmatpush.bf16.msra.mxu0 %v2934
    %4736 = vmatpush.bf16.msra.mxu0 %v2930
    %4737 = vmatpush.bf16.msra.mxu0 %v2926
    %4738 = vmatpush.bf16.msra.mxu0 %v2922
    %4739 = vmatpush.bf16.msra.mxu0 %v2918
    %4740 = vmatpush.bf16.msra.mxu0 %v2914
    %4741 = vmatpush.bf16.msra.mxu0 %v2910
    %4742 = vmatpush.bf16.msra.mxu0 %v2906
    %4743 = vmatmul.bf16.gmra.mxu0 %v485
    %v4744 = vpop.f32.mrf.mxu0
    %v4745 = vadd.f32 %v4726, %v4744
    %v4746 = vpop.f32.mrf.mxu0
    %v4747 = vadd.f32 %v4728, %v4746
    %4748 = vmatmul.bf16.gmra.mxu0 %v565
    %v4749 = vpop.f32.mrf.mxu0
    %v4750 = vadd.f32 %v4731, %v4749
    %v4751 = vpop.f32.mrf.mxu0
    %v4752 = vadd.f32 %v4733, %v4751
    %4753 = vdwg.mxu0
    %4754 = vmatpush.bf16.msra.mxu0 %v2966
    %4755 = vmatpush.bf16.msra.mxu0 %v2962
    %4756 = vmatpush.bf16.msra.mxu0 %v2958
    %4757 = vmatpush.bf16.msra.mxu0 %v2954
    %4758 = vmatpush.bf16.msra.mxu0 %v2950
    %4759 = vmatpush.bf16.msra.mxu0 %v2946
    %4760 = vmatpush.bf16.msra.mxu0 %v2942
    %4761 = vmatpush.bf16.msra.mxu0 %v2938
    %4762 = vmatmul.bf16.gmra.mxu0 %v486
    %v4763 = vpop.f32.mrf.mxu0
    %v4764 = vadd.f32 %v4745, %v4763
    %v4765 = vpop.f32.mrf.mxu0
    %v4766 = vadd.f32 %v4747, %v4765
    %4767 = vmatmul.bf16.gmra.mxu0 %v566
    %v4768 = vpop.f32.mrf.mxu0
    %v4769 = vadd.f32 %v4750, %v4768
    %v4770 = vpop.f32.mrf.mxu0
    %v4771 = vadd.f32 %v4752, %v4770
    %4772 = vdwg.mxu0
    %4773 = vmatpush.bf16.msra.mxu0 %v2998
    %4774 = vmatpush.bf16.msra.mxu0 %v2994
    %4775 = vmatpush.bf16.msra.mxu0 %v2990
    %4776 = vmatpush.bf16.msra.mxu0 %v2986
    %4777 = vmatpush.bf16.msra.mxu0 %v2982
    %4778 = vmatpush.bf16.msra.mxu0 %v2978
    %4779 = vmatpush.bf16.msra.mxu0 %v2974
    %4780 = vmatpush.bf16.msra.mxu0 %v2970
    %4781 = vmatmul.bf16.gmra.mxu0 %v487
    %v4782 = vpop.f32.mrf.mxu0
    %v4783 = vadd.f32 %v4764, %v4782
    %v4784 = vpop.f32.mrf.mxu0
    %v4785 = vadd.f32 %v4766, %v4784
    %4786 = vmatmul.bf16.gmra.mxu0 %v567
    %v4787 = vpop.f32.mrf.mxu0
    %v4788 = vadd.f32 %v4769, %v4787
    %v4789 = vpop.f32.mrf.mxu0
    %v4790 = vadd.f32 %v4771, %v4789
    %4791 = vdwg.mxu0
    %4792 = vmatpush.bf16.msra.mxu0 %v3030
    %4793 = vmatpush.bf16.msra.mxu0 %v3026
    %4794 = vmatpush.bf16.msra.mxu0 %v3022
    %4795 = vmatpush.bf16.msra.mxu0 %v3018
    %4796 = vmatpush.bf16.msra.mxu0 %v3014
    %4797 = vmatpush.bf16.msra.mxu0 %v3010
    %4798 = vmatpush.bf16.msra.mxu0 %v3006
    %4799 = vmatpush.bf16.msra.mxu0 %v3002
    %4800 = vmatmul.bf16.gmra.mxu0 %v488
    %v4801 = vpop.f32.mrf.mxu0
    %v4802 = vadd.f32 %v4783, %v4801
    %v4803 = vpop.f32.mrf.mxu0
    %v4804 = vadd.f32 %v4785, %v4803
    %4805 = vmatmul.bf16.gmra.mxu0 %v568
    %v4806 = vpop.f32.mrf.mxu0
    %v4807 = vadd.f32 %v4788, %v4806
    %v4808 = vpop.f32.mrf.mxu0
    %v4809 = vadd.f32 %v4790, %v4808
    %4810 = vdwg.mxu0
    %4811 = vmatpush.bf16.msra.mxu0 %v3062
    %4812 = vmatpush.bf16.msra.mxu0 %v3058
    %4813 = vmatpush.bf16.msra.mxu0 %v3054
    %4814 = vmatpush.bf16.msra.mxu0 %v3050
    %4815 = vmatpush.bf16.msra.mxu0 %v3046
    %4816 = vmatpush.bf16.msra.mxu0 %v3042
    %4817 = vmatpush.bf16.msra.mxu0 %v3038
    %4818 = vmatpush.bf16.msra.mxu0 %v3034
    %4819 = vmatmul.bf16.gmra.mxu0 %v489
    %v4820 = vpop.f32.mrf.mxu0
    %v4821 = vadd.f32 %v4802, %v4820
    %v4822 = vpop.f32.mrf.mxu0
    %v4823 = vadd.f32 %v4804, %v4822
    %4824 = vmatmul.bf16.gmra.mxu0 %v569
    %v4825 = vpop.f32.mrf.mxu0
    %v4826 = vadd.f32 %v4807, %v4825
    %v4827 = vpop.f32.mrf.mxu0
    %v4828 = vadd.f32 %v4809, %v4827
    %4829 = vdwg.mxu0
    %4830 = vmatpush.bf16.msra.mxu0 %v3094
    %4831 = vmatpush.bf16.msra.mxu0 %v3090
    %4832 = vmatpush.bf16.msra.mxu0 %v3086
    %4833 = vmatpush.bf16.msra.mxu0 %v3082
    %4834 = vmatpush.bf16.msra.mxu0 %v3078
    %4835 = vmatpush.bf16.msra.mxu0 %v3074
    %4836 = vmatpush.bf16.msra.mxu0 %v3070
    %4837 = vmatpush.bf16.msra.mxu0 %v3066
    %4838 = vmatmul.bf16.gmra.mxu0 %v490
    %v4839 = vpop.f32.mrf.mxu0
    %v4840 = vadd.f32 %v4821, %v4839
    %v4841 = vpop.f32.mrf.mxu0
    %v4842 = vadd.f32 %v4823, %v4841
    %4843 = vmatmul.bf16.gmra.mxu0 %v570
    %v4844 = vpop.f32.mrf.mxu0
    %v4845 = vadd.f32 %v4826, %v4844
    %v4846 = vpop.f32.mrf.mxu0
    %v4847 = vadd.f32 %v4828, %v4846
    %4848 = vdwg.mxu0
    %4849 = vmatpush.bf16.msra.mxu0 %v3126
    %4850 = vmatpush.bf16.msra.mxu0 %v3122
    %4851 = vmatpush.bf16.msra.mxu0 %v3118
    %4852 = vmatpush.bf16.msra.mxu0 %v3114
    %4853 = vmatpush.bf16.msra.mxu0 %v3110
    %4854 = vmatpush.bf16.msra.mxu0 %v3106
    %4855 = vmatpush.bf16.msra.mxu0 %v3102
    %4856 = vmatpush.bf16.msra.mxu0 %v3098
    %4857 = vmatmul.bf16.gmra.mxu0 %v491
    %v4858 = vpop.f32.mrf.mxu0
    %v4859 = vadd.f32 %v4840, %v4858
    %v4860 = vpop.f32.mrf.mxu0
    %v4861 = vadd.f32 %v4842, %v4860
    %4862 = vmatmul.bf16.gmra.mxu0 %v571
    %v4863 = vpop.f32.mrf.mxu0
    %v4864 = vadd.f32 %v4845, %v4863
    %v4865 = vpop.f32.mrf.mxu0
    %v4866 = vadd.f32 %v4847, %v4865
    %4867 = vdwg.mxu0
    %4868 = vmatpush.bf16.msra.mxu0 %v3158
    %4869 = vmatpush.bf16.msra.mxu0 %v3154
    %4870 = vmatpush.bf16.msra.mxu0 %v3150
    %4871 = vmatpush.bf16.msra.mxu0 %v3146
    %4872 = vmatpush.bf16.msra.mxu0 %v3142
    %4873 = vmatpush.bf16.msra.mxu0 %v3138
    %4874 = vmatpush.bf16.msra.mxu0 %v3134
    %4875 = vmatpush.bf16.msra.mxu0 %v3130
    %4876 = vmatmul.bf16.gmra.mxu0 %v492
    %v4877 = vpop.f32.mrf.mxu0
    %v4878 = vadd.f32 %v4859, %v4877
    %v4879 = vpop.f32.mrf.mxu0
    %v4880 = vadd.f32 %v4861, %v4879
    %4881 = vmatmul.bf16.gmra.mxu0 %v572
    %v4882 = vpop.f32.mrf.mxu0
    %v4883 = vadd.f32 %v4864, %v4882
    %v4884 = vpop.f32.mrf.mxu0
    %v4885 = vadd.f32 %v4866, %v4884
    %4886 = vdwg.mxu0
    %v4887 = vmax.f32 %v3966, 0.0
    %v4888 = vmax.f32 %v4270, 0.0
    %v4889 = vmax.f32 %v4574, 0.0
    %v4890 = vmax.f32 %v4878, 0.0
    %v4891 = vmax.f32 %v3968, 0.0
    %v4892 = vmax.f32 %v4272, 0.0
    %v4893 = vmax.f32 %v4576, 0.0
    %v4894 = vmax.f32 %v4880, 0.0
    %v4895 = vmax.f32 %v3971, 0.0
    %v4896 = vmax.f32 %v4275, 0.0
    %v4897 = vmax.f32 %v4579, 0.0
    %v4898 = vmax.f32 %v4883, 0.0
    %v4899 = vmax.f32 %v3973, 0.0
    %v4900 = vmax.f32 %v4277, 0.0
    %v4901 = vmax.f32 %v4581, 0.0
    %v4902 = vmax.f32 %v4885, 0.0
    %v4903 = vpack.c.bf16 %v4891, %v4887
    %v4904 = vpack.c.bf16 %v4892, %v4888
    %v4905 = vpack.c.bf16 %v4893, %v4889
    %v4906 = vpack.c.bf16 %v4894, %v4890
    %v4907 = vpack.c.bf16 %v4899, %v4895
    %v4908 = vpack.c.bf16 %v4900, %v4896
    %v4909 = vpack.c.bf16 %v4901, %v4897
    %v4910 = vpack.c.bf16 %v4902, %v4898
    %v4911 = vld [vmem:[%s9] sm:$0xf]
    %v4912 = vld [vmem:[%s9 + $0x4] sm:$0xf]
    %v4913 = vld [vmem:[%s9 + $0x8] sm:$0xf]
    %v4914 = vld [vmem:[%s9 + $0xc] sm:$0xf]
    %v4915 = vld [vmem:[%s9 + $0x10] sm:$0xf]
    %v4916 = vld [vmem:[%s9 + $0x14] sm:$0xf]
    %v4917 = vld [vmem:[%s9 + $0x18] sm:$0xf]
    %v4918 = vld [vmem:[%s9 + $0x1c] sm:$0xf]
    %v4919 = vld [vmem:[%s9 + $0x20] sm:$0xf]
    %v4920 = vld [vmem:[%s9 + $0x24] sm:$0xf]
    %v4921 = vld [vmem:[%s9 + $0x28] sm:$0xf]
    %v4922 = vld [vmem:[%s9 + $0x2c] sm:$0xf]
    %v4923 = vld [vmem:[%s9 + $0x30] sm:$0xf]
    %v4924 = vld [vmem:[%s9 + $0x34] sm:$0xf]
    %v4925 = vld [vmem:[%s9 + $0x38] sm:$0xf]
    %v4926 = vld [vmem:[%s9 + $0x3c] sm:$0xf]
    %v4927 = vld [vmem:[%s9 + $0x40] sm:$0xf]
    %v4928 = vld [vmem:[%s9 + $0x44] sm:$0xf]
    %v4929 = vld [vmem:[%s9 + $0x48] sm:$0xf]
    %v4930 = vld [vmem:[%s9 + $0x4c] sm:$0xf]
    %v4931 = vld [vmem:[%s9 + $0x50] sm:$0xf]
    %v4932 = vld [vmem:[%s9 + $0x54] sm:$0xf]
    %v4933 = vld [vmem:[%s9 + $0x58] sm:$0xf]
    %v4934 = vld [vmem:[%s9 + $0x5c] sm:$0xf]
    %v4935 = vld [vmem:[%s9 + $0x60] sm:$0xf]
    %v4936 = vld [vmem:[%s9 + $0x64] sm:$0xf]
    %v4937 = vld [vmem:[%s9 + $0x68] sm:$0xf]
    %v4938 = vld [vmem:[%s9 + $0x6c] sm:$0xf]
    %v4939 = vld [vmem:[%s9 + $0x70] sm:$0xf]
    %v4940 = vld [vmem:[%s9 + $0x74] sm:$0xf]
    %v4941 = vld [vmem:[%s9 + $0x78] sm:$0xf]
    %v4942 = vld [vmem:[%s9 + $0x7c] sm:$0xf]
    %v4943 = vld [vmem:[%s9 + $0x80] sm:$0xf]
    %v4944 = vld [vmem:[%s9 + $0x84] sm:$0xf]
    %v4945 = vld [vmem:[%s9 + $0x88] sm:$0xf]
    %v4946 = vld [vmem:[%s9 + $0x8c] sm:$0xf]
    %v4947 = vld [vmem:[%s9 + $0x90] sm:$0xf]
    %v4948 = vld [vmem:[%s9 + $0x94] sm:$0xf]
    %v4949 = vld [vmem:[%s9 + $0x98] sm:$0xf]
    %v4950 = vld [vmem:[%s9 + $0x9c] sm:$0xf]
    %v4951 = vld [vmem:[%s9 + $0xa0] sm:$0xf]
    %v4952 = vld [vmem:[%s9 + $0xa4] sm:$0xf]
    %v4953 = vld [vmem:[%s9 + $0xa8] sm:$0xf]
    %v4954 = vld [vmem:[%s9 + $0xac] sm:$0xf]
    %v4955 = vld [vmem:[%s9 + $0xb0] sm:$0xf]
    %v4956 = vld [vmem:[%s9 + $0xb4] sm:$0xf]
    %v4957 = vld [vmem:[%s9 + $0xb8] sm:$0xf]
    %v4958 = vld [vmem:[%s9 + $0xbc] sm:$0xf]
    %v4959 = vld [vmem:[%s9 + $0xc0] sm:$0xf]
    %v4960 = vld [vmem:[%s9 + $0xc4] sm:$0xf]
    %v4961 = vld [vmem:[%s9 + $0xc8] sm:$0xf]
    %v4962 = vld [vmem:[%s9 + $0xcc] sm:$0xf]
    %v4963 = vld [vmem:[%s9 + $0xd0] sm:$0xf]
    %v4964 = vld [vmem:[%s9 + $0xd4] sm:$0xf]
    %v4965 = vld [vmem:[%s9 + $0xd8] sm:$0xf]
    %v4966 = vld [vmem:[%s9 + $0xdc] sm:$0xf]
    %v4967 = vld [vmem:[%s9 + $0xe0] sm:$0xf]
    %v4968 = vld [vmem:[%s9 + $0xe4] sm:$0xf]
    %v4969 = vld [vmem:[%s9 + $0xe8] sm:$0xf]
    %v4970 = vld [vmem:[%s9 + $0xec] sm:$0xf]
    %v4971 = vld [vmem:[%s9 + $0xf0] sm:$0xf]
    %v4972 = vld [vmem:[%s9 + $0xf4] sm:$0xf]
    %v4973 = vld [vmem:[%s9 + $0xf8] sm:$0xf]
    %v4974 = vld [vmem:[%s9 + $0xfc] sm:$0xf]
    %v4975 = vld [vmem:[#allocation13] sm:$0x1]
    %v4977 = vperm.slane %v4975, 0
    %v5043 = vunpack.c.l.b16 %v4911
    %v5044 = vunpack.c.l.b16 %v4912
    %v5045 = vunpack.c.l.b16 %v4913
    %v5046 = vunpack.c.l.b16 %v4914
    %v5047 = vunpack.c.l.b16 %v4915
    %v5048 = vunpack.c.l.b16 %v4916
    %v5049 = vunpack.c.l.b16 %v4917
    %v5050 = vunpack.c.l.b16 %v4918
    %v5051 = vunpack.c.l.b16 %v4919
    %v5052 = vunpack.c.l.b16 %v4920
    %v5053 = vunpack.c.l.b16 %v4921
    %v5054 = vunpack.c.l.b16 %v4922
    %v5055 = vunpack.c.l.b16 %v4923
    %v5056 = vunpack.c.l.b16 %v4924
    %v5057 = vunpack.c.l.b16 %v4925
    %v5058 = vunpack.c.l.b16 %v4926
    %v5059 = vunpack.c.l.b16 %v4927
    %v5060 = vunpack.c.l.b16 %v4928
    %v5061 = vunpack.c.l.b16 %v4929
    %v5062 = vunpack.c.l.b16 %v4930
    %v5063 = vunpack.c.l.b16 %v4931
    %v5064 = vunpack.c.l.b16 %v4932
    %v5065 = vunpack.c.l.b16 %v4933
    %v5066 = vunpack.c.l.b16 %v4934
    %v5067 = vunpack.c.l.b16 %v4935
    %v5068 = vunpack.c.l.b16 %v4936
    %v5069 = vunpack.c.l.b16 %v4937
    %v5070 = vunpack.c.l.b16 %v4938
    %v5071 = vunpack.c.l.b16 %v4939
    %v5072 = vunpack.c.l.b16 %v4940
    %v5073 = vunpack.c.l.b16 %v4941
    %v5074 = vunpack.c.l.b16 %v4942
    %v5075 = vunpack.c.l.b16 %v4943
    %v5076 = vunpack.c.l.b16 %v4944
    %v5077 = vunpack.c.l.b16 %v4945
    %v5078 = vunpack.c.l.b16 %v4946
    %v5079 = vunpack.c.l.b16 %v4947
    %v5080 = vunpack.c.l.b16 %v4948
    %v5081 = vunpack.c.l.b16 %v4949
    %v5082 = vunpack.c.l.b16 %v4950
    %v5083 = vunpack.c.l.b16 %v4951
    %v5084 = vunpack.c.l.b16 %v4952
    %v5085 = vunpack.c.l.b16 %v4953
    %v5086 = vunpack.c.l.b16 %v4954
    %v5087 = vunpack.c.l.b16 %v4955
    %v5088 = vunpack.c.l.b16 %v4956
    %v5089 = vunpack.c.l.b16 %v4957
    %v5090 = vunpack.c.l.b16 %v4958
    %v5091 = vunpack.c.l.b16 %v4959
    %v5092 = vunpack.c.l.b16 %v4960
    %v5093 = vunpack.c.l.b16 %v4961
    %v5094 = vunpack.c.l.b16 %v4962
    %v5095 = vunpack.c.l.b16 %v4963
    %v5096 = vunpack.c.l.b16 %v4964
    %v5097 = vunpack.c.l.b16 %v4965
    %v5098 = vunpack.c.l.b16 %v4966
    %v5099 = vunpack.c.l.b16 %v4967
    %v5100 = vunpack.c.l.b16 %v4968
    %v5101 = vunpack.c.l.b16 %v4969
    %v5102 = vunpack.c.l.b16 %v4970
    %v5103 = vunpack.c.l.b16 %v4971
    %v5104 = vunpack.c.l.b16 %v4972
    %v5105 = vunpack.c.l.b16 %v4973
    %v5106 = vunpack.c.l.b16 %v4974
    %v5107 = vpack.c.b16 %v5044, %v5043
    %v5108 = vpack.c.b16 %v5046, %v5045
    %v5109 = vpack.c.b16 %v5048, %v5047
    %v5110 = vpack.c.b16 %v5050, %v5049
    %v5111 = vpack.c.b16 %v5052, %v5051
    %v5112 = vpack.c.b16 %v5054, %v5053
    %v5113 = vpack.c.b16 %v5056, %v5055
    %v5114 = vpack.c.b16 %v5058, %v5057
    %v5115 = vpack.c.b16 %v5060, %v5059
    %v5116 = vpack.c.b16 %v5062, %v5061
    %v5117 = vpack.c.b16 %v5064, %v5063
    %v5118 = vpack.c.b16 %v5066, %v5065
    %v5119 = vpack.c.b16 %v5068, %v5067
    %v5120 = vpack.c.b16 %v5070, %v5069
    %v5121 = vpack.c.b16 %v5072, %v5071
    %v5122 = vpack.c.b16 %v5074, %v5073
    %v5123 = vpack.c.b16 %v5076, %v5075
    %v5124 = vpack.c.b16 %v5078, %v5077
    %v5125 = vpack.c.b16 %v5080, %v5079
    %v5126 = vpack.c.b16 %v5082, %v5081
    %v5127 = vpack.c.b16 %v5084, %v5083
    %v5128 = vpack.c.b16 %v5086, %v5085
    %v5129 = vpack.c.b16 %v5088, %v5087
    %v5130 = vpack.c.b16 %v5090, %v5089
    %v5131 = vpack.c.b16 %v5092, %v5091
    %v5132 = vpack.c.b16 %v5094, %v5093
    %v5133 = vpack.c.b16 %v5096, %v5095
    %v5134 = vpack.c.b16 %v5098, %v5097
    %v5135 = vpack.c.b16 %v5100, %v5099
    %v5136 = vpack.c.b16 %v5102, %v5101
    %v5137 = vpack.c.b16 %v5104, %v5103
    %v5138 = vpack.c.b16 %v5106, %v5105
    %5171 = vmatpush.bf16.msra.mxu0 %v5114
    %5172 = vmatpush.bf16.msra.mxu0 %v5113
    %5173 = vmatpush.bf16.msra.mxu0 %v5112
    %5174 = vmatpush.bf16.msra.mxu0 %v5111
    %5175 = vmatpush.bf16.msra.mxu0 %v5110
    %5176 = vmatpush.bf16.msra.mxu0 %v5109
    %5177 = vmatpush.bf16.msra.mxu0 %v5108
    %5178 = vmatpush.bf16.msra.mxu0 %v5107
    %5179 = vmatmul.bf16.gmra.mxu0 %v4903
    %v5180 = vpop.f32.mrf.mxu0
    %v5181 = vadd.f32 %v4977, %v5180
    %v5182 = vpop.f32.mrf.mxu0
    %v5183 = vadd.f32 %v4977, %v5182
    %5184 = vmatmul.bf16.gmra.mxu0 %v4907
    %v5185 = vpop.f32.mrf.mxu0
    %v5186 = vadd.f32 %v4977, %v5185
    %v5187 = vpop.f32.mrf.mxu0
    %v5188 = vadd.f32 %v4977, %v5187
    %5189 = vdwg.mxu0
    %5190 = vmatpush.bf16.msra.mxu0 %v5122
    %5191 = vmatpush.bf16.msra.mxu0 %v5121
    %5192 = vmatpush.bf16.msra.mxu0 %v5120
    %5193 = vmatpush.bf16.msra.mxu0 %v5119
    %5194 = vmatpush.bf16.msra.mxu0 %v5118
    %5195 = vmatpush.bf16.msra.mxu0 %v5117
    %5196 = vmatpush.bf16.msra.mxu0 %v5116
    %5197 = vmatpush.bf16.msra.mxu0 %v5115
    %5198 = vmatmul.bf16.gmra.mxu0 %v4904
    %v5199 = vpop.f32.mrf.mxu0
    %v5200 = vadd.f32 %v5181, %v5199
    %v5201 = vpop.f32.mrf.mxu0
    %v5202 = vadd.f32 %v5183, %v5201
    %5203 = vmatmul.bf16.gmra.mxu0 %v4908
    %v5204 = vpop.f32.mrf.mxu0
    %v5205 = vadd.f32 %v5186, %v5204
    %v5206 = vpop.f32.mrf.mxu0
    %v5207 = vadd.f32 %v5188, %v5206
    %5208 = vdwg.mxu0
    %5209 = vmatpush.bf16.msra.mxu0 %v5130
    %5210 = vmatpush.bf16.msra.mxu0 %v5129
    %5211 = vmatpush.bf16.msra.mxu0 %v5128
    %5212 = vmatpush.bf16.msra.mxu0 %v5127
    %5213 = vmatpush.bf16.msra.mxu0 %v5126
    %5214 = vmatpush.bf16.msra.mxu0 %v5125
    %5215 = vmatpush.bf16.msra.mxu0 %v5124
    %5216 = vmatpush.bf16.msra.mxu0 %v5123
    %5217 = vmatmul.bf16.gmra.mxu0 %v4905
    %v5218 = vpop.f32.mrf.mxu0
    %v5219 = vadd.f32 %v5200, %v5218
    %v5220 = vpop.f32.mrf.mxu0
    %v5221 = vadd.f32 %v5202, %v5220
    %5222 = vmatmul.bf16.gmra.mxu0 %v4909
    %v5223 = vpop.f32.mrf.mxu0
    %v5224 = vadd.f32 %v5205, %v5223
    %v5225 = vpop.f32.mrf.mxu0
    %v5226 = vadd.f32 %v5207, %v5225
    %5227 = vdwg.mxu0
    %5228 = vmatpush.bf16.msra.mxu0 %v5138
    %5229 = vmatpush.bf16.msra.mxu0 %v5137
    %5230 = vmatpush.bf16.msra.mxu0 %v5136
    %5231 = vmatpush.bf16.msra.mxu0 %v5135
    %5232 = vmatpush.bf16.msra.mxu0 %v5134
    %5233 = vmatpush.bf16.msra.mxu0 %v5133
    %5234 = vmatpush.bf16.msra.mxu0 %v5132
    %5235 = vmatpush.bf16.msra.mxu0 %v5131
    %5236 = vmatmul.bf16.gmra.mxu0 %v4906
    %v5237 = vpop.f32.mrf.mxu0
    %v5238 = vadd.f32 %v5219, %v5237
    %v5239 = vpop.f32.mrf.mxu0
    %v5240 = vadd.f32 %v5221, %v5239
    %5241 = vmatmul.bf16.gmra.mxu0 %v4910
    %v5242 = vpop.f32.mrf.mxu0
    %v5243 = vadd.f32 %v5224, %v5242
    %v5244 = vpop.f32.mrf.mxu0
    %v5245 = vadd.f32 %v5226, %v5244
    %5246 = vdwg.mxu0
    %v5247 = vmax.f32 %v5238, 0.0
    %v5248 = vmax.f32 %v5240, 0.0
    %v5249 = vmax.f32 %v5243, 0.0
    %v5250 = vmax.f32 %v5245, 0.0
    %v5251 = vld [vmem:[#allocation15] sm:$0xff]
    %v5252 = vld [vmem:[#allocation15 + $0x8] sm:$0xff]
    %v5253 = vld [vmem:[#allocation15 + $0x10] sm:$0xff]
    %v5254 = vld [vmem:[#allocation15 + $0x18] sm:$0xff]
    %v5255 = vld [vmem:[#allocation15 + $0x20] sm:$0xff]
    %v5256 = vld [vmem:[#allocation15 + $0x28] sm:$0xff]
    %v5257 = vld [vmem:[#allocation15 + $0x30] sm:$0xff]
    %v5258 = vld [vmem:[#allocation15 + $0x38] sm:$0xff]
    %v5259 = vld [vmem:[#allocation16] sm:$0xff]
    %v5260 = vld [vmem:[#allocation16 + $0x8] sm:$0xff]
    %v5261 = vld [vmem:[#allocation16 + $0x10] sm:$0xff]
    %v5262 = vld [vmem:[#allocation16 + $0x18] sm:$0xff]
    %v5263 = vld [vmem:[#allocation16 + $0x20] sm:$0xff]
    %v5264 = vld [vmem:[#allocation16 + $0x28] sm:$0xff]
    %v5265 = vld [vmem:[#allocation16 + $0x30] sm:$0xff]
    %v5266 = vld [vmem:[#allocation16 + $0x38] sm:$0xff]
    %v5267 = vld [vmem:[#allocation16 + $0x40] sm:$0xff]
    %v5268 = vld [vmem:[#allocation16 + $0x48] sm:$0xff]
    %v5269 = vld [vmem:[#allocation16 + $0x50] sm:$0xff]
    %v5270 = vld [vmem:[#allocation16 + $0x58] sm:$0xff]
    %v5271 = vld [vmem:[#allocation16 + $0x60] sm:$0xff]
    %v5272 = vld [vmem:[#allocation16 + $0x68] sm:$0xff]
    %v5273 = vld [vmem:[#allocation16 + $0x70] sm:$0xff]
    %v5274 = vld [vmem:[#allocation16 + $0x78] sm:$0xff]
    %vm5275 = vcmask 523264
    %v5277 = vsel %vm5275, %v5247, 0
    %v5280 = vsel %vm5275, %v5248, 0
    %v5283 = vsel %vm5275, %v5249, 0
    %v5286 = vsel %vm5275, %v5250, 0
    %5288 = vmatpush.msra.mxu0 0.0
    %5289 = vmatpush.msra.mxu0 0.0
    %5290 = vmatpush.msra.mxu0 0.0
    %5291 = vmatpush.msra.mxu0 0.0
    %5292 = vmatpush.msra.mxu0 0.0
    %5293 = vmatpush.msra.mxu0 0.0
    %5294 = vmatpush.msra.mxu0 0.0
    %5295 = vmatpush.msra.mxu0 0.0
    %5296 = vmatpush.msra.mxu0 %v5273
    %5297 = vmatpush.msra.mxu0 %v5271
    %5298 = vmatpush.msra.mxu0 %v5269
    %5299 = vmatpush.msra.mxu0 %v5267
    %5300 = vmatpush.msra.mxu0 %v5265
    %5301 = vmatpush.msra.mxu0 %v5263
    %5302 = vmatpush.msra.mxu0 %v5261
    %5303 = vmatpush.msra.mxu0 %v5259
    %5304 = vmatmul.f32.gmra.mxu0 %v5277
    %v5305 = vpop.f32.mrf.mxu0
    %v5306 = vadd.f32 0.0, %v5305
    %5307 = vmatmul.f32.gmra.mxu0 %v5280
    %v5308 = vpop.f32.mrf.mxu0
    %v5309 = vadd.f32 0.0, %v5308
    %5310 = vmatmul.f32.gmra.mxu0 %v5283
    %v5311 = vpop.f32.mrf.mxu0
    %5312 = vmatmul.f32.gmra.mxu0 %v5286
    %v5313 = vpop.f32.mrf.mxu0
    %5314 = vdwg.mxu0
    %5315 = vmatpush.msra.mxu0 0.0
    %5316 = vmatpush.msra.mxu0 0.0
    %5317 = vmatpush.msra.mxu0 0.0
    %5318 = vmatpush.msra.mxu0 0.0
    %5319 = vmatpush.msra.mxu0 0.0
    %5320 = vmatpush.msra.mxu0 0.0
    %5321 = vmatpush.msra.mxu0 0.0
    %5322 = vmatpush.msra.mxu0 0.0
    %5323 = vmatpush.msra.mxu0 %v5274
    %5324 = vmatpush.msra.mxu0 %v5272
    %5325 = vmatpush.msra.mxu0 %v5270
    %5326 = vmatpush.msra.mxu0 %v5268
    %5327 = vmatpush.msra.mxu0 %v5266
    %5328 = vmatpush.msra.mxu0 %v5264
    %5329 = vmatpush.msra.mxu0 %v5262
    %5330 = vmatpush.msra.mxu0 %v5260
    %5331 = vmatmul.f32.gmra.mxu0 %v5277
    %v5332 = vpop.f32.mrf.mxu0
    %5333 = vmatmul.f32.gmra.mxu0 %v5280
    %v5334 = vpop.f32.mrf.mxu0
    %5335 = vmatmul.f32.gmra.mxu0 %v5283
    %v5336 = vpop.f32.mrf.mxu0
    %v5337 = vadd.f32 0.0, %v5336
    %5338 = vmatmul.f32.gmra.mxu0 %v5286
    %v5339 = vpop.f32.mrf.mxu0
    %v5340 = vadd.f32 0.0, %v5339
    %5341 = vdwg.mxu0
    %v5343 = vsel %vm5275, %v331, 0
    %v5346 = vsel %vm5275, %v332, 0
    %5348 = vmatpush.msra.mxu0 0.0
    %5349 = vmatpush.msra.mxu0 0.0
    %5350 = vmatpush.msra.mxu0 0.0
    %5351 = vmatpush.msra.mxu0 0.0
    %5352 = vmatpush.msra.mxu0 0.0
    %5353 = vmatpush.msra.mxu0 0.0
    %5354 = vmatpush.msra.mxu0 0.0
    %5355 = vmatpush.msra.mxu0 0.0
    %5356 = vmatpush.msra.mxu0 %v5258
    %5357 = vmatpush.msra.mxu0 %v5257
    %5358 = vmatpush.msra.mxu0 %v5256
    %5359 = vmatpush.msra.mxu0 %v5255
    %5360 = vmatpush.msra.mxu0 %v5254
    %5361 = vmatpush.msra.mxu0 %v5253
    %5362 = vmatpush.msra.mxu0 %v5252
    %5363 = vmatpush.msra.mxu0 %v5251
    %5364 = vmatmul.f32.gmra.mxu0 %v5343
    %v5365 = vpop.f32.mrf.mxu0
    %v5366 = vadd.f32 %v5306, %v5365
    %5367 = vmatmul.f32.gmra.mxu0 %v5346
    %v5368 = vpop.f32.mrf.mxu0
    %v5369 = vadd.f32 %v5309, %v5368
    %5370 = vdwg.mxu0
    %v5371 = vadd.f32 %v5366, %v5337
    %v5372 = vadd.f32 %v5369, %v5340
    %v5373 = vld [vmem:[#allocation18] sm:$0x1]
    %v5375 = vperm.slane %v5373, 0
    %v5377 = vadd.f32 %v5371, %v5375
    %v5378 = vadd.f32 %v5372, %v5375
    %v5379 = vmax.f32 %v5377, 0.0
    %v5380 = vmax.f32 %v5378, 0.0
    %v5381 = vld [vmem:[%s14] sm:$0xff]
    %v5382 = vld [vmem:[%s14 + $0x8] sm:$0xff]
    %v5383 = vld [vmem:[%s14 + $0x10] sm:$0xff]
    %v5384 = vld [vmem:[%s14 + $0x18] sm:$0xff]
    %v5385 = vld [vmem:[%s14 + $0x20] sm:$0xff]
    %v5386 = vld [vmem:[%s14 + $0x28] sm:$0xff]
    %v5387 = vld [vmem:[%s14 + $0x30] sm:$0xff]
    %v5388 = vld [vmem:[%s14 + $0x38] sm:$0xff]
    %v5389 = vld [vmem:[%s14 + $0x40] sm:$0xff]
    %v5390 = vld [vmem:[%s14 + $0x48] sm:$0xff]
    %v5391 = vld [vmem:[%s14 + $0x50] sm:$0xff]
    %v5392 = vld [vmem:[%s14 + $0x58] sm:$0xff]
    %v5393 = vld [vmem:[%s14 + $0x60] sm:$0xff]
    %v5394 = vld [vmem:[%s14 + $0x68] sm:$0xff]
    %v5395 = vld [vmem:[%s14 + $0x70] sm:$0xff]
    %v5396 = vld [vmem:[%s14 + $0x78] sm:$0xff]
    %v5397 = vld [vmem:[#allocation19] sm:$0x1]
    %v5399 = vperm.slane %v5397, 0
    %5401 = vmatpush.msra.mxu0 %v5396
    %5402 = vmatpush.msra.mxu0 %v5395
    %5403 = vmatpush.msra.mxu0 %v5394
    %5404 = vmatpush.msra.mxu0 %v5393
    %5405 = vmatpush.msra.mxu0 %v5392
    %5406 = vmatpush.msra.mxu0 %v5391
    %5407 = vmatpush.msra.mxu0 %v5390
    %5408 = vmatpush.msra.mxu0 %v5389
    %5409 = vmatpush.msra.mxu0 %v5388
    %5410 = vmatpush.msra.mxu0 %v5387
    %5411 = vmatpush.msra.mxu0 %v5386
    %5412 = vmatpush.msra.mxu0 %v5385
    %5413 = vmatpush.msra.mxu0 %v5384
    %5414 = vmatpush.msra.mxu0 %v5383
    %5415 = vmatpush.msra.mxu0 %v5382
    %5416 = vmatpush.msra.mxu0 %v5381
    %5417 = vmatmul.f32.gmra.mxu0 %v5379
    %v5418 = vpop.f32.mrf.mxu0
    %v5419 = vadd.f32 %v5399, %v5418
    %5420 = vmatmul.f32.gmra.mxu0 %v5380
    %v5421 = vpop.f32.mrf.mxu0
    %v5422 = vadd.f32 %v5399, %v5421
    %5423 = vdwg.mxu0
    %v5424 = vmax.f32 %v5419, 0.0
    %v5425 = vmax.f32 %v5422, 0.0
    %v5426 = vld [vmem:[%s16] sm:$0xff]
    %v5427 = vld [vmem:[%s16 + $0x8] sm:$0xff]
    %v5428 = vld [vmem:[%s16 + $0x10] sm:$0xff]
    %v5429 = vld [vmem:[%s16 + $0x18] sm:$0xff]
    %v5430 = vld [vmem:[%s16 + $0x20] sm:$0xff]
    %v5431 = vld [vmem:[%s16 + $0x28] sm:$0xff]
    %v5432 = vld [vmem:[%s16 + $0x30] sm:$0xff]
    %v5433 = vld [vmem:[%s16 + $0x38] sm:$0xff]
    %v5434 = vld [vmem:[#allocation21] sm:$0x1]
    %v5436 = vperm.slane %v5434, 0
    %v5439 = vsel %vm5275, %v5424, 0
    %v5442 = vsel %vm5275, %v5425, 0
    %5444 = vmatpush.msra.mxu0 0.0
    %5445 = vmatpush.msra.mxu0 0.0
    %5446 = vmatpush.msra.mxu0 0.0
    %5447 = vmatpush.msra.mxu0 0.0
    %5448 = vmatpush.msra.mxu0 0.0
    %5449 = vmatpush.msra.mxu0 0.0
    %5450 = vmatpush.msra.mxu0 0.0
    %5451 = vmatpush.msra.mxu0 0.0
    %5452 = vmatpush.msra.mxu0 %v5433
    %5453 = vmatpush.msra.mxu0 %v5432
    %5454 = vmatpush.msra.mxu0 %v5431
    %5455 = vmatpush.msra.mxu0 %v5430
    %5456 = vmatpush.msra.mxu0 %v5429
    %5457 = vmatpush.msra.mxu0 %v5428
    %5458 = vmatpush.msra.mxu0 %v5427
    %5459 = vmatpush.msra.mxu0 %v5426
    %5460 = vmatmul.f32.gmra.mxu0 %v5439
    %v5461 = vpop.f32.mrf.mxu0
    %v5462 = vadd.f32 %v5436, %v5461
    %5463 = vmatmul.f32.gmra.mxu0 %v5442
    %v5464 = vpop.f32.mrf.mxu0
    %v5465 = vadd.f32 %v5436, %v5464
    %5466 = vdwg.mxu0
    %vm5467 = vcmask 15360
    %5468 = vst.msk [vmem:[%s18] sm:$0xff] %vm5467, %v5462
    %5469 = vst.msk [vmem:[%s18 + $0x8] sm:$0xff] %vm5467, %v5465
    // Predicated region
    $region126: #{tpu_custom_call.1} parent=1 // pred_check
      _
    $region127: #{tpu_custom_call.1} parent=1 // pred_check_branch
      %5471 = sbr.rel (0) target = $region129
    $region128: #{tpu_custom_call.1} parent=1 // pred_region
      _
    $region129: #{tpu_custom_call.1} parent=1 // pred_fallthru
      _
    // Predicated region
    $region130: #{tpu_custom_call.1} parent=1 // pred_check
      _
    $region131: #{tpu_custom_call.1} parent=1 // pred_check_branch
      %5473 = sbr.rel (0) target = $region133
    $region132: #{tpu_custom_call.1} parent=1 // pred_region
      _
    $region133: #{tpu_custom_call.1} parent=1 // pred_fallthru
      _
    %5474 = vsyncpa [#allocation3], 1
    %5475 = vsyncpa [#allocation5], 1
    %5476 = vsyncpa [#allocation8], 1
    %5477 = vsyncpa [#allocation11], 1
    %5478 = vsyncpa [#allocation14], 1
    %5479 = vsyncpa [#allocation17], 1
    %5480 = vsyncpa [#allocation20], 1

</llo_original>
